<compile_context>
chip_gen: v5e
topology: v5e:2x2
jax: 0.10.0
libtpu: 0.0.40
codegen_flags: <defaults>
</compile_context>

<pallas_src>
import math

import jax
import jax.numpy as jnp
from jax.experimental import pallas as pl
from jax.experimental.pallas import tpu as pltpu

LEAKY_SLOPE = 0.1


def _build_kernel(channel_list, L, BL, pool_size, use_pool, use_dropout):
    n_layers = len(channel_list) - 1
    c_outs = channel_list[1:]

    def kernel(*refs):
        idx = 0
        x_ref = refs[idx]; idx += 1
        w_refs, b_refs = [], []
        for _ in range(n_layers):
            w_refs.append(refs[idx]); idx += 1
            b_refs.append(refs[idx]); idx += 1
        d_ref = None
        if use_pool:
            d_ref = refs[idx]; idx += 1
        m_ref = None
        if use_dropout:
            m_ref = refs[idx]; idx += 1
        o_ref = refs[idx]

        # Per-sample boundary masks, hoisted out of the layer loop.
        # Lane p holds sample p // L, spatial position p % L.
        lane = jax.lax.broadcasted_iota(jnp.int32, (1, BL), 1)
        first_col = (lane % L) == 0          # conv left zero-pad position
        last_col = (lane % L) == (L - 1)     # conv right zero-pad position

        h = x_ref[...].astype(jnp.float32)   # (C0, B*L), lane-dense

        for i in range(n_layers):
            cout = c_outs[i]
            # One MXU dot per layer: taps stacked on the output-row axis.
            y = jnp.dot(w_refs[i][...], h, preferred_element_type=jnp.float32)
            y0 = y[0 * cout:1 * cout]        # tap k=0 -> needs x[:, l-1]
            y1 = y[1 * cout:2 * cout]        # tap k=1 -> x[:, l]
            y2 = y[2 * cout:3 * cout]        # tap k=2 -> x[:, l+1]
            left = jnp.where(first_col, 0.0, jnp.roll(y0, 1, axis=1))
            right = jnp.where(last_col, 0.0, jnp.roll(y2, -1, axis=1))
            acc = left + y1 + right + b_refs[i][...]   # bias: (cout,1) broadcast
            h = jnp.where(acc > 0, acc, LEAKY_SLOPE * acc)   # LeakyReLU(0.1)

        if use_pool:
            # MaxPool1d(pool_size, stride=pool_size), floor mode.  Window maxima
            # via shifted maxima (windows never cross sample boundaries for the
            # selected start lanes), then a lane-space downsample as one dot
            # against a 0/1 selection matrix (exact: one 1.0 per column).
            m = h
            for s in range(1, pool_size):
                m = jnp.maximum(m, jnp.roll(h, -s, axis=1))
            h = jnp.dot(m, d_ref[...], preferred_element_type=jnp.float32,
                        precision=jax.lax.Precision.HIGHEST)

        if use_dropout:
            h = h * m_ref[...]               # pre-scaled keep mask

        o_ref[...] = h.astype(o_ref.dtype)

    return kernel


def basic_res_conv_block(x, params, channel_list, pool_size=2, dropout=0.5,
                         training=False, seed=0, samples_per_block=None):
    """Forward pass of BasicResConvBlock.

    x:      (N, C0, L) float array (NCL, matching PyTorch Conv1d/MaxPool1d).
    params: per-layer (W_stack (3*cout, cin), bias (cout, 1)) with the eval-mode
            BatchNorm affine already folded in (see init_params).
    Returns (N, c_last, L // pool_size) float32.
    """
    N, C0, L = x.shape
    assert C0 == channel_list[0]
    n_layers = len(channel_list) - 1
    c_last = channel_list[-1]

    use_pool = pool_size > 1
    Lp = L // pool_size if use_pool else L
    use_dropout = training and dropout > 0.0

    # Samples per grid step.  Keep (B*channels*L + B*c_last*Lp) * 4B * 2 (double
    # buffering) well under the scoped VMEM limit (~32 MiB default; 64 MiB total
    # per TensorCore on v7x) -- trivially satisfied at these sizes.
    B = samples_per_block if samples_per_block is not None else N
    assert N % B == 0, "samples_per_block must divide the batch size"
    BL = B * L
    BLp = B * Lp
    # Lane-dense tiling: block lane widths must be multiples of 128 unless the
    # block spans the full flattened axis.
    assert BL % 128 == 0 or B == N
    assert BLp % 128 == 0 or B == N

    # Wrapper-side layout plumbing: (N, C, L) -> (C, N*L) lane-dense slab.
    x_flat = jnp.transpose(x, (1, 0, 2)).reshape(C0, N * L)

    kernel = _build_kernel(channel_list, L, BL, pool_size, use_pool, use_dropout)

    grid = (N // B,)
    in_specs = [pl.BlockSpec((C0, BL), lambda n: (0, n))]
    inputs = [x_flat]
    for i in range(n_layers):
        cin, cout = channel_list[i], channel_list[i + 1]
        W_stack, b = params[i]
        assert W_stack.shape == (3 * cout, cin) and b.shape == (cout, 1)
        inputs += [W_stack, b]
        in_specs += [pl.BlockSpec((3 * cout, cin), lambda n: (0, 0)),
                     pl.BlockSpec((cout, 1), lambda n: (0, 0))]

    if use_pool:
        # Column q of D selects the start lane of pooling window q
        # (sample q // Lp, window q % Lp).  Constant across grid steps, so the
        # pipeline fetches it once and it stays resident in VMEM.
        l_idx = jnp.arange(BL, dtype=jnp.int32)[:, None]
        q_idx = jnp.arange(BLp, dtype=jnp.int32)[None, :]
        starts = (q_idx // Lp) * L + (q_idx % Lp) * pool_size
        D = (l_idx == starts).astype(jnp.float32)
        inputs.append(D)
        in_specs.append(pl.BlockSpec((BL, BLp), lambda n: (0, 0)))

    if use_dropout:
        # F.dropout(p, training=True): keep with prob (1-p), scale by 1/(1-p).
        # TODO(synk): mask is generated host-side with jax.random because the
        # in-kernel TPU PRNG (pltpu.prng_*) has no CPU/interpret lowering.
        keep_prob = 1.0 - dropout
        if keep_prob <= 0.0:
            mask = jnp.zeros((c_last, N * Lp), jnp.float32)
        else:
            keep = jax.random.bernoulli(jax.random.PRNGKey(seed), keep_prob,
                                        (c_last, N * Lp))
            mask = keep.astype(jnp.float32) * (1.0 / keep_prob)
        inputs.append(mask)
        in_specs.append(pl.BlockSpec((c_last, BLp), lambda n: (0, n)))

    out_specs = pl.BlockSpec((c_last, BLp), lambda n: (0, n))

    grid_spec = pltpu.PrefetchScalarGridSpec(
        num_scalar_prefetch=0,
        grid=grid,
        in_specs=in_specs,
        out_specs=out_specs,
    )

    out_flat = pl.pallas_call(
        kernel,
        grid_spec=grid_spec,
        out_shape=jax.ShapeDtypeStruct((c_last, N * Lp), jnp.float32),
        compiler_params=pltpu.CompilerParams(
            # Batch blocks are fully independent -> let v7x's 2 TCs split them.
            dimension_semantics=("parallel",)),
    )(*inputs)

    # (c_last, N*Lp) -> (N, c_last, Lp)
    return jnp.transpose(out_flat.reshape(c_last, N, Lp), (1, 0, 2))


def init_params(channel_list, key, eps=1e-5):
    """Deterministic synthetic Conv1d(k=3, pad=1) + BatchNorm1d(eval) params.

    The BN affine (eval running stats) is folded into the conv weight/bias.
    Weights are returned tap-stacked as (3*cout, cin) so the kernel issues one
    MXU dot per layer; bias is (cout, 1).
    """
    params = []
    for i in range(len(channel_list) - 1):
        cin, cout = channel_list[i], channel_list[i + 1]
        key, k1, k2, k3, k4, k5, k6 = jax.random.split(key, 7)
        W = jax.random.normal(k1, (cout, cin, 3), jnp.float32) / math.sqrt(cin * 3)
        b = 0.1 * jax.random.normal(k2, (cout,), jnp.float32)
        gamma = 1.0 + 0.1 * jax.random.normal(k3, (cout,), jnp.float32)
        beta = 0.1 * jax.random.normal(k4, (cout,), jnp.float32)
        mean = 0.1 * jax.random.normal(k5, (cout,), jnp.float32)
        var = jax.random.uniform(k6, (cout,), jnp.float32, minval=0.5, maxval=1.5)
        scale = gamma / jnp.sqrt(var + eps)
        W_eff = W * scale[:, None, None]                    # (cout, cin, 3)
        b_eff = (b - mean) * scale + beta
        # Tap-major stacking: rows [k*cout:(k+1)*cout] = tap k.
        W_stack = jnp.transpose(W_eff, (2, 0, 1)).reshape(3 * cout, cin)
        params.append((W_stack, b_eff.reshape(cout, 1)))
    return params


def ref_forward(x, params, channel_list, pool_size):
    """Pure-JAX eval-mode reference (dropout is identity in eval)."""
    h = x.astype(jnp.float32)
    L = x.shape[-1]
    for i in range(len(channel_list) - 1):
        cout = channel_list[i + 1]
        W_stack, b = params[i]
        hp = jnp.pad(h, ((0, 0), (0, 0), (1, 1)))
        acc = b[None, :, :]
        for k in range(3):
            Wk = W_stack[k * cout:(k + 1) * cout]
            acc = acc + jnp.einsum('oi,nil->nol', Wk, hp[:, :, k:k + L],
                                   precision=jax.lax.Precision.HIGHEST)
        h = jnp.where(acc > 0, acc, LEAKY_SLOPE * acc)
    if pool_size > 1:
        Lp = L // pool_size
        h = h[..., :Lp * pool_size]
        h = h.reshape(h.shape[0], h.shape[1], Lp, pool_size).max(axis=-1)
    return h


if __name__ == "__main__":
    channel_list = [4, 8, 16]
    pool_size = 2
    dropout = 0.5
    N, L = 8, 128
    B = 4                                    # samples per grid step

    key = jax.random.PRNGKey(0)
    key, kx = jax.random.split(key)
    x = jax.random.normal(kx, (N, channel_list[0], L), jnp.float32)
    params = init_params(channel_list, key)

    # Eval mode (dropout == identity): verify against the pure-JAX reference.
    out_eval = basic_res_conv_block(x, params, channel_list, pool_size, dropout,
                                    training=False, samples_per_block=B)
    jax.block_until_ready(out_eval)
    ref = ref_forward(x, params, channel_list, pool_size)
    assert out_eval.shape == (N, channel_list[-1], L // pool_size)
    err = float(jnp.max(jnp.abs(out_eval - ref)))
    if not jnp.allclose(out_eval, ref, rtol=5e-3, atol=5e-3):
        raise AssertionError(f"kernel/reference mismatch, max abs err = {err}")

    # Training mode: exercises the dropout-mask path (host-generated mask).
    out_train = basic_res_conv_block(x, params, channel_list, pool_size, dropout,
                                     training=True, seed=1234,
                                     samples_per_block=B)
    jax.block_until_ready(out_train)
    assert out_train.shape == out_eval.shape
    assert bool(jnp.all(jnp.isfinite(out_train)))

    print("KERNEL_OK")
</pallas_src>

<mosaic_0001>
module attributes {stable_mosaic.version = 11 : i64} {
  func.func @kernel(%arg0: i32, %arg1: memref<4x512xf32, #tpu.memory_space<vmem>>, %arg2: memref<24x4xf32, #tpu.memory_space<vmem>>, %arg3: memref<8x1xf32, #tpu.memory_space<vmem>>, %arg4: memref<48x8xf32, #tpu.memory_space<vmem>>, %arg5: memref<16x1xf32, #tpu.memory_space<vmem>>, %arg6: memref<512x256xf32, #tpu.memory_space<vmem>>, %arg7: memref<16x256xf32, #tpu.memory_space<vmem>>) attributes {dimension_semantics = [#tpu.dimension_semantics<parallel>], iteration_bounds = array<i64: 2>, scalar_prefetch = 0 : i64, scratch_operands = 0 : i64, tpu.core_type = #tpu.core_type<tc>, window_params = [{transform_indices = @transform_0, window_bounds = array<i64: 4, 512>}, {pipeline_mode = #tpu.pipeline_mode<synchronous>, transform_indices = @transform_1, window_bounds = array<i64: 24, 4>}, {pipeline_mode = #tpu.pipeline_mode<synchronous>, transform_indices = @transform_2, window_bounds = array<i64: 8, 1>}, {pipeline_mode = #tpu.pipeline_mode<synchronous>, transform_indices = @transform_3, window_bounds = array<i64: 48, 8>}, {pipeline_mode = #tpu.pipeline_mode<synchronous>, transform_indices = @transform_4, window_bounds = array<i64: 16, 1>}, {pipeline_mode = #tpu.pipeline_mode<synchronous>, transform_indices = @transform_5, window_bounds = array<i64: 512, 256>}, {transform_indices = @transform_6, window_bounds = array<i64: 16, 256>}]} {
    %0 = tpu.iota {dimensions = array<i32: 1>} : vector<1x512xi32>
    %c128_i32 = arith.constant 128 : i32
    %c0_i32 = arith.constant 0 : i32
    %1 = arith.cmpi eq, %c128_i32, %c0_i32 : i32
    %c1_i32 = arith.constant 1 : i32
    %2 = arith.select %1, %c1_i32, %c128_i32 : i32
    %3 = vector.broadcast %2 : i32 to vector<1x512xi32>
    %4 = arith.remsi %0, %3 : vector<1x512xi32>
    %c0_i32_0 = arith.constant 0 : i32
    %5 = vector.broadcast %c0_i32_0 : i32 to vector<1x512xi32>
    %6 = arith.cmpi ne, %4, %5 : vector<1x512xi32>
    %c0_i32_1 = arith.constant 0 : i32
    %7 = vector.broadcast %c0_i32_1 : i32 to vector<1x512xi32>
    %8 = arith.cmpi slt, %4, %7 : vector<1x512xi32>
    %c0_i32_2 = arith.constant 0 : i32
    %9 = arith.cmpi slt, %2, %c0_i32_2 : i32
    %10 = vector.broadcast %9 : i1 to vector<1x512xi1>
    %11 = vector.broadcast %10 : vector<1x512xi1> to vector<1x512xi1>
    %12 = arith.xori %8, %11 : vector<1x512xi1>
    %13 = arith.andi %12, %6 : vector<1x512xi1>
    %14 = vector.broadcast %2 : i32 to vector<1x512xi32>
    %15 = arith.addi %4, %14 : vector<1x512xi32>
    %16 = arith.select %13, %15, %4 : vector<1x512xi1>, vector<1x512xi32>
    %c0_i32_3 = arith.constant 0 : i32
    %17 = vector.broadcast %c0_i32_3 : i32 to vector<1x512xi32>
    %18 = arith.cmpi eq, %16, %17 : vector<1x512xi32>
    %c128_i32_4 = arith.constant 128 : i32
    %c0_i32_5 = arith.constant 0 : i32
    %19 = arith.cmpi eq, %c128_i32_4, %c0_i32_5 : i32
    %c1_i32_6 = arith.constant 1 : i32
    %20 = arith.select %19, %c1_i32_6, %c128_i32_4 : i32
    %21 = vector.broadcast %20 : i32 to vector<1x512xi32>
    %22 = arith.remsi %0, %21 : vector<1x512xi32>
    %c0_i32_7 = arith.constant 0 : i32
    %23 = vector.broadcast %c0_i32_7 : i32 to vector<1x512xi32>
    %24 = arith.cmpi ne, %22, %23 : vector<1x512xi32>
    %c0_i32_8 = arith.constant 0 : i32
    %25 = vector.broadcast %c0_i32_8 : i32 to vector<1x512xi32>
    %26 = arith.cmpi slt, %22, %25 : vector<1x512xi32>
    %c0_i32_9 = arith.constant 0 : i32
    %27 = arith.cmpi slt, %20, %c0_i32_9 : i32
    %28 = vector.broadcast %27 : i1 to vector<1x512xi1>
    %29 = vector.broadcast %28 : vector<1x512xi1> to vector<1x512xi1>
    %30 = arith.xori %26, %29 : vector<1x512xi1>
    %31 = arith.andi %30, %24 : vector<1x512xi1>
    %32 = vector.broadcast %20 : i32 to vector<1x512xi32>
    %33 = arith.addi %22, %32 : vector<1x512xi32>
    %34 = arith.select %31, %33, %22 : vector<1x512xi1>, vector<1x512xi32>
    %c127_i32 = arith.constant 127 : i32
    %35 = vector.broadcast %c127_i32 : i32 to vector<1x512xi32>
    %36 = arith.cmpi eq, %34, %35 : vector<1x512xi32>
    %c0 = arith.constant 0 : index
    %c0_10 = arith.constant 0 : index
    %37 = vector.load %arg1[%c0, %c0_10] : memref<4x512xf32, #tpu.memory_space<vmem>>, vector<4x512xf32>
    %c0_11 = arith.constant 0 : index
    %c0_12 = arith.constant 0 : index
    %38 = vector.load %arg2[%c0_11, %c0_12] : memref<24x4xf32, #tpu.memory_space<vmem>>, vector<24x4xf32>
    %cst = arith.constant dense<0.000000e+00> : vector<24x512xf32>
    %39 = tpu.matmul %38, %37, %cst {dimension_numbers = #tpu.dot_dimension_numbers<[1], [0], [0], [1], [0, 0, 1, 1], [], []>} : vector<24x4xf32>, vector<4x512xf32>, vector<24x512xf32> -> vector<24x512xf32>
    %40 = vector.extract_strided_slice %39 {offsets = [0, 0], sizes = [8, 512], strides = [1, 1]} : vector<24x512xf32> to vector<8x512xf32>
    %41 = vector.extract_strided_slice %39 {offsets = [8, 0], sizes = [8, 512], strides = [1, 1]} : vector<24x512xf32> to vector<8x512xf32>
    %42 = vector.extract_strided_slice %39 {offsets = [16, 0], sizes = [8, 512], strides = [1, 1]} : vector<24x512xf32> to vector<8x512xf32>
    %43 = vector.extract_strided_slice %40 {offsets = [0, 511], sizes = [8, 1], strides = [1, 1]} : vector<8x512xf32> to vector<8x1xf32>
    %44 = vector.extract_strided_slice %40 {offsets = [0, 0], sizes = [8, 511], strides = [1, 1]} : vector<8x512xf32> to vector<8x511xf32>
    %45 = tpu.concatenate %43, %44 in 1 : vector<8x1xf32>, vector<8x511xf32> -> vector<8x512xf32>
    %cst_13 = arith.constant 0.000000e+00 : f32
    %46 = vector.shape_cast %18 : vector<1x512xi1> to vector<1x512xi1>
    %47 = vector.broadcast %46 : vector<1x512xi1> to vector<8x512xi1>
    %48 = vector.broadcast %cst_13 : f32 to vector<8x512xf32>
    %49 = arith.select %47, %48, %45 : vector<8x512xi1>, vector<8x512xf32>
    %50 = vector.extract_strided_slice %42 {offsets = [0, 1], sizes = [8, 511], strides = [1, 1]} : vector<8x512xf32> to vector<8x511xf32>
    %51 = vector.extract_strided_slice %42 {offsets = [0, 0], sizes = [8, 1], strides = [1, 1]} : vector<8x512xf32> to vector<8x1xf32>
    %52 = tpu.concatenate %50, %51 in 1 : vector<8x511xf32>, vector<8x1xf32> -> vector<8x512xf32>
    %cst_14 = arith.constant 0.000000e+00 : f32
    %53 = vector.shape_cast %36 : vector<1x512xi1> to vector<1x512xi1>
    %54 = vector.broadcast %53 : vector<1x512xi1> to vector<8x512xi1>
    %55 = vector.broadcast %cst_14 : f32 to vector<8x512xf32>
    %56 = arith.select %54, %55, %52 : vector<8x512xi1>, vector<8x512xf32>
    %57 = arith.addf %49, %41 : vector<8x512xf32>
    %58 = arith.addf %57, %56 : vector<8x512xf32>
    %c0_15 = arith.constant 0 : index
    %c0_16 = arith.constant 0 : index
    %59 = vector.load %arg3[%c0_15, %c0_16] : memref<8x1xf32, #tpu.memory_space<vmem>>, vector<8x1xf32>
    %60 = vector.broadcast %59 : vector<8x1xf32> to vector<8x512xf32>
    %61 = arith.addf %58, %60 : vector<8x512xf32>
    %cst_17 = arith.constant 0.000000e+00 : f32
    %62 = vector.broadcast %cst_17 : f32 to vector<8x512xf32>
    %63 = arith.cmpf ogt, %61, %62 : vector<8x512xf32>
    %cst_18 = arith.constant 1.000000e-01 : f32
    %64 = vector.broadcast %cst_18 : f32 to vector<8x512xf32>
    %65 = arith.mulf %64, %61 : vector<8x512xf32>
    %66 = arith.select %63, %61, %65 : vector<8x512xi1>, vector<8x512xf32>
    %c0_19 = arith.constant 0 : index
    %c0_20 = arith.constant 0 : index
    %67 = vector.load %arg4[%c0_19, %c0_20] : memref<48x8xf32, #tpu.memory_space<vmem>>, vector<48x8xf32>
    %cst_21 = arith.constant dense<0.000000e+00> : vector<48x512xf32>
    %68 = tpu.matmul %67, %66, %cst_21 {dimension_numbers = #tpu.dot_dimension_numbers<[1], [0], [0], [1], [0, 0, 1, 1], [], []>} : vector<48x8xf32>, vector<8x512xf32>, vector<48x512xf32> -> vector<48x512xf32>
    %69 = vector.extract_strided_slice %68 {offsets = [0, 0], sizes = [16, 512], strides = [1, 1]} : vector<48x512xf32> to vector<16x512xf32>
    %70 = vector.extract_strided_slice %68 {offsets = [16, 0], sizes = [16, 512], strides = [1, 1]} : vector<48x512xf32> to vector<16x512xf32>
    %71 = vector.extract_strided_slice %68 {offsets = [32, 0], sizes = [16, 512], strides = [1, 1]} : vector<48x512xf32> to vector<16x512xf32>
    %72 = vector.extract_strided_slice %69 {offsets = [0, 511], sizes = [16, 1], strides = [1, 1]} : vector<16x512xf32> to vector<16x1xf32>
    %73 = vector.extract_strided_slice %69 {offsets = [0, 0], sizes = [16, 511], strides = [1, 1]} : vector<16x512xf32> to vector<16x511xf32>
    %74 = tpu.concatenate %72, %73 in 1 : vector<16x1xf32>, vector<16x511xf32> -> vector<16x512xf32>
    %cst_22 = arith.constant 0.000000e+00 : f32
    %75 = vector.shape_cast %18 : vector<1x512xi1> to vector<1x512xi1>
    %76 = vector.broadcast %75 : vector<1x512xi1> to vector<16x512xi1>
    %77 = vector.broadcast %cst_22 : f32 to vector<16x512xf32>
    %78 = arith.select %76, %77, %74 : vector<16x512xi1>, vector<16x512xf32>
    %79 = vector.extract_strided_slice %71 {offsets = [0, 1], sizes = [16, 511], strides = [1, 1]} : vector<16x512xf32> to vector<16x511xf32>
    %80 = vector.extract_strided_slice %71 {offsets = [0, 0], sizes = [16, 1], strides = [1, 1]} : vector<16x512xf32> to vector<16x1xf32>
    %81 = tpu.concatenate %79, %80 in 1 : vector<16x511xf32>, vector<16x1xf32> -> vector<16x512xf32>
    %cst_23 = arith.constant 0.000000e+00 : f32
    %82 = vector.shape_cast %36 : vector<1x512xi1> to vector<1x512xi1>
    %83 = vector.broadcast %82 : vector<1x512xi1> to vector<16x512xi1>
    %84 = vector.broadcast %cst_23 : f32 to vector<16x512xf32>
    %85 = arith.select %83, %84, %81 : vector<16x512xi1>, vector<16x512xf32>
    %86 = arith.addf %78, %70 : vector<16x512xf32>
    %87 = arith.addf %86, %85 : vector<16x512xf32>
    %c0_24 = arith.constant 0 : index
    %c0_25 = arith.constant 0 : index
    %88 = vector.load %arg5[%c0_24, %c0_25] : memref<16x1xf32, #tpu.memory_space<vmem>>, vector<16x1xf32>
    %89 = vector.broadcast %88 : vector<16x1xf32> to vector<16x512xf32>
    %90 = arith.addf %87, %89 : vector<16x512xf32>
    %cst_26 = arith.constant 0.000000e+00 : f32
    %91 = vector.broadcast %cst_26 : f32 to vector<16x512xf32>
    %92 = arith.cmpf ogt, %90, %91 : vector<16x512xf32>
    %cst_27 = arith.constant 1.000000e-01 : f32
    %93 = vector.broadcast %cst_27 : f32 to vector<16x512xf32>
    %94 = arith.mulf %93, %90 : vector<16x512xf32>
    %95 = arith.select %92, %90, %94 : vector<16x512xi1>, vector<16x512xf32>
    %96 = vector.extract_strided_slice %95 {offsets = [0, 1], sizes = [16, 511], strides = [1, 1]} : vector<16x512xf32> to vector<16x511xf32>
    %97 = vector.extract_strided_slice %95 {offsets = [0, 0], sizes = [16, 1], strides = [1, 1]} : vector<16x512xf32> to vector<16x1xf32>
    %98 = tpu.concatenate %96, %97 in 1 : vector<16x511xf32>, vector<16x1xf32> -> vector<16x512xf32>
    %99 = arith.maximumf %95, %98 : vector<16x512xf32>
    %c0_28 = arith.constant 0 : index
    %c0_29 = arith.constant 0 : index
    %100 = vector.load %arg6[%c0_28, %c0_29] : memref<512x256xf32, #tpu.memory_space<vmem>>, vector<512x256xf32>
    %cst_30 = arith.constant dense<0.000000e+00> : vector<16x256xf32>
    %101 = tpu.matmul %99, %100, %cst_30 {dimension_numbers = #tpu.dot_dimension_numbers<[1], [0], [0], [1], [0, 0, 1, 1], [], []>, precision = #tpu.contract_precision<fp32>} : vector<16x512xf32>, vector<512x256xf32>, vector<16x256xf32> -> vector<16x256xf32>
    %c0_31 = arith.constant 0 : index
    %c0_32 = arith.constant 0 : index
    %102 = vector.load %arg7[%c0_31, %c0_32] : memref<16x256xf32, #tpu.memory_space<vmem>>, vector<16x256xf32>
    tpu.vector_store %arg7[%c0_31, %c0_32], %101 {strides = array<i32>} : memref<16x256xf32, #tpu.memory_space<vmem>>, vector<16x256xf32>,
    return
  }
  func.func @transform_0(%arg0: i32) -> (i32, i32) {
    %c0_i32 = arith.constant 0 : i32
    %c0_i32_0 = arith.constant 0 : i32
    return %c0_i32, %arg0 : i32, i32
  }
  func.func @transform_1(%arg0: i32) -> (i32, i32) {
    %c0_i32 = arith.constant 0 : i32
    %c0_i32_0 = arith.constant 0 : i32
    %c0_i32_1 = arith.constant 0 : i32
    return %c0_i32, %c0_i32_0 : i32, i32
  }
  func.func @transform_2(%arg0: i32) -> (i32, i32) {
    %c0_i32 = arith.constant 0 : i32
    %c0_i32_0 = arith.constant 0 : i32
    %c0_i32_1 = arith.constant 0 : i32
    return %c0_i32, %c0_i32_0 : i32, i32
  }
  func.func @transform_3(%arg0: i32) -> (i32, i32) {
    %c0_i32 = arith.constant 0 : i32
    %c0_i32_0 = arith.constant 0 : i32
    %c0_i32_1 = arith.constant 0 : i32
    return %c0_i32, %c0_i32_0 : i32, i32
  }
  func.func @transform_4(%arg0: i32) -> (i32, i32) {
    %c0_i32 = arith.constant 0 : i32
    %c0_i32_0 = arith.constant 0 : i32
    %c0_i32_1 = arith.constant 0 : i32
    return %c0_i32, %c0_i32_0 : i32, i32
  }
  func.func @transform_5(%arg0: i32) -> (i32, i32) {
    %c0_i32 = arith.constant 0 : i32
    %c0_i32_0 = arith.constant 0 : i32
    %c0_i32_1 = arith.constant 0 : i32
    return %c0_i32, %c0_i32_0 : i32, i32
  }
  func.func @transform_6(%arg0: i32) -> (i32, i32) {
    %c0_i32 = arith.constant 0 : i32
    %c0_i32_0 = arith.constant 0 : i32
    return %c0_i32, %arg0 : i32, i32
  }
}

</mosaic_0001>

<llo_original>
// kernel: tpu_custom_call.1
$region0: #{tpu_custom_call.1}
  #allocation0 [shape = 'u32[]', space=smem, size = 0x4, offset = 0x4, fixed_abs, tag = 'smem constant byte address 0x4 - core index']
  #allocation1 [shape = 'u32[72,128]{1,0:T(1,128)}', space=vmem, size = 0x9000, scoped, tag = 'internal scratch']
  %s0 = inlined_call_operand.vmem [shape: f32[4,1024], index: 0, kind: input, shape index: {}]
  %s1 = inlined_call_operand.vmem [shape: f32[24,4], index: 1, kind: input, shape index: {}]
  %s2 = inlined_call_operand.vmem [shape: f32[8,1], index: 2, kind: input, shape index: {}]
  %s3 = inlined_call_operand.vmem [shape: f32[48,8], index: 3, kind: input, shape index: {}]
  %s4 = inlined_call_operand.vmem [shape: f32[16,1], index: 4, kind: input, shape index: {}]
  %s5 = inlined_call_operand.hbm [shape: f32[512,256], index: 5, kind: input, shape index: {}]
  %s6 = inlined_call_operand.hbm [shape: f32[16,512], index: 6, kind: output, shape index: {}]
  %s7 = sld [smem:[#allocation0]]
  $region61: #{tpu_custom_call.1} parent=0
    _
  %s9 = ssub.s32 1, %s7
  %s10 = scalar_select 0, %s9, %s7
  $region1: #{tpu_custom_call.1} parent=0
    #allocation2 [shape = 'u8[524288]{0}', space=vmem, size = 0x80000, scoped, tag = 'input window, operand 5, single buffered']
    #allocation3 [shape = 's32[2]{0}', space=sflag, size = 0x8, scoped, tag = 'scoped memory for tpu_custom_call.1']
    #allocation4 [shape = 's32[2]{0}', space=sflag, size = 0x8, scoped, tag = 'scoped memory for tpu_custom_call.1']
    #allocation5 [shape = 'u8[32768]{0}', space=vmem, size = 0x8000, scoped, tag = 'output window, operand 0']
    %11 = vsyncpa [#allocation3], 0
    %12 = vsyncpa [#allocation4], 0
    %s13 = scalar_lea.sflag [#allocation4], 1
    %14 = vsyncpa %s13, 0
    loop: start=0, step=1, limit=4
    $region2: #{tpu_custom_call.1} parent=1 // loop_pre_header
      _
    $region3: #{tpu_custom_call.1} parent=1 // loop_header
      %s16 = sphi 0, %s20
      %p17 = scmp.ge.s32.totalorder %s16, 4
      %s26 = sphi 0, %s28
      %s29 = sphi 0, %s26
      %s30 = sphi 0, %s29
      %s46 = sphi 0, %s30
      %s50 = sphi 0, %s50
      %s52 = sphi 0, %s50
      %s53 = sphi 0, %s52
      %s67 = sphi 0, %s53
      %s71 = sphi 0, %s71
      %s73 = sphi 0, %s71
      %s74 = sphi 0, %s73
      %s88 = sphi 0, %s74
      %s92 = sphi 0, %s92
      %s94 = sphi 0, %s92
      %s95 = sphi 0, %s94
      %s109 = sphi 0, %s95
      %s113 = sphi 0, %s113
      %s115 = sphi 0, %s113
      %s116 = sphi 0, %s115
      %s130 = sphi 0, %s116
      %s134 = sphi 0, %s134
      %s136 = sphi 0, %s134
      %s137 = sphi 0, %s136
      %s151 = sphi 0, %s137
      %s157 = sphi 0, %s159
      %s160 = sphi 0, %s157
      %s161 = sphi 0, %s160
      %s177 = sphi 0, %s161
    $region4: #{tpu_custom_call.1} parent=1 // loop_header_branch
      %19 = sbr.rel (%p17) target = $region8
    $region5: #{tpu_custom_call.1} parent=1 // loop_body
      %s21 = ssub.s32 %s16, 1
      %s22 = ssub.s32 %s16, 2
      %s23 = sadd.s32 %s16, 1
      %s24 = ssub.s32 %s16, %s23
      %p25 = scmp.eq.s32.totalorder %s24, 0
      %s27 = sadd.s32 %s26, 1
      %s28 = scalar_select %p25, %s26, %s27
      %p31 = pneg %p25
      %p32 = scmp.eq.s32.totalorder %s16, 1
      %p33 = por %p31, %p32
      %p34 = scmp.ne.s32.totalorder %s26, %s29
      %p35 = scmp.eq.s32.totalorder %s16, 0
      %p36 = por %p34, %p35
      %p37 = scmp.ne.s32.totalorder %s26, %s29
      %p38 = scmp.eq.s32.totalorder %s21, 1
      %p39 = por %p37, %p38
      %p40 = scmp.ne.s32.totalorder %s29, %s30
      %p41 = scmp.eq.s32.totalorder %s21, 0
      %p42 = por %p40, %p41
      %p43 = scmp.ne.s32.totalorder %s29, %s30
      %p44 = scmp.eq.s32.totalorder %s22, 1
      %p45 = por %p43, %p44
      %p47 = scmp.ne.s32.totalorder %s30, %s46
      %p48 = scmp.eq.s32.totalorder %s22, 0
      %p49 = por %p47, %p48
      %s51 = sadd.s32 %s50, 1
      %p54 = scmp.eq.s32.totalorder %s16, 1
      %p55 = scmp.ne.s32.totalorder %s50, %s52
      %p56 = scmp.eq.s32.totalorder %s16, 0
      %p57 = por %p55, %p56
      %p58 = scmp.ne.s32.totalorder %s50, %s52
      %p59 = scmp.eq.s32.totalorder %s21, 1
      %p60 = por %p58, %p59
      %p61 = scmp.ne.s32.totalorder %s52, %s53
      %p62 = scmp.eq.s32.totalorder %s21, 0
      %p63 = por %p61, %p62
      %p64 = scmp.ne.s32.totalorder %s52, %s53
      %p65 = scmp.eq.s32.totalorder %s22, 1
      %p66 = por %p64, %p65
      %p68 = scmp.ne.s32.totalorder %s53, %s67
      %p69 = scmp.eq.s32.totalorder %s22, 0
      %p70 = por %p68, %p69
      %s72 = sadd.s32 %s71, 1
      %p75 = scmp.eq.s32.totalorder %s16, 1
      %p76 = scmp.ne.s32.totalorder %s71, %s73
      %p77 = scmp.eq.s32.totalorder %s16, 0
      %p78 = por %p76, %p77
      %p79 = scmp.ne.s32.totalorder %s71, %s73
      %p80 = scmp.eq.s32.totalorder %s21, 1
      %p81 = por %p79, %p80
      %p82 = scmp.ne.s32.totalorder %s73, %s74
      %p83 = scmp.eq.s32.totalorder %s21, 0
      %p84 = por %p82, %p83
      %p85 = scmp.ne.s32.totalorder %s73, %s74
      %p86 = scmp.eq.s32.totalorder %s22, 1
      %p87 = por %p85, %p86
      %p89 = scmp.ne.s32.totalorder %s74, %s88
      %p90 = scmp.eq.s32.totalorder %s22, 0
      %p91 = por %p89, %p90
      %s93 = sadd.s32 %s92, 1
      %p96 = scmp.eq.s32.totalorder %s16, 1
      %p97 = scmp.ne.s32.totalorder %s92, %s94
      %p98 = scmp.eq.s32.totalorder %s16, 0
      %p99 = por %p97, %p98
      %p100 = scmp.ne.s32.totalorder %s92, %s94
      %p101 = scmp.eq.s32.totalorder %s21, 1
      %p102 = por %p100, %p101
      %p103 = scmp.ne.s32.totalorder %s94, %s95
      %p104 = scmp.eq.s32.totalorder %s21, 0
      %p105 = por %p103, %p104
      %p106 = scmp.ne.s32.totalorder %s94, %s95
      %p107 = scmp.eq.s32.totalorder %s22, 1
      %p108 = por %p106, %p107
      %p110 = scmp.ne.s32.totalorder %s95, %s109
      %p111 = scmp.eq.s32.totalorder %s22, 0
      %p112 = por %p110, %p111
      %s114 = sadd.s32 %s113, 1
      %p117 = scmp.eq.s32.totalorder %s16, 1
      %p118 = scmp.ne.s32.totalorder %s113, %s115
      %p119 = scmp.eq.s32.totalorder %s16, 0
      %p120 = por %p118, %p119
      %p121 = scmp.ne.s32.totalorder %s113, %s115
      %p122 = scmp.eq.s32.totalorder %s21, 1
      %p123 = por %p121, %p122
      %p124 = scmp.ne.s32.totalorder %s115, %s116
      %p125 = scmp.eq.s32.totalorder %s21, 0
      %p126 = por %p124, %p125
      %p127 = scmp.ne.s32.totalorder %s115, %s116
      %p128 = scmp.eq.s32.totalorder %s22, 1
      %p129 = por %p127, %p128
      %p131 = scmp.ne.s32.totalorder %s116, %s130
      %p132 = scmp.eq.s32.totalorder %s22, 0
      %p133 = por %p131, %p132
      %s135 = sadd.s32 %s134, 1
      %p138 = scmp.eq.s32.totalorder %s16, 1
      %p139 = scmp.ne.s32.totalorder %s134, %s136
      %p140 = scmp.eq.s32.totalorder %s16, 0
      %p141 = por %p139, %p140
      %p142 = scmp.ne.s32.totalorder %s134, %s136
      %p143 = scmp.eq.s32.totalorder %s21, 1
      %p144 = por %p142, %p143
      %p145 = scmp.ne.s32.totalorder %s136, %s137
      %p146 = scmp.eq.s32.totalorder %s21, 0
      %p147 = por %p145, %p146
      %p148 = scmp.ne.s32.totalorder %s136, %s137
      %p149 = scmp.eq.s32.totalorder %s22, 1
      %p150 = por %p148, %p149
      %p152 = scmp.ne.s32.totalorder %s137, %s151
      %p153 = scmp.eq.s32.totalorder %s22, 0
      %p154 = por %p152, %p153
      %s155 = ssub.s32 %s16, %s23
      %p156 = scmp.eq.s32.totalorder %s155, 0
      %s158 = sadd.s32 %s157, 1
      %s159 = scalar_select %p156, %s157, %s158
      %p162 = pneg %p156
      %p163 = scmp.eq.s32.totalorder %s16, 1
      %p164 = por %p162, %p163
      %p165 = scmp.ne.s32.totalorder %s157, %s160
      %p166 = scmp.eq.s32.totalorder %s16, 0
      %p167 = por %p165, %p166
      %p168 = scmp.ne.s32.totalorder %s157, %s160
      %p169 = scmp.eq.s32.totalorder %s21, 1
      %p170 = por %p168, %p169
      %p171 = scmp.ne.s32.totalorder %s160, %s161
      %p172 = scmp.eq.s32.totalorder %s21, 0
      %p173 = por %p171, %p172
      %p174 = scmp.ne.s32.totalorder %s160, %s161
      %p175 = scmp.eq.s32.totalorder %s22, 1
      %p176 = por %p174, %p175
      %p178 = scmp.ne.s32.totalorder %s161, %s177
      %p179 = scmp.eq.s32.totalorder %s22, 0
      %p180 = por %p178, %p179
      %p181 = scmp.le.s32.totalorder 1, %s16
      %p182 = scmp.lt.s32.totalorder %s16, 3
      %p183 = pnand %p181, %p182
      %p184 = pneg %p183
      // Predicated region
      $region9: #{tpu_custom_call.1} parent=5 // pred_check
        _
      $region10: #{tpu_custom_call.1} parent=5 // pred_check_branch
        %186 = sbr.rel (%p183) target = $region12
      $region11: #{tpu_custom_call.1} parent=5 // pred_region
        %s187 = ssub.s32 %s16, 1
        // Predicated region
        $region13: #{tpu_custom_call.1} parent=11 // pred_check
          %p188 = pneg %p63
        $region14: #{tpu_custom_call.1} parent=11 // pred_check_branch
          %190 = sbr.rel (%p188) target = $region16
        $region15: #{tpu_custom_call.1} parent=11 // pred_region
          _
        $region16: #{tpu_custom_call.1} parent=11 // pred_fallthru
          _
        // Predicated region
        $region17: #{tpu_custom_call.1} parent=11 // pred_check
          %p191 = pneg %p84
        $region18: #{tpu_custom_call.1} parent=11 // pred_check_branch
          %193 = sbr.rel (%p191) target = $region20
        $region19: #{tpu_custom_call.1} parent=11 // pred_region
          _
        $region20: #{tpu_custom_call.1} parent=11 // pred_fallthru
          _
        // Predicated region
        $region21: #{tpu_custom_call.1} parent=11 // pred_check
          %p194 = pneg %p105
        $region22: #{tpu_custom_call.1} parent=11 // pred_check_branch
          %196 = sbr.rel (%p194) target = $region24
        $region23: #{tpu_custom_call.1} parent=11 // pred_region
          _
        $region24: #{tpu_custom_call.1} parent=11 // pred_fallthru
          _
        // Predicated region
        $region25: #{tpu_custom_call.1} parent=11 // pred_check
          %p197 = pneg %p126
        $region26: #{tpu_custom_call.1} parent=11 // pred_check_branch
          %199 = sbr.rel (%p197) target = $region28
        $region27: #{tpu_custom_call.1} parent=11 // pred_region
          _
        $region28: #{tpu_custom_call.1} parent=11 // pred_fallthru
          _
        // Predicated region
        $region29: #{tpu_custom_call.1} parent=11 // pred_check
          %p200 = pneg %p147
        $region30: #{tpu_custom_call.1} parent=11 // pred_check_branch
          %202 = sbr.rel (%p200) target = $region32
        $region31: #{tpu_custom_call.1} parent=11 // pred_region
          %204 = vsyncadd [#allocation3], 0
          %s205 = sshll.u32 %s5, 4
          %s206 = int_to_ptr.hbm [resolvable:$true] %s205
          %s207 = sshll.u32 [#allocation2], 4
          %s208 = int_to_ptr.vmem [resolvable:$true] %s207
          %213 = dma.hbm_to_vmem [thread:$0]  %s206, 16384, %s208, [#allocation3], 256, 256, 16
        $region32: #{tpu_custom_call.1} parent=11 // pred_fallthru
          _
      $region12: #{tpu_custom_call.1} parent=5 // pred_fallthru
        _
      %p214 = scmp.lt.s32.totalorder %s16, 2
      // Predicated region
      $region33: #{tpu_custom_call.1} parent=5 // pred_check
        %p215 = pneg %p214
      $region34: #{tpu_custom_call.1} parent=5 // pred_check_branch
        %217 = sbr.rel (%p215) target = $region36
      $region35: #{tpu_custom_call.1} parent=5 // pred_region
        // Predicated region
        $region37: #{tpu_custom_call.1} parent=35 // pred_check
          %p218 = pneg %p36
        $region38: #{tpu_custom_call.1} parent=35 // pred_check_branch
          %220 = sbr.rel (%p218) target = $region40
        $region39: #{tpu_custom_call.1} parent=35 // pred_region
          %s221 = smul.u32 4, %s16
          %p222 = scmp.lt.s32.totalorder %s221, 7
          %s223 = scalar_select %p222, %s221, 7
          %s224 = smul.addr %s223, 4
          %s225 = scalar_lea.vmem %s0, %s224
          %s226 = smul.u32 4, %s16
        $region40: #{tpu_custom_call.1} parent=35 // pred_fallthru
          _
      $region36: #{tpu_custom_call.1} parent=5 // pred_fallthru
        _
      %p227 = scmp.le.s32.totalorder 1, %s16
      %p228 = scmp.lt.s32.totalorder %s16, 3
      %p229 = pnand %p227, %p228
      %p230 = pneg %p229
      // Predicated region
      $region41: #{tpu_custom_call.1} parent=5 // pred_check
        _
      $region42: #{tpu_custom_call.1} parent=5 // pred_check_branch
        %232 = sbr.rel (%p229) target = $region44
      $region43: #{tpu_custom_call.1} parent=5 // pred_region
        %s233 = ssub.s32 %s16, 1
        // Predicated region
        $region45: #{tpu_custom_call.1} parent=43 // pred_check
          %p234 = pneg %p147
        $region46: #{tpu_custom_call.1} parent=43 // pred_check_branch
          %236 = sbr.rel (%p234) target = $region48
        $region47: #{tpu_custom_call.1} parent=43 // pred_region
          %238 = dma.done [#allocation3], 16384
        $region48: #{tpu_custom_call.1} parent=43 // pred_fallthru
          _
        %s239 = smul.u32 4, %s21
        %p240 = scmp.lt.s32.totalorder %s239, 7
        %s241 = scalar_select %p240, %s239, 7
        %s242 = smul.addr %s241, 4
        %s243 = scalar_lea.vmem %s0, %s242
        %p244 = pneg %p42
        %p245 = pneg %p39
        %p246 = pneg %p63
        %p247 = pneg %p60
        %p248 = pneg %p84
        %p249 = pneg %p81
        %p250 = pneg %p105
        %p251 = pneg %p102
        %p252 = pneg %p126
        %p253 = pneg %p123
        %p254 = pneg %p147
        %p255 = pneg %p144
        %p256 = pneg %p173
        %p257 = pneg %p170
        %s258 = sand.u32 %s160, 1
        %s259 = scalar_lea.sflag [#allocation4], %s258
        %s260 = sand.u32 %s160, 1
        %s261 = smul.addr %s260, 32
        %s262 = scalar_lea.vmem [#allocation5], %s261
        %s263 = smul.u32 4, %s21
        %p264 = scmp.lt.s32.totalorder %s263, 7
        %s265 = scalar_select %p264, %s263, 7
        %s266 = smul.addr %s265, 4
        %s267 = scalar_lea.vmem %s0, %s266
        %s268 = smul.u32 4, %s21
        %s269 = smul.u32 2, %s21
        %v270 = vlaneseq
        %v271 = vand.u32 %v270, 127
        %v272 = vadd.s32 %v271, 128
        %v273 = vadd.s32 %v271, 256
        %v274 = vadd.s32 %v271, 384
        %vm275 = vcmp.lt.s32.totalorder %v271, 0
        %v276 = vsub.s32 0, %v271
        %v277 = vsel %vm275, %v276, %v271
        %v278 = vshrl.u32 %v277, 7
        %v279 = vand.u32 %v277, 127
        %v280 = vsub.s32 0, %v279
        %v281 = vsel %vm275, %v280, %v279
        %vm282 = vcmp.lt.s32.totalorder %v272, 0
        %v283 = vsub.s32 0, %v272
        %v284 = vsel %vm282, %v283, %v272
        %v285 = vshrl.u32 %v284, 7
        %v286 = vand.u32 %v284, 127
        %v287 = vsub.s32 0, %v286
        %v288 = vsel %vm282, %v287, %v286
        %vm289 = vcmp.lt.s32.totalorder %v273, 0
        %v290 = vsub.s32 0, %v273
        %v291 = vsel %vm289, %v290, %v273
        %v292 = vshrl.u32 %v291, 7
        %v293 = vand.u32 %v291, 127
        %v294 = vsub.s32 0, %v293
        %v295 = vsel %vm289, %v294, %v293
        %vm296 = vcmp.lt.s32.totalorder %v274, 0
        %v297 = vsub.s32 0, %v274
        %v298 = vsel %vm296, %v297, %v274
        %v299 = vshrl.u32 %v298, 7
        %v300 = vand.u32 %v298, 127
        %v301 = vsub.s32 0, %v300
        %v302 = vsel %vm296, %v301, %v300
        %vm303 = vcmp.ne.s32.totalorder %v281, 0
        %vm304 = vcmp.ne.s32.totalorder %v288, 0
        %vm305 = vcmp.ne.s32.totalorder %v295, 0
        %vm306 = vcmp.ne.s32.totalorder %v302, 0
        %vm307 = vcmp.lt.s32.totalorder %v281, 0
        %vm308 = vcmp.lt.s32.totalorder %v288, 0
        %vm309 = vcmp.lt.s32.totalorder %v295, 0
        %vm310 = vcmp.lt.s32.totalorder %v302, 0
        %vm311 = vmand %vm307, %vm303
        %vm312 = vmand %vm308, %vm304
        %vm313 = vmand %vm309, %vm305
        %vm314 = vmand %vm310, %vm306
        %v315 = vadd.s32 %v281, 128
        %v316 = vadd.s32 %v288, 128
        %v317 = vadd.s32 %v295, 128
        %v318 = vadd.s32 %v302, 128
        %v319 = vsel %vm311, %v315, %v281
        %v320 = vsel %vm312, %v316, %v288
        %v321 = vsel %vm313, %v317, %v295
        %v322 = vsel %vm314, %v318, %v302
        %vm323 = vcmp.eq.s32.totalorder %v319, 0
        %vm324 = vcmp.eq.s32.totalorder %v320, 0
        %vm325 = vcmp.eq.s32.totalorder %v321, 0
        %vm326 = vcmp.eq.s32.totalorder %v322, 0
        %vm327 = vcmp.eq.s32.totalorder %v319, 127
        %vm328 = vcmp.eq.s32.totalorder %v320, 127
        %vm329 = vcmp.eq.s32.totalorder %v321, 127
        %vm330 = vcmp.eq.s32.totalorder %v322, 127
        %v331 = vld [vmem:[%s267] sm:$0xff]
        %v332 = vld [vmem:[%s267 + $0x8] sm:$0xff]
        %v333 = vld [vmem:[%s1] sm:$0xff]
        %v334 = vld [vmem:[%s1 + $0x8] sm:$0xff]
        %v335 = vld [vmem:[%s1 + $0x10] sm:$0xff]
        %338 = vst [vmem:[#allocation1] ss:$2 sm:$0xff] %v331
        %s339 = scalar_lea.vmem [#allocation1], 16
        %340 = vst [vmem:[%s339] ss:$2 sm:$0xff] %v332
        %v341 = vld.sshfl [vmem:[#allocation1] sm:$0xff pattern:$0x75316420]
        %v342 = vld.sshfl [vmem:[#allocation1 + $0x8] sm:$0xff pattern:$0x75316420]
        %v343 = vld.sshfl [vmem:[#allocation1 + $0x10] sm:$0xff pattern:$0x75316420]
        %v344 = vld.sshfl [vmem:[#allocation1 + $0x18] sm:$0xff pattern:$0x75316420]
        %vm345 = vcmask 31744
        %v347 = vsel %vm345, %v333, 0
        %v350 = vsel %vm345, %v334, 0
        %v353 = vsel %vm345, %v335, 0
        %vm355 = vcmask 1043456
        %v356 = vsel %vm355, %v341, 0
        %v358 = vsel %vm355, %v342, 0
        %v360 = vsel %vm355, %v343, 0
        %v362 = vsel %vm355, %v344, 0
        %364 = vmatpush.msra.mxu0 0.0
        %365 = vmatpush.msra.mxu0 0.0
        %366 = vmatpush.msra.mxu0 0.0
        %367 = vmatpush.msra.mxu0 0.0
        %368 = vmatpush.msra.mxu0 0.0
        %369 = vmatpush.msra.mxu0 0.0
        %370 = vmatpush.msra.mxu0 0.0
        %371 = vmatpush.msra.mxu0 0.0
        %372 = vmatpush.msra.mxu0 0.0
        %373 = vmatpush.msra.mxu0 0.0
        %374 = vmatpush.msra.mxu0 0.0
        %375 = vmatpush.msra.mxu0 0.0
        %376 = vmatpush.msra.mxu0 0.0
        %377 = vmatpush.msra.mxu0 0.0
        %378 = vmatpush.msra.mxu0 0.0
        %379 = vmatpush.msra.mxu0 %v356
        %380 = vmatmul.f32.gmra.mxu0 %v347
        %v381 = vpop.f32.mrf.mxu0
        %v382 = vadd.f32 0.0, %v381
        %383 = vmatmul.f32.gmra.mxu0 %v350
        %v384 = vpop.f32.mrf.mxu0
        %v385 = vadd.f32 0.0, %v384
        %386 = vmatmul.f32.gmra.mxu0 %v353
        %v387 = vpop.f32.mrf.mxu0
        %v388 = vadd.f32 0.0, %v387
        %389 = vdwg.mxu0
        %390 = vmatpush.msra.mxu0 0.0
        %391 = vmatpush.msra.mxu0 0.0
        %392 = vmatpush.msra.mxu0 0.0
        %393 = vmatpush.msra.mxu0 0.0
        %394 = vmatpush.msra.mxu0 0.0
        %395 = vmatpush.msra.mxu0 0.0
        %396 = vmatpush.msra.mxu0 0.0
        %397 = vmatpush.msra.mxu0 0.0
        %398 = vmatpush.msra.mxu0 0.0
        %399 = vmatpush.msra.mxu0 0.0
        %400 = vmatpush.msra.mxu0 0.0
        %401 = vmatpush.msra.mxu0 0.0
        %402 = vmatpush.msra.mxu0 0.0
        %403 = vmatpush.msra.mxu0 0.0
        %404 = vmatpush.msra.mxu0 0.0
        %405 = vmatpush.msra.mxu0 %v358
        %406 = vmatmul.f32.gmra.mxu0 %v347
        %v407 = vpop.f32.mrf.mxu0
        %v408 = vadd.f32 0.0, %v407
        %409 = vmatmul.f32.gmra.mxu0 %v350
        %v410 = vpop.f32.mrf.mxu0
        %v411 = vadd.f32 0.0, %v410
        %412 = vmatmul.f32.gmra.mxu0 %v353
        %v413 = vpop.f32.mrf.mxu0
        %v414 = vadd.f32 0.0, %v413
        %415 = vdwg.mxu0
        %416 = vmatpush.msra.mxu0 0.0
        %417 = vmatpush.msra.mxu0 0.0
        %418 = vmatpush.msra.mxu0 0.0
        %419 = vmatpush.msra.mxu0 0.0
        %420 = vmatpush.msra.mxu0 0.0
        %421 = vmatpush.msra.mxu0 0.0
        %422 = vmatpush.msra.mxu0 0.0
        %423 = vmatpush.msra.mxu0 0.0
        %424 = vmatpush.msra.mxu0 0.0
        %425 = vmatpush.msra.mxu0 0.0
        %426 = vmatpush.msra.mxu0 0.0
        %427 = vmatpush.msra.mxu0 0.0
        %428 = vmatpush.msra.mxu0 0.0
        %429 = vmatpush.msra.mxu0 0.0
        %430 = vmatpush.msra.mxu0 0.0
        %431 = vmatpush.msra.mxu0 %v360
        %432 = vmatmul.f32.gmra.mxu0 %v347
        %v433 = vpop.f32.mrf.mxu0
        %v434 = vadd.f32 0.0, %v433
        %435 = vmatmul.f32.gmra.mxu0 %v350
        %v436 = vpop.f32.mrf.mxu0
        %v437 = vadd.f32 0.0, %v436
        %438 = vmatmul.f32.gmra.mxu0 %v353
        %v439 = vpop.f32.mrf.mxu0
        %v440 = vadd.f32 0.0, %v439
        %441 = vdwg.mxu0
        %442 = vmatpush.msra.mxu0 0.0
        %443 = vmatpush.msra.mxu0 0.0
        %444 = vmatpush.msra.mxu0 0.0
        %445 = vmatpush.msra.mxu0 0.0
        %446 = vmatpush.msra.mxu0 0.0
        %447 = vmatpush.msra.mxu0 0.0
        %448 = vmatpush.msra.mxu0 0.0
        %449 = vmatpush.msra.mxu0 0.0
        %450 = vmatpush.msra.mxu0 0.0
        %451 = vmatpush.msra.mxu0 0.0
        %452 = vmatpush.msra.mxu0 0.0
        %453 = vmatpush.msra.mxu0 0.0
        %454 = vmatpush.msra.mxu0 0.0
        %455 = vmatpush.msra.mxu0 0.0
        %456 = vmatpush.msra.mxu0 0.0
        %457 = vmatpush.msra.mxu0 %v362
        %458 = vmatmul.f32.gmra.mxu0 %v347
        %v459 = vpop.f32.mrf.mxu0
        %v460 = vadd.f32 0.0, %v459
        %461 = vmatmul.f32.gmra.mxu0 %v350
        %v462 = vpop.f32.mrf.mxu0
        %v463 = vadd.f32 0.0, %v462
        %464 = vmatmul.f32.gmra.mxu0 %v353
        %v465 = vpop.f32.mrf.mxu0
        %v466 = vadd.f32 0.0, %v465
        %467 = vdwg.mxu0
        %469 = vrot.lane.b32.xlu0 %v460, 1
        %v470 = vpop.permute.xlu0 %469
        %475 = vrot.lane.b32.xlu0 %v382, 1
        %v476 = vpop.permute.xlu0 %475
        %477 = vrot.lane.b32.xlu0 %v408, 1
        %v478 = vpop.permute.xlu0 %477
        %479 = vrot.lane.b32.xlu0 %v434, 1
        %v480 = vpop.permute.xlu0 %479
        %vm481 = vcmask 7168
        %v482 = vsel %vm481, %v476, %v478
        %v483 = vsel %vm481, %v478, %v480
        %v484 = vsel %vm481, %v480, %v470
        %v489 = vsel %vm481, %v470, %v476
        %v490 = vsel %vm323, 1, 0
        %v491 = vsel %vm324, 1, 0
        %v492 = vsel %vm325, 1, 0
        %v493 = vsel %vm326, 1, 0
        %vm494 = vcmp.eq.s32.totalorder %v490, 1
        %vm495 = vcmp.eq.s32.totalorder %v491, 1
        %vm496 = vcmp.eq.s32.totalorder %v492, 1
        %vm497 = vcmp.eq.s32.totalorder %v493, 1
        %v498 = vsel %vm494, 0.0, %v489
        %v499 = vsel %vm495, 0.0, %v482
        %v500 = vsel %vm496, 0.0, %v483
        %v501 = vsel %vm497, 0.0, %v484
        %506 = vrot.lane.b32.xlu0 %v388, 127
        %v507 = vpop.permute.xlu0 %506
        %508 = vrot.lane.b32.xlu0 %v414, 127
        %v509 = vpop.permute.xlu0 %508
        %510 = vrot.lane.b32.xlu0 %v440, 127
        %v511 = vpop.permute.xlu0 %510
        %512 = vrot.lane.b32.xlu0 %v466, 127
        %v513 = vpop.permute.xlu0 %512
        %vm514 = vcmask 1039360
        %v515 = vsel %vm514, %v507, %v509
        %v516 = vsel %vm514, %v509, %v511
        %v517 = vsel %vm514, %v511, %v513
        %v523 = vsel %vm514, %v513, %v507
        %v524 = vsel %vm327, 1, 0
        %v525 = vsel %vm328, 1, 0
        %v526 = vsel %vm329, 1, 0
        %v527 = vsel %vm330, 1, 0
        %vm528 = vcmp.eq.s32.totalorder %v524, 1
        %vm529 = vcmp.eq.s32.totalorder %v525, 1
        %vm530 = vcmp.eq.s32.totalorder %v526, 1
        %vm531 = vcmp.eq.s32.totalorder %v527, 1
        %v532 = vsel %vm528, 0.0, %v515
        %v533 = vsel %vm529, 0.0, %v516
        %v534 = vsel %vm530, 0.0, %v517
        %v535 = vsel %vm531, 0.0, %v523
        %v536 = vadd.f32 %v498, %v385
        %v537 = vadd.f32 %v499, %v411
        %v538 = vadd.f32 %v500, %v437
        %v539 = vadd.f32 %v501, %v463
        %v540 = vadd.f32 %v536, %v532
        %v541 = vadd.f32 %v537, %v533
        %v542 = vadd.f32 %v538, %v534
        %v543 = vadd.f32 %v539, %v535
        %v544 = vld [vmem:[%s2] sm:$0xff]
        %546 = vset.pattern.permute.xlu0 0
        %547 = vperm.xlu0 %546, %v544
        %v548 = vpop.permute.xlu0 %547
        %v550 = vadd.f32 %v540, %v548
        %v551 = vadd.f32 %v541, %v548
        %v552 = vadd.f32 %v542, %v548
        %v553 = vadd.f32 %v543, %v548
        %vm554 = vcmp.gt.f32.partialorder %v550, 0.0
        %vm555 = vcmp.gt.f32.partialorder %v551, 0.0
        %vm556 = vcmp.gt.f32.partialorder %v552, 0.0
        %vm557 = vcmp.gt.f32.partialorder %v553, 0.0
        %v558 = vmul.f32 %v550, 0.1
        %v559 = vmul.f32 %v551, 0.1
        %v560 = vmul.f32 %v552, 0.1
        %v561 = vmul.f32 %v553, 0.1
        %v562 = vsel %vm554, %v550, %v558
        %v563 = vsel %vm555, %v551, %v559
        %v564 = vsel %vm556, %v552, %v560
        %v565 = vsel %vm557, %v553, %v561
        %v566 = vld [vmem:[%s3] sm:$0xff]
        %v567 = vld [vmem:[%s3 + $0x8] sm:$0xff]
        %v568 = vld [vmem:[%s3 + $0x10] sm:$0xff]
        %v569 = vld [vmem:[%s3 + $0x18] sm:$0xff]
        %v570 = vld [vmem:[%s3 + $0x20] sm:$0xff]
        %v571 = vld [vmem:[%s3 + $0x28] sm:$0xff]
        %vm572 = vcmask 64512
        %v574 = vsel %vm572, %v566, 0
        %v577 = vsel %vm572, %v567, 0
        %v580 = vsel %vm572, %v568, 0
        %v583 = vsel %vm572, %v569, 0
        %v586 = vsel %vm572, %v570, 0
        %v589 = vsel %vm572, %v571, 0
        %591 = vmatpush.msra.mxu0 0.0
        %592 = vmatpush.msra.mxu0 0.0
        %593 = vmatpush.msra.mxu0 0.0
        %594 = vmatpush.msra.mxu0 0.0
        %595 = vmatpush.msra.mxu0 0.0
        %596 = vmatpush.msra.mxu0 0.0
        %597 = vmatpush.msra.mxu0 0.0
        %598 = vmatpush.msra.mxu0 0.0
        %599 = vmatpush.msra.mxu0 0.0
        %600 = vmatpush.msra.mxu0 0.0
        %601 = vmatpush.msra.mxu0 0.0
        %602 = vmatpush.msra.mxu0 0.0
        %603 = vmatpush.msra.mxu0 0.0
        %604 = vmatpush.msra.mxu0 0.0
        %605 = vmatpush.msra.mxu0 0.0
        %606 = vmatpush.msra.mxu0 %v562
        %607 = vmatmul.f32.gmra.mxu0 %v574
        %v608 = vpop.f32.mrf.mxu0
        %v609 = vadd.f32 0.0, %v608
        %610 = vmatmul.f32.gmra.mxu0 %v577
        %v611 = vpop.f32.mrf.mxu0
        %v612 = vadd.f32 0.0, %v611
        %613 = vmatmul.f32.gmra.mxu0 %v580
        %v614 = vpop.f32.mrf.mxu0
        %v615 = vadd.f32 0.0, %v614
        %616 = vmatmul.f32.gmra.mxu0 %v583
        %v617 = vpop.f32.mrf.mxu0
        %v618 = vadd.f32 0.0, %v617
        %619 = vmatmul.f32.gmra.mxu0 %v586
        %v620 = vpop.f32.mrf.mxu0
        %v621 = vadd.f32 0.0, %v620
        %622 = vmatmul.f32.gmra.mxu0 %v589
        %v623 = vpop.f32.mrf.mxu0
        %v624 = vadd.f32 0.0, %v623
        %625 = vdwg.mxu0
        %626 = vmatpush.msra.mxu0 0.0
        %627 = vmatpush.msra.mxu0 0.0
        %628 = vmatpush.msra.mxu0 0.0
        %629 = vmatpush.msra.mxu0 0.0
        %630 = vmatpush.msra.mxu0 0.0
        %631 = vmatpush.msra.mxu0 0.0
        %632 = vmatpush.msra.mxu0 0.0
        %633 = vmatpush.msra.mxu0 0.0
        %634 = vmatpush.msra.mxu0 0.0
        %635 = vmatpush.msra.mxu0 0.0
        %636 = vmatpush.msra.mxu0 0.0
        %637 = vmatpush.msra.mxu0 0.0
        %638 = vmatpush.msra.mxu0 0.0
        %639 = vmatpush.msra.mxu0 0.0
        %640 = vmatpush.msra.mxu0 0.0
        %641 = vmatpush.msra.mxu0 %v563
        %642 = vmatmul.f32.gmra.mxu0 %v574
        %v643 = vpop.f32.mrf.mxu0
        %v644 = vadd.f32 0.0, %v643
        %645 = vmatmul.f32.gmra.mxu0 %v577
        %v646 = vpop.f32.mrf.mxu0
        %v647 = vadd.f32 0.0, %v646
        %648 = vmatmul.f32.gmra.mxu0 %v580
        %v649 = vpop.f32.mrf.mxu0
        %v650 = vadd.f32 0.0, %v649
        %651 = vmatmul.f32.gmra.mxu0 %v583
        %v652 = vpop.f32.mrf.mxu0
        %v653 = vadd.f32 0.0, %v652
        %654 = vmatmul.f32.gmra.mxu0 %v586
        %v655 = vpop.f32.mrf.mxu0
        %v656 = vadd.f32 0.0, %v655
        %657 = vmatmul.f32.gmra.mxu0 %v589
        %v658 = vpop.f32.mrf.mxu0
        %v659 = vadd.f32 0.0, %v658
        %660 = vdwg.mxu0
        %661 = vmatpush.msra.mxu0 0.0
        %662 = vmatpush.msra.mxu0 0.0
        %663 = vmatpush.msra.mxu0 0.0
        %664 = vmatpush.msra.mxu0 0.0
        %665 = vmatpush.msra.mxu0 0.0
        %666 = vmatpush.msra.mxu0 0.0
        %667 = vmatpush.msra.mxu0 0.0
        %668 = vmatpush.msra.mxu0 0.0
        %669 = vmatpush.msra.mxu0 0.0
        %670 = vmatpush.msra.mxu0 0.0
        %671 = vmatpush.msra.mxu0 0.0
        %672 = vmatpush.msra.mxu0 0.0
        %673 = vmatpush.msra.mxu0 0.0
        %674 = vmatpush.msra.mxu0 0.0
        %675 = vmatpush.msra.mxu0 0.0
        %676 = vmatpush.msra.mxu0 %v564
        %677 = vmatmul.f32.gmra.mxu0 %v574
        %v678 = vpop.f32.mrf.mxu0
        %v679 = vadd.f32 0.0, %v678
        %680 = vmatmul.f32.gmra.mxu0 %v577
        %v681 = vpop.f32.mrf.mxu0
        %v682 = vadd.f32 0.0, %v681
        %683 = vmatmul.f32.gmra.mxu0 %v580
        %v684 = vpop.f32.mrf.mxu0
        %v685 = vadd.f32 0.0, %v684
        %686 = vmatmul.f32.gmra.mxu0 %v583
        %v687 = vpop.f32.mrf.mxu0
        %v688 = vadd.f32 0.0, %v687
        %689 = vmatmul.f32.gmra.mxu0 %v586
        %v690 = vpop.f32.mrf.mxu0
        %v691 = vadd.f32 0.0, %v690
        %692 = vmatmul.f32.gmra.mxu0 %v589
        %v693 = vpop.f32.mrf.mxu0
        %v694 = vadd.f32 0.0, %v693
        %695 = vdwg.mxu0
        %696 = vmatpush.msra.mxu0 0.0
        %697 = vmatpush.msra.mxu0 0.0
        %698 = vmatpush.msra.mxu0 0.0
        %699 = vmatpush.msra.mxu0 0.0
        %700 = vmatpush.msra.mxu0 0.0
        %701 = vmatpush.msra.mxu0 0.0
        %702 = vmatpush.msra.mxu0 0.0
        %703 = vmatpush.msra.mxu0 0.0
        %704 = vmatpush.msra.mxu0 0.0
        %705 = vmatpush.msra.mxu0 0.0
        %706 = vmatpush.msra.mxu0 0.0
        %707 = vmatpush.msra.mxu0 0.0
        %708 = vmatpush.msra.mxu0 0.0
        %709 = vmatpush.msra.mxu0 0.0
        %710 = vmatpush.msra.mxu0 0.0
        %711 = vmatpush.msra.mxu0 %v565
        %712 = vmatmul.f32.gmra.mxu0 %v574
        %v713 = vpop.f32.mrf.mxu0
        %v714 = vadd.f32 0.0, %v713
        %715 = vmatmul.f32.gmra.mxu0 %v577
        %v716 = vpop.f32.mrf.mxu0
        %v717 = vadd.f32 0.0, %v716
        %718 = vmatmul.f32.gmra.mxu0 %v580
        %v719 = vpop.f32.mrf.mxu0
        %v720 = vadd.f32 0.0, %v719
        %721 = vmatmul.f32.gmra.mxu0 %v583
        %v722 = vpop.f32.mrf.mxu0
        %v723 = vadd.f32 0.0, %v722
        %724 = vmatmul.f32.gmra.mxu0 %v586
        %v725 = vpop.f32.mrf.mxu0
        %v726 = vadd.f32 0.0, %v725
        %727 = vmatmul.f32.gmra.mxu0 %v589
        %v728 = vpop.f32.mrf.mxu0
        %v729 = vadd.f32 0.0, %v728
        %730 = vdwg.mxu0
        %733 = vrot.lane.b32.xlu0 %v714, 1
        %v734 = vpop.permute.xlu0 %733
        %735 = vrot.lane.b32.xlu0 %v717, 1
        %v736 = vpop.permute.xlu0 %735
        %745 = vrot.lane.b32.xlu0 %v609, 1
        %v746 = vpop.permute.xlu0 %745
        %747 = vrot.lane.b32.xlu0 %v644, 1
        %v748 = vpop.permute.xlu0 %747
        %749 = vrot.lane.b32.xlu0 %v679, 1
        %v750 = vpop.permute.xlu0 %749
        %751 = vrot.lane.b32.xlu0 %v612, 1
        %v752 = vpop.permute.xlu0 %751
        %753 = vrot.lane.b32.xlu0 %v647, 1
        %v754 = vpop.permute.xlu0 %753
        %755 = vrot.lane.b32.xlu0 %v682, 1
        %v756 = vpop.permute.xlu0 %755
        %v757 = vsel %vm481, %v746, %v748
        %v758 = vsel %vm481, %v748, %v750
        %v759 = vsel %vm481, %v750, %v734
        %v760 = vsel %vm481, %v752, %v754
        %v761 = vsel %vm481, %v754, %v756
        %v762 = vsel %vm481, %v756, %v736
        %v771 = vsel %vm481, %v734, %v746
        %v772 = vsel %vm481, %v736, %v752
        %v773 = vsel %vm494, 0.0, %v771
        %v774 = vsel %vm495, 0.0, %v757
        %v775 = vsel %vm496, 0.0, %v758
        %v776 = vsel %vm497, 0.0, %v759
        %v777 = vsel %vm494, 0.0, %v772
        %v778 = vsel %vm495, 0.0, %v760
        %v779 = vsel %vm496, 0.0, %v761
        %v780 = vsel %vm497, 0.0, %v762
        %789 = vrot.lane.b32.xlu0 %v621, 127
        %v790 = vpop.permute.xlu0 %789
        %791 = vrot.lane.b32.xlu0 %v656, 127
        %v792 = vpop.permute.xlu0 %791
        %793 = vrot.lane.b32.xlu0 %v691, 127
        %v794 = vpop.permute.xlu0 %793
        %795 = vrot.lane.b32.xlu0 %v726, 127
        %v796 = vpop.permute.xlu0 %795
        %797 = vrot.lane.b32.xlu0 %v624, 127
        %v798 = vpop.permute.xlu0 %797
        %799 = vrot.lane.b32.xlu0 %v659, 127
        %v800 = vpop.permute.xlu0 %799
        %801 = vrot.lane.b32.xlu0 %v694, 127
        %v802 = vpop.permute.xlu0 %801
        %803 = vrot.lane.b32.xlu0 %v729, 127
        %v804 = vpop.permute.xlu0 %803
        %v805 = vsel %vm514, %v790, %v792
        %v806 = vsel %vm514, %v792, %v794
        %v807 = vsel %vm514, %v794, %v796
        %v808 = vsel %vm514, %v798, %v800
        %v809 = vsel %vm514, %v800, %v802
        %v810 = vsel %vm514, %v802, %v804
        %v821 = vsel %vm514, %v796, %v790
        %v822 = vsel %vm514, %v804, %v798
        %v823 = vsel %vm528, 0.0, %v805
        %v824 = vsel %vm529, 0.0, %v806
        %v825 = vsel %vm530, 0.0, %v807
        %v826 = vsel %vm531, 0.0, %v821
        %v827 = vsel %vm528, 0.0, %v808
        %v828 = vsel %vm529, 0.0, %v809
        %v829 = vsel %vm530, 0.0, %v810
        %v830 = vsel %vm531, 0.0, %v822
        %v831 = vadd.f32 %v773, %v615
        %v832 = vadd.f32 %v774, %v650
        %v833 = vadd.f32 %v775, %v685
        %v834 = vadd.f32 %v776, %v720
        %v835 = vadd.f32 %v777, %v618
        %v836 = vadd.f32 %v778, %v653
        %v837 = vadd.f32 %v779, %v688
        %v838 = vadd.f32 %v780, %v723
        %v839 = vadd.f32 %v831, %v823
        %v840 = vadd.f32 %v832, %v824
        %v841 = vadd.f32 %v833, %v825
        %v842 = vadd.f32 %v834, %v826
        %v843 = vadd.f32 %v835, %v827
        %v844 = vadd.f32 %v836, %v828
        %v845 = vadd.f32 %v837, %v829
        %v846 = vadd.f32 %v838, %v830
        %v847 = vld [vmem:[%s4] sm:$0xff]
        %v848 = vld [vmem:[%s4 + $0x8] sm:$0xff]
        %850 = vset.pattern.permute.xlu0 0
        %851 = vperm.xlu0 %850, %v847
        %v852 = vpop.permute.xlu0 %851
        %855 = vset.pattern.permute.xlu0 0
        %856 = vperm.xlu0 %855, %v848
        %v857 = vpop.permute.xlu0 %856
        %v859 = vadd.f32 %v839, %v852
        %v860 = vadd.f32 %v840, %v852
        %v861 = vadd.f32 %v841, %v852
        %v862 = vadd.f32 %v842, %v852
        %v863 = vadd.f32 %v843, %v857
        %v864 = vadd.f32 %v844, %v857
        %v865 = vadd.f32 %v845, %v857
        %v866 = vadd.f32 %v846, %v857
        %vm867 = vcmp.gt.f32.partialorder %v859, 0.0
        %vm868 = vcmp.gt.f32.partialorder %v860, 0.0
        %vm869 = vcmp.gt.f32.partialorder %v861, 0.0
        %vm870 = vcmp.gt.f32.partialorder %v862, 0.0
        %vm871 = vcmp.gt.f32.partialorder %v863, 0.0
        %vm872 = vcmp.gt.f32.partialorder %v864, 0.0
        %vm873 = vcmp.gt.f32.partialorder %v865, 0.0
        %vm874 = vcmp.gt.f32.partialorder %v866, 0.0
        %v875 = vmul.f32 %v859, 0.1
        %v876 = vmul.f32 %v860, 0.1
        %v877 = vmul.f32 %v861, 0.1
        %v878 = vmul.f32 %v862, 0.1
        %v879 = vmul.f32 %v863, 0.1
        %v880 = vmul.f32 %v864, 0.1
        %v881 = vmul.f32 %v865, 0.1
        %v882 = vmul.f32 %v866, 0.1
        %v883 = vsel %vm867, %v859, %v875
        %v884 = vsel %vm868, %v860, %v876
        %v885 = vsel %vm869, %v861, %v877
        %v886 = vsel %vm870, %v862, %v878
        %v887 = vsel %vm871, %v863, %v879
        %v888 = vsel %vm872, %v864, %v880
        %v889 = vsel %vm873, %v865, %v881
        %v890 = vsel %vm874, %v866, %v882
        %899 = vrot.lane.b32.xlu0 %v883, 127
        %v900 = vpop.permute.xlu0 %899
        %901 = vrot.lane.b32.xlu0 %v884, 127
        %v902 = vpop.permute.xlu0 %901
        %903 = vrot.lane.b32.xlu0 %v885, 127
        %v904 = vpop.permute.xlu0 %903
        %905 = vrot.lane.b32.xlu0 %v886, 127
        %v906 = vpop.permute.xlu0 %905
        %907 = vrot.lane.b32.xlu0 %v887, 127
        %v908 = vpop.permute.xlu0 %907
        %909 = vrot.lane.b32.xlu0 %v888, 127
        %v910 = vpop.permute.xlu0 %909
        %911 = vrot.lane.b32.xlu0 %v889, 127
        %v912 = vpop.permute.xlu0 %911
        %913 = vrot.lane.b32.xlu0 %v890, 127
        %v914 = vpop.permute.xlu0 %913
        %v915 = vsel %vm514, %v900, %v902
        %v916 = vsel %vm514, %v902, %v904
        %v917 = vsel %vm514, %v904, %v906
        %v918 = vsel %vm514, %v908, %v910
        %v919 = vsel %vm514, %v910, %v912
        %v920 = vsel %vm514, %v912, %v914
        %v931 = vsel %vm514, %v906, %v900
        %v932 = vsel %vm514, %v914, %v908
        %v933 = vmax.f32 %v883, %v915
        %v934 = vmax.f32 %v884, %v916
        %v935 = vmax.f32 %v885, %v917
        %v936 = vmax.f32 %v886, %v931
        %v937 = vmax.f32 %v887, %v918
        %v938 = vmax.f32 %v888, %v919
        %v939 = vmax.f32 %v889, %v920
        %v940 = vmax.f32 %v890, %v932
        %v941 = vld [vmem:[#allocation2] sm:$0xff]
        %v942 = vld [vmem:[#allocation2 + $0x8] sm:$0xff]
        %v943 = vld [vmem:[#allocation2 + $0x10] sm:$0xff]
        %v944 = vld [vmem:[#allocation2 + $0x18] sm:$0xff]
        %v945 = vld [vmem:[#allocation2 + $0x20] sm:$0xff]
        %v946 = vld [vmem:[#allocation2 + $0x28] sm:$0xff]
        %v947 = vld [vmem:[#allocation2 + $0x30] sm:$0xff]
        %v948 = vld [vmem:[#allocation2 + $0x38] sm:$0xff]
        %v949 = vld [vmem:[#allocation2 + $0x40] sm:$0xff]
        %v950 = vld [vmem:[#allocation2 + $0x48] sm:$0xff]
        %v951 = vld [vmem:[#allocation2 + $0x50] sm:$0xff]
        %v952 = vld [vmem:[#allocation2 + $0x58] sm:$0xff]
        %v953 = vld [vmem:[#allocation2 + $0x60] sm:$0xff]
        %v954 = vld [vmem:[#allocation2 + $0x68] sm:$0xff]
        %v955 = vld [vmem:[#allocation2 + $0x70] sm:$0xff]
        %v956 = vld [vmem:[#allocation2 + $0x78] sm:$0xff]
        %v957 = vld [vmem:[#allocation2 + $0x80] sm:$0xff]
        %v958 = vld [vmem:[#allocation2 + $0x88] sm:$0xff]
        %v959 = vld [vmem:[#allocation2 + $0x90] sm:$0xff]
        %v960 = vld [vmem:[#allocation2 + $0x98] sm:$0xff]
        %v961 = vld [vmem:[#allocation2 + $0xa0] sm:$0xff]
        %v962 = vld [vmem:[#allocation2 + $0xa8] sm:$0xff]
        %v963 = vld [vmem:[#allocation2 + $0xb0] sm:$0xff]
        %v964 = vld [vmem:[#allocation2 + $0xb8] sm:$0xff]
        %v965 = vld [vmem:[#allocation2 + $0xc0] sm:$0xff]
        %v966 = vld [vmem:[#allocation2 + $0xc8] sm:$0xff]
        %v967 = vld [vmem:[#allocation2 + $0xd0] sm:$0xff]
        %v968 = vld [vmem:[#allocation2 + $0xd8] sm:$0xff]
        %v969 = vld [vmem:[#allocation2 + $0xe0] sm:$0xff]
        %v970 = vld [vmem:[#allocation2 + $0xe8] sm:$0xff]
        %v971 = vld [vmem:[#allocation2 + $0xf0] sm:$0xff]
        %v972 = vld [vmem:[#allocation2 + $0xf8] sm:$0xff]
        %v973 = vld [vmem:[#allocation2 + $0x100] sm:$0xff]
        %v974 = vld [vmem:[#allocation2 + $0x108] sm:$0xff]
        %v975 = vld [vmem:[#allocation2 + $0x110] sm:$0xff]
        %v976 = vld [vmem:[#allocation2 + $0x118] sm:$0xff]
        %v977 = vld [vmem:[#allocation2 + $0x120] sm:$0xff]
        %v978 = vld [vmem:[#allocation2 + $0x128] sm:$0xff]
        %v979 = vld [vmem:[#allocation2 + $0x130] sm:$0xff]
        %v980 = vld [vmem:[#allocation2 + $0x138] sm:$0xff]
        %v981 = vld [vmem:[#allocation2 + $0x140] sm:$0xff]
        %v982 = vld [vmem:[#allocation2 + $0x148] sm:$0xff]
        %v983 = vld [vmem:[#allocation2 + $0x150] sm:$0xff]
        %v984 = vld [vmem:[#allocation2 + $0x158] sm:$0xff]
        %v985 = vld [vmem:[#allocation2 + $0x160] sm:$0xff]
        %v986 = vld [vmem:[#allocation2 + $0x168] sm:$0xff]
        %v987 = vld [vmem:[#allocation2 + $0x170] sm:$0xff]
        %v988 = vld [vmem:[#allocation2 + $0x178] sm:$0xff]
        %v989 = vld [vmem:[#allocation2 + $0x180] sm:$0xff]
        %v990 = vld [vmem:[#allocation2 + $0x188] sm:$0xff]
        %v991 = vld [vmem:[#allocation2 + $0x190] sm:$0xff]
        %v992 = vld [vmem:[#allocation2 + $0x198] sm:$0xff]
        %v993 = vld [vmem:[#allocation2 + $0x1a0] sm:$0xff]
        %v994 = vld [vmem:[#allocation2 + $0x1a8] sm:$0xff]
        %v995 = vld [vmem:[#allocation2 + $0x1b0] sm:$0xff]
        %v996 = vld [vmem:[#allocation2 + $0x1b8] sm:$0xff]
        %v997 = vld [vmem:[#allocation2 + $0x1c0] sm:$0xff]
        %v998 = vld [vmem:[#allocation2 + $0x1c8] sm:$0xff]
        %v999 = vld [vmem:[#allocation2 + $0x1d0] sm:$0xff]
        %v1000 = vld [vmem:[#allocation2 + $0x1d8] sm:$0xff]
        %v1001 = vld [vmem:[#allocation2 + $0x1e0] sm:$0xff]
        %v1002 = vld [vmem:[#allocation2 + $0x1e8] sm:$0xff]
        %v1003 = vld [vmem:[#allocation2 + $0x1f0] sm:$0xff]
        %v1004 = vld [vmem:[#allocation2 + $0x1f8] sm:$0xff]
        %v1005 = vld [vmem:[#allocation2 + $0x200] sm:$0xff]
        %v1006 = vld [vmem:[#allocation2 + $0x208] sm:$0xff]
        %v1007 = vld [vmem:[#allocation2 + $0x210] sm:$0xff]
        %v1008 = vld [vmem:[#allocation2 + $0x218] sm:$0xff]
        %v1009 = vld [vmem:[#allocation2 + $0x220] sm:$0xff]
        %v1010 = vld [vmem:[#allocation2 + $0x228] sm:$0xff]
        %v1011 = vld [vmem:[#allocation2 + $0x230] sm:$0xff]
        %v1012 = vld [vmem:[#allocation2 + $0x238] sm:$0xff]
        %v1013 = vld [vmem:[#allocation2 + $0x240] sm:$0xff]
        %v1014 = vld [vmem:[#allocation2 + $0x248] sm:$0xff]
        %v1015 = vld [vmem:[#allocation2 + $0x250] sm:$0xff]
        %v1016 = vld [vmem:[#allocation2 + $0x258] sm:$0xff]
        %v1017 = vld [vmem:[#allocation2 + $0x260] sm:$0xff]
        %v1018 = vld [vmem:[#allocation2 + $0x268] sm:$0xff]
        %v1019 = vld [vmem:[#allocation2 + $0x270] sm:$0xff]
        %v1020 = vld [vmem:[#allocation2 + $0x278] sm:$0xff]
        %v1021 = vld [vmem:[#allocation2 + $0x280] sm:$0xff]
        %v1022 = vld [vmem:[#allocation2 + $0x288] sm:$0xff]
        %v1023 = vld [vmem:[#allocation2 + $0x290] sm:$0xff]
        %v1024 = vld [vmem:[#allocation2 + $0x298] sm:$0xff]
        %v1025 = vld [vmem:[#allocation2 + $0x2a0] sm:$0xff]
        %v1026 = vld [vmem:[#allocation2 + $0x2a8] sm:$0xff]
        %v1027 = vld [vmem:[#allocation2 + $0x2b0] sm:$0xff]
        %v1028 = vld [vmem:[#allocation2 + $0x2b8] sm:$0xff]
        %v1029 = vld [vmem:[#allocation2 + $0x2c0] sm:$0xff]
        %v1030 = vld [vmem:[#allocation2 + $0x2c8] sm:$0xff]
        %v1031 = vld [vmem:[#allocation2 + $0x2d0] sm:$0xff]
        %v1032 = vld [vmem:[#allocation2 + $0x2d8] sm:$0xff]
        %v1033 = vld [vmem:[#allocation2 + $0x2e0] sm:$0xff]
        %v1034 = vld [vmem:[#allocation2 + $0x2e8] sm:$0xff]
        %v1035 = vld [vmem:[#allocation2 + $0x2f0] sm:$0xff]
        %v1036 = vld [vmem:[#allocation2 + $0x2f8] sm:$0xff]
        %v1037 = vld [vmem:[#allocation2 + $0x300] sm:$0xff]
        %v1038 = vld [vmem:[#allocation2 + $0x308] sm:$0xff]
        %v1039 = vld [vmem:[#allocation2 + $0x310] sm:$0xff]
        %v1040 = vld [vmem:[#allocation2 + $0x318] sm:$0xff]
        %v1041 = vld [vmem:[#allocation2 + $0x320] sm:$0xff]
        %v1042 = vld [vmem:[#allocation2 + $0x328] sm:$0xff]
        %v1043 = vld [vmem:[#allocation2 + $0x330] sm:$0xff]
        %v1044 = vld [vmem:[#allocation2 + $0x338] sm:$0xff]
        %v1045 = vld [vmem:[#allocation2 + $0x340] sm:$0xff]
        %v1046 = vld [vmem:[#allocation2 + $0x348] sm:$0xff]
        %v1047 = vld [vmem:[#allocation2 + $0x350] sm:$0xff]
        %v1048 = vld [vmem:[#allocation2 + $0x358] sm:$0xff]
        %v1049 = vld [vmem:[#allocation2 + $0x360] sm:$0xff]
        %v1050 = vld [vmem:[#allocation2 + $0x368] sm:$0xff]
        %v1051 = vld [vmem:[#allocation2 + $0x370] sm:$0xff]
        %v1052 = vld [vmem:[#allocation2 + $0x378] sm:$0xff]
        %v1053 = vld [vmem:[#allocation2 + $0x380] sm:$0xff]
        %v1054 = vld [vmem:[#allocation2 + $0x388] sm:$0xff]
        %v1055 = vld [vmem:[#allocation2 + $0x390] sm:$0xff]
        %v1056 = vld [vmem:[#allocation2 + $0x398] sm:$0xff]
        %v1057 = vld [vmem:[#allocation2 + $0x3a0] sm:$0xff]
        %v1058 = vld [vmem:[#allocation2 + $0x3a8] sm:$0xff]
        %v1059 = vld [vmem:[#allocation2 + $0x3b0] sm:$0xff]
        %v1060 = vld [vmem:[#allocation2 + $0x3b8] sm:$0xff]
        %v1061 = vld [vmem:[#allocation2 + $0x3c0] sm:$0xff]
        %v1062 = vld [vmem:[#allocation2 + $0x3c8] sm:$0xff]
        %v1063 = vld [vmem:[#allocation2 + $0x3d0] sm:$0xff]
        %v1064 = vld [vmem:[#allocation2 + $0x3d8] sm:$0xff]
        %v1065 = vld [vmem:[#allocation2 + $0x3e0] sm:$0xff]
        %v1066 = vld [vmem:[#allocation2 + $0x3e8] sm:$0xff]
        %v1067 = vld [vmem:[#allocation2 + $0x3f0] sm:$0xff]
        %v1068 = vld [vmem:[#allocation2 + $0x3f8] sm:$0xff]
        %v1069 = vand.u32 %v971, 4294901760
        %1070 = vmatpush.msra.mxu0 %v1069
        %v1071 = vand.u32 %v969, 4294901760
        %1072 = vmatpush.msra.mxu0 %v1071
        %v1073 = vand.u32 %v967, 4294901760
        %1074 = vmatpush.msra.mxu0 %v1073
        %v1075 = vand.u32 %v965, 4294901760
        %1076 = vmatpush.msra.mxu0 %v1075
        %v1077 = vand.u32 %v963, 4294901760
        %1078 = vmatpush.msra.mxu0 %v1077
        %v1079 = vand.u32 %v961, 4294901760
        %1080 = vmatpush.msra.mxu0 %v1079
        %v1081 = vand.u32 %v959, 4294901760
        %1082 = vmatpush.msra.mxu0 %v1081
        %v1083 = vand.u32 %v957, 4294901760
        %1084 = vmatpush.msra.mxu0 %v1083
        %v1085 = vand.u32 %v955, 4294901760
        %1086 = vmatpush.msra.mxu0 %v1085
        %v1087 = vand.u32 %v953, 4294901760
        %1088 = vmatpush.msra.mxu0 %v1087
        %v1089 = vand.u32 %v951, 4294901760
        %1090 = vmatpush.msra.mxu0 %v1089
        %v1091 = vand.u32 %v949, 4294901760
        %1092 = vmatpush.msra.mxu0 %v1091
        %v1093 = vand.u32 %v947, 4294901760
        %1094 = vmatpush.msra.mxu0 %v1093
        %v1095 = vand.u32 %v945, 4294901760
        %1096 = vmatpush.msra.mxu0 %v1095
        %v1097 = vand.u32 %v943, 4294901760
        %1098 = vmatpush.msra.mxu0 %v1097
        %v1099 = vand.u32 %v941, 4294901760
        %1100 = vmatpush.msra.mxu0 %v1099
        %v1101 = vand.u32 %v933, 4294901760
        %v1102 = vsub.f32 %v933, %v1101
        %v1103 = vand.u32 %v1102, 4294901760
        %v1104 = vsub.f32 %v1102, %v1103
        %v1105 = vand.u32 %v1104, 4294901760
        %1106 = vmatmul.f32.gmra.mxu0 %v1105
        %v1107 = vpop.f32.mrf.mxu0
        %v1108 = vadd.f32 0.0, %v1107
        %v1109 = vand.u32 %v937, 4294901760
        %v1110 = vsub.f32 %v937, %v1109
        %v1111 = vand.u32 %v1110, 4294901760
        %v1112 = vsub.f32 %v1110, %v1111
        %v1113 = vand.u32 %v1112, 4294901760
        %1114 = vmatmul.f32.gmra.mxu0 %v1113
        %v1115 = vpop.f32.mrf.mxu0
        %v1116 = vadd.f32 0.0, %v1115
        %1117 = vdwg.mxu0
        %v1118 = vand.u32 %v971, 4294901760
        %v1119 = vsub.f32 %v971, %v1118
        %v1120 = vand.u32 %v1119, 4294901760
        %v1121 = vsub.f32 %v1119, %v1120
        %v1122 = vand.u32 %v1121, 4294901760
        %1123 = vmatpush.msra.mxu0 %v1122
        %v1124 = vand.u32 %v969, 4294901760
        %v1125 = vsub.f32 %v969, %v1124
        %v1126 = vand.u32 %v1125, 4294901760
        %v1127 = vsub.f32 %v1125, %v1126
        %v1128 = vand.u32 %v1127, 4294901760
        %1129 = vmatpush.msra.mxu0 %v1128
        %v1130 = vand.u32 %v967, 4294901760
        %v1131 = vsub.f32 %v967, %v1130
        %v1132 = vand.u32 %v1131, 4294901760
        %v1133 = vsub.f32 %v1131, %v1132
        %v1134 = vand.u32 %v1133, 4294901760
        %1135 = vmatpush.msra.mxu0 %v1134
        %v1136 = vand.u32 %v965, 4294901760
        %v1137 = vsub.f32 %v965, %v1136
        %v1138 = vand.u32 %v1137, 4294901760
        %v1139 = vsub.f32 %v1137, %v1138
        %v1140 = vand.u32 %v1139, 4294901760
        %1141 = vmatpush.msra.mxu0 %v1140
        %v1142 = vand.u32 %v963, 4294901760
        %v1143 = vsub.f32 %v963, %v1142
        %v1144 = vand.u32 %v1143, 4294901760
        %v1145 = vsub.f32 %v1143, %v1144
        %v1146 = vand.u32 %v1145, 4294901760
        %1147 = vmatpush.msra.mxu0 %v1146
        %v1148 = vand.u32 %v961, 4294901760
        %v1149 = vsub.f32 %v961, %v1148
        %v1150 = vand.u32 %v1149, 4294901760
        %v1151 = vsub.f32 %v1149, %v1150
        %v1152 = vand.u32 %v1151, 4294901760
        %1153 = vmatpush.msra.mxu0 %v1152
        %v1154 = vand.u32 %v959, 4294901760
        %v1155 = vsub.f32 %v959, %v1154
        %v1156 = vand.u32 %v1155, 4294901760
        %v1157 = vsub.f32 %v1155, %v1156
        %v1158 = vand.u32 %v1157, 4294901760
        %1159 = vmatpush.msra.mxu0 %v1158
        %v1160 = vand.u32 %v957, 4294901760
        %v1161 = vsub.f32 %v957, %v1160
        %v1162 = vand.u32 %v1161, 4294901760
        %v1163 = vsub.f32 %v1161, %v1162
        %v1164 = vand.u32 %v1163, 4294901760
        %1165 = vmatpush.msra.mxu0 %v1164
        %v1166 = vand.u32 %v955, 4294901760
        %v1167 = vsub.f32 %v955, %v1166
        %v1168 = vand.u32 %v1167, 4294901760
        %v1169 = vsub.f32 %v1167, %v1168
        %v1170 = vand.u32 %v1169, 4294901760
        %1171 = vmatpush.msra.mxu0 %v1170
        %v1172 = vand.u32 %v953, 4294901760
        %v1173 = vsub.f32 %v953, %v1172
        %v1174 = vand.u32 %v1173, 4294901760
        %v1175 = vsub.f32 %v1173, %v1174
        %v1176 = vand.u32 %v1175, 4294901760
        %1177 = vmatpush.msra.mxu0 %v1176
        %v1178 = vand.u32 %v951, 4294901760
        %v1179 = vsub.f32 %v951, %v1178
        %v1180 = vand.u32 %v1179, 4294901760
        %v1181 = vsub.f32 %v1179, %v1180
        %v1182 = vand.u32 %v1181, 4294901760
        %1183 = vmatpush.msra.mxu0 %v1182
        %v1184 = vand.u32 %v949, 4294901760
        %v1185 = vsub.f32 %v949, %v1184
        %v1186 = vand.u32 %v1185, 4294901760
        %v1187 = vsub.f32 %v1185, %v1186
        %v1188 = vand.u32 %v1187, 4294901760
        %1189 = vmatpush.msra.mxu0 %v1188
        %v1190 = vand.u32 %v947, 4294901760
        %v1191 = vsub.f32 %v947, %v1190
        %v1192 = vand.u32 %v1191, 4294901760
        %v1193 = vsub.f32 %v1191, %v1192
        %v1194 = vand.u32 %v1193, 4294901760
        %1195 = vmatpush.msra.mxu0 %v1194
        %v1196 = vand.u32 %v945, 4294901760
        %v1197 = vsub.f32 %v945, %v1196
        %v1198 = vand.u32 %v1197, 4294901760
        %v1199 = vsub.f32 %v1197, %v1198
        %v1200 = vand.u32 %v1199, 4294901760
        %1201 = vmatpush.msra.mxu0 %v1200
        %v1202 = vand.u32 %v943, 4294901760
        %v1203 = vsub.f32 %v943, %v1202
        %v1204 = vand.u32 %v1203, 4294901760
        %v1205 = vsub.f32 %v1203, %v1204
        %v1206 = vand.u32 %v1205, 4294901760
        %1207 = vmatpush.msra.mxu0 %v1206
        %v1208 = vand.u32 %v941, 4294901760
        %v1209 = vsub.f32 %v941, %v1208
        %v1210 = vand.u32 %v1209, 4294901760
        %v1211 = vsub.f32 %v1209, %v1210
        %v1212 = vand.u32 %v1211, 4294901760
        %1213 = vmatpush.msra.mxu0 %v1212
        %v1214 = vand.u32 %v933, 4294901760
        %1215 = vmatmul.f32.gmra.mxu0 %v1214
        %v1216 = vpop.f32.mrf.mxu0
        %v1217 = vadd.f32 %v1108, %v1216
        %v1218 = vand.u32 %v937, 4294901760
        %1219 = vmatmul.f32.gmra.mxu0 %v1218
        %v1220 = vpop.f32.mrf.mxu0
        %v1221 = vadd.f32 %v1116, %v1220
        %1222 = vdwg.mxu0
        %v1223 = vand.u32 %v971, 4294901760
        %v1224 = vsub.f32 %v971, %v1223
        %1225 = vmatpush.msra.mxu0 %v1224
        %v1226 = vand.u32 %v969, 4294901760
        %v1227 = vsub.f32 %v969, %v1226
        %1228 = vmatpush.msra.mxu0 %v1227
        %v1229 = vand.u32 %v967, 4294901760
        %v1230 = vsub.f32 %v967, %v1229
        %1231 = vmatpush.msra.mxu0 %v1230
        %v1232 = vand.u32 %v965, 4294901760
        %v1233 = vsub.f32 %v965, %v1232
        %1234 = vmatpush.msra.mxu0 %v1233
        %v1235 = vand.u32 %v963, 4294901760
        %v1236 = vsub.f32 %v963, %v1235
        %1237 = vmatpush.msra.mxu0 %v1236
        %v1238 = vand.u32 %v961, 4294901760
        %v1239 = vsub.f32 %v961, %v1238
        %1240 = vmatpush.msra.mxu0 %v1239
        %v1241 = vand.u32 %v959, 4294901760
        %v1242 = vsub.f32 %v959, %v1241
        %1243 = vmatpush.msra.mxu0 %v1242
        %v1244 = vand.u32 %v957, 4294901760
        %v1245 = vsub.f32 %v957, %v1244
        %1246 = vmatpush.msra.mxu0 %v1245
        %v1247 = vand.u32 %v955, 4294901760
        %v1248 = vsub.f32 %v955, %v1247
        %1249 = vmatpush.msra.mxu0 %v1248
        %v1250 = vand.u32 %v953, 4294901760
        %v1251 = vsub.f32 %v953, %v1250
        %1252 = vmatpush.msra.mxu0 %v1251
        %v1253 = vand.u32 %v951, 4294901760
        %v1254 = vsub.f32 %v951, %v1253
        %1255 = vmatpush.msra.mxu0 %v1254
        %v1256 = vand.u32 %v949, 4294901760
        %v1257 = vsub.f32 %v949, %v1256
        %1258 = vmatpush.msra.mxu0 %v1257
        %v1259 = vand.u32 %v947, 4294901760
        %v1260 = vsub.f32 %v947, %v1259
        %1261 = vmatpush.msra.mxu0 %v1260
        %v1262 = vand.u32 %v945, 4294901760
        %v1263 = vsub.f32 %v945, %v1262
        %1264 = vmatpush.msra.mxu0 %v1263
        %v1265 = vand.u32 %v943, 4294901760
        %v1266 = vsub.f32 %v943, %v1265
        %1267 = vmatpush.msra.mxu0 %v1266
        %v1268 = vand.u32 %v941, 4294901760
        %v1269 = vsub.f32 %v941, %v1268
        %1270 = vmatpush.msra.mxu0 %v1269
        %v1271 = vand.u32 %v933, 4294901760
        %v1272 = vsub.f32 %v933, %v1271
        %1273 = vmatmul.f32.gmra.mxu0 %v1272
        %v1274 = vpop.f32.mrf.mxu0
        %v1275 = vadd.f32 %v1217, %v1274
        %v1276 = vand.u32 %v937, 4294901760
        %v1277 = vsub.f32 %v937, %v1276
        %1278 = vmatmul.f32.gmra.mxu0 %v1277
        %v1279 = vpop.f32.mrf.mxu0
        %v1280 = vadd.f32 %v1221, %v1279
        %1281 = vdwg.mxu0
        %v1282 = vand.u32 %v971, 4294901760
        %1283 = vmatpush.msra.mxu0 %v1282
        %v1284 = vand.u32 %v969, 4294901760
        %1285 = vmatpush.msra.mxu0 %v1284
        %v1286 = vand.u32 %v967, 4294901760
        %1287 = vmatpush.msra.mxu0 %v1286
        %v1288 = vand.u32 %v965, 4294901760
        %1289 = vmatpush.msra.mxu0 %v1288
        %v1290 = vand.u32 %v963, 4294901760
        %1291 = vmatpush.msra.mxu0 %v1290
        %v1292 = vand.u32 %v961, 4294901760
        %1293 = vmatpush.msra.mxu0 %v1292
        %v1294 = vand.u32 %v959, 4294901760
        %1295 = vmatpush.msra.mxu0 %v1294
        %v1296 = vand.u32 %v957, 4294901760
        %1297 = vmatpush.msra.mxu0 %v1296
        %v1298 = vand.u32 %v955, 4294901760
        %1299 = vmatpush.msra.mxu0 %v1298
        %v1300 = vand.u32 %v953, 4294901760
        %1301 = vmatpush.msra.mxu0 %v1300
        %v1302 = vand.u32 %v951, 4294901760
        %1303 = vmatpush.msra.mxu0 %v1302
        %v1304 = vand.u32 %v949, 4294901760
        %1305 = vmatpush.msra.mxu0 %v1304
        %v1306 = vand.u32 %v947, 4294901760
        %1307 = vmatpush.msra.mxu0 %v1306
        %v1308 = vand.u32 %v945, 4294901760
        %1309 = vmatpush.msra.mxu0 %v1308
        %v1310 = vand.u32 %v943, 4294901760
        %1311 = vmatpush.msra.mxu0 %v1310
        %v1312 = vand.u32 %v941, 4294901760
        %1313 = vmatpush.msra.mxu0 %v1312
        %v1314 = vand.u32 %v933, 4294901760
        %v1315 = vsub.f32 %v933, %v1314
        %v1316 = vand.u32 %v1315, 4294901760
        %1317 = vmatmul.f32.gmra.mxu0 %v1316
        %v1318 = vpop.f32.mrf.mxu0
        %v1319 = vadd.f32 %v1275, %v1318
        %v1320 = vand.u32 %v937, 4294901760
        %v1321 = vsub.f32 %v937, %v1320
        %v1322 = vand.u32 %v1321, 4294901760
        %1323 = vmatmul.f32.gmra.mxu0 %v1322
        %v1324 = vpop.f32.mrf.mxu0
        %v1325 = vadd.f32 %v1280, %v1324
        %1326 = vdwg.mxu0
        %v1327 = vand.u32 %v971, 4294901760
        %v1328 = vsub.f32 %v971, %v1327
        %v1329 = vand.u32 %v1328, 4294901760
        %1330 = vmatpush.msra.mxu0 %v1329
        %v1331 = vand.u32 %v969, 4294901760
        %v1332 = vsub.f32 %v969, %v1331
        %v1333 = vand.u32 %v1332, 4294901760
        %1334 = vmatpush.msra.mxu0 %v1333
        %v1335 = vand.u32 %v967, 4294901760
        %v1336 = vsub.f32 %v967, %v1335
        %v1337 = vand.u32 %v1336, 4294901760
        %1338 = vmatpush.msra.mxu0 %v1337
        %v1339 = vand.u32 %v965, 4294901760
        %v1340 = vsub.f32 %v965, %v1339
        %v1341 = vand.u32 %v1340, 4294901760
        %1342 = vmatpush.msra.mxu0 %v1341
        %v1343 = vand.u32 %v963, 4294901760
        %v1344 = vsub.f32 %v963, %v1343
        %v1345 = vand.u32 %v1344, 4294901760
        %1346 = vmatpush.msra.mxu0 %v1345
        %v1347 = vand.u32 %v961, 4294901760
        %v1348 = vsub.f32 %v961, %v1347
        %v1349 = vand.u32 %v1348, 4294901760
        %1350 = vmatpush.msra.mxu0 %v1349
        %v1351 = vand.u32 %v959, 4294901760
        %v1352 = vsub.f32 %v959, %v1351
        %v1353 = vand.u32 %v1352, 4294901760
        %1354 = vmatpush.msra.mxu0 %v1353
        %v1355 = vand.u32 %v957, 4294901760
        %v1356 = vsub.f32 %v957, %v1355
        %v1357 = vand.u32 %v1356, 4294901760
        %1358 = vmatpush.msra.mxu0 %v1357
        %v1359 = vand.u32 %v955, 4294901760
        %v1360 = vsub.f32 %v955, %v1359
        %v1361 = vand.u32 %v1360, 4294901760
        %1362 = vmatpush.msra.mxu0 %v1361
        %v1363 = vand.u32 %v953, 4294901760
        %v1364 = vsub.f32 %v953, %v1363
        %v1365 = vand.u32 %v1364, 4294901760
        %1366 = vmatpush.msra.mxu0 %v1365
        %v1367 = vand.u32 %v951, 4294901760
        %v1368 = vsub.f32 %v951, %v1367
        %v1369 = vand.u32 %v1368, 4294901760
        %1370 = vmatpush.msra.mxu0 %v1369
        %v1371 = vand.u32 %v949, 4294901760
        %v1372 = vsub.f32 %v949, %v1371
        %v1373 = vand.u32 %v1372, 4294901760
        %1374 = vmatpush.msra.mxu0 %v1373
        %v1375 = vand.u32 %v947, 4294901760
        %v1376 = vsub.f32 %v947, %v1375
        %v1377 = vand.u32 %v1376, 4294901760
        %1378 = vmatpush.msra.mxu0 %v1377
        %v1379 = vand.u32 %v945, 4294901760
        %v1380 = vsub.f32 %v945, %v1379
        %v1381 = vand.u32 %v1380, 4294901760
        %1382 = vmatpush.msra.mxu0 %v1381
        %v1383 = vand.u32 %v943, 4294901760
        %v1384 = vsub.f32 %v943, %v1383
        %v1385 = vand.u32 %v1384, 4294901760
        %1386 = vmatpush.msra.mxu0 %v1385
        %v1387 = vand.u32 %v941, 4294901760
        %v1388 = vsub.f32 %v941, %v1387
        %v1389 = vand.u32 %v1388, 4294901760
        %1390 = vmatpush.msra.mxu0 %v1389
        %v1391 = vand.u32 %v933, 4294901760
        %1392 = vmatmul.f32.gmra.mxu0 %v1391
        %v1393 = vpop.f32.mrf.mxu0
        %v1394 = vadd.f32 %v1319, %v1393
        %v1395 = vand.u32 %v937, 4294901760
        %1396 = vmatmul.f32.gmra.mxu0 %v1395
        %v1397 = vpop.f32.mrf.mxu0
        %v1398 = vadd.f32 %v1325, %v1397
        %1399 = vdwg.mxu0
        %v1400 = vand.u32 %v971, 4294901760
        %1401 = vmatpush.msra.mxu0 %v1400
        %v1402 = vand.u32 %v969, 4294901760
        %1403 = vmatpush.msra.mxu0 %v1402
        %v1404 = vand.u32 %v967, 4294901760
        %1405 = vmatpush.msra.mxu0 %v1404
        %v1406 = vand.u32 %v965, 4294901760
        %1407 = vmatpush.msra.mxu0 %v1406
        %v1408 = vand.u32 %v963, 4294901760
        %1409 = vmatpush.msra.mxu0 %v1408
        %v1410 = vand.u32 %v961, 4294901760
        %1411 = vmatpush.msra.mxu0 %v1410
        %v1412 = vand.u32 %v959, 4294901760
        %1413 = vmatpush.msra.mxu0 %v1412
        %v1414 = vand.u32 %v957, 4294901760
        %1415 = vmatpush.msra.mxu0 %v1414
        %v1416 = vand.u32 %v955, 4294901760
        %1417 = vmatpush.msra.mxu0 %v1416
        %v1418 = vand.u32 %v953, 4294901760
        %1419 = vmatpush.msra.mxu0 %v1418
        %v1420 = vand.u32 %v951, 4294901760
        %1421 = vmatpush.msra.mxu0 %v1420
        %v1422 = vand.u32 %v949, 4294901760
        %1423 = vmatpush.msra.mxu0 %v1422
        %v1424 = vand.u32 %v947, 4294901760
        %1425 = vmatpush.msra.mxu0 %v1424
        %v1426 = vand.u32 %v945, 4294901760
        %1427 = vmatpush.msra.mxu0 %v1426
        %v1428 = vand.u32 %v943, 4294901760
        %1429 = vmatpush.msra.mxu0 %v1428
        %v1430 = vand.u32 %v941, 4294901760
        %1431 = vmatpush.msra.mxu0 %v1430
        %v1432 = vand.u32 %v933, 4294901760
        %1433 = vmatmul.f32.gmra.mxu0 %v1432
        %v1434 = vpop.f32.mrf.mxu0
        %v1435 = vadd.f32 %v1394, %v1434
        %v1436 = vand.u32 %v937, 4294901760
        %1437 = vmatmul.f32.gmra.mxu0 %v1436
        %v1438 = vpop.f32.mrf.mxu0
        %v1439 = vadd.f32 %v1398, %v1438
        %1440 = vdwg.mxu0
        %v1441 = vand.u32 %v1003, 4294901760
        %1442 = vmatpush.msra.mxu0 %v1441
        %v1443 = vand.u32 %v1001, 4294901760
        %1444 = vmatpush.msra.mxu0 %v1443
        %v1445 = vand.u32 %v999, 4294901760
        %1446 = vmatpush.msra.mxu0 %v1445
        %v1447 = vand.u32 %v997, 4294901760
        %1448 = vmatpush.msra.mxu0 %v1447
        %v1449 = vand.u32 %v995, 4294901760
        %1450 = vmatpush.msra.mxu0 %v1449
        %v1451 = vand.u32 %v993, 4294901760
        %1452 = vmatpush.msra.mxu0 %v1451
        %v1453 = vand.u32 %v991, 4294901760
        %1454 = vmatpush.msra.mxu0 %v1453
        %v1455 = vand.u32 %v989, 4294901760
        %1456 = vmatpush.msra.mxu0 %v1455
        %v1457 = vand.u32 %v987, 4294901760
        %1458 = vmatpush.msra.mxu0 %v1457
        %v1459 = vand.u32 %v985, 4294901760
        %1460 = vmatpush.msra.mxu0 %v1459
        %v1461 = vand.u32 %v983, 4294901760
        %1462 = vmatpush.msra.mxu0 %v1461
        %v1463 = vand.u32 %v981, 4294901760
        %1464 = vmatpush.msra.mxu0 %v1463
        %v1465 = vand.u32 %v979, 4294901760
        %1466 = vmatpush.msra.mxu0 %v1465
        %v1467 = vand.u32 %v977, 4294901760
        %1468 = vmatpush.msra.mxu0 %v1467
        %v1469 = vand.u32 %v975, 4294901760
        %1470 = vmatpush.msra.mxu0 %v1469
        %v1471 = vand.u32 %v973, 4294901760
        %1472 = vmatpush.msra.mxu0 %v1471
        %v1473 = vand.u32 %v934, 4294901760
        %v1474 = vsub.f32 %v934, %v1473
        %v1475 = vand.u32 %v1474, 4294901760
        %v1476 = vsub.f32 %v1474, %v1475
        %v1477 = vand.u32 %v1476, 4294901760
        %1478 = vmatmul.f32.gmra.mxu0 %v1477
        %v1479 = vpop.f32.mrf.mxu0
        %v1480 = vadd.f32 %v1435, %v1479
        %v1481 = vand.u32 %v938, 4294901760
        %v1482 = vsub.f32 %v938, %v1481
        %v1483 = vand.u32 %v1482, 4294901760
        %v1484 = vsub.f32 %v1482, %v1483
        %v1485 = vand.u32 %v1484, 4294901760
        %1486 = vmatmul.f32.gmra.mxu0 %v1485
        %v1487 = vpop.f32.mrf.mxu0
        %v1488 = vadd.f32 %v1439, %v1487
        %1489 = vdwg.mxu0
        %v1490 = vand.u32 %v1003, 4294901760
        %v1491 = vsub.f32 %v1003, %v1490
        %v1492 = vand.u32 %v1491, 4294901760
        %v1493 = vsub.f32 %v1491, %v1492
        %v1494 = vand.u32 %v1493, 4294901760
        %1495 = vmatpush.msra.mxu0 %v1494
        %v1496 = vand.u32 %v1001, 4294901760
        %v1497 = vsub.f32 %v1001, %v1496
        %v1498 = vand.u32 %v1497, 4294901760
        %v1499 = vsub.f32 %v1497, %v1498
        %v1500 = vand.u32 %v1499, 4294901760
        %1501 = vmatpush.msra.mxu0 %v1500
        %v1502 = vand.u32 %v999, 4294901760
        %v1503 = vsub.f32 %v999, %v1502
        %v1504 = vand.u32 %v1503, 4294901760
        %v1505 = vsub.f32 %v1503, %v1504
        %v1506 = vand.u32 %v1505, 4294901760
        %1507 = vmatpush.msra.mxu0 %v1506
        %v1508 = vand.u32 %v997, 4294901760
        %v1509 = vsub.f32 %v997, %v1508
        %v1510 = vand.u32 %v1509, 4294901760
        %v1511 = vsub.f32 %v1509, %v1510
        %v1512 = vand.u32 %v1511, 4294901760
        %1513 = vmatpush.msra.mxu0 %v1512
        %v1514 = vand.u32 %v995, 4294901760
        %v1515 = vsub.f32 %v995, %v1514
        %v1516 = vand.u32 %v1515, 4294901760
        %v1517 = vsub.f32 %v1515, %v1516
        %v1518 = vand.u32 %v1517, 4294901760
        %1519 = vmatpush.msra.mxu0 %v1518
        %v1520 = vand.u32 %v993, 4294901760
        %v1521 = vsub.f32 %v993, %v1520
        %v1522 = vand.u32 %v1521, 4294901760
        %v1523 = vsub.f32 %v1521, %v1522
        %v1524 = vand.u32 %v1523, 4294901760
        %1525 = vmatpush.msra.mxu0 %v1524
        %v1526 = vand.u32 %v991, 4294901760
        %v1527 = vsub.f32 %v991, %v1526
        %v1528 = vand.u32 %v1527, 4294901760
        %v1529 = vsub.f32 %v1527, %v1528
        %v1530 = vand.u32 %v1529, 4294901760
        %1531 = vmatpush.msra.mxu0 %v1530
        %v1532 = vand.u32 %v989, 4294901760
        %v1533 = vsub.f32 %v989, %v1532
        %v1534 = vand.u32 %v1533, 4294901760
        %v1535 = vsub.f32 %v1533, %v1534
        %v1536 = vand.u32 %v1535, 4294901760
        %1537 = vmatpush.msra.mxu0 %v1536
        %v1538 = vand.u32 %v987, 4294901760
        %v1539 = vsub.f32 %v987, %v1538
        %v1540 = vand.u32 %v1539, 4294901760
        %v1541 = vsub.f32 %v1539, %v1540
        %v1542 = vand.u32 %v1541, 4294901760
        %1543 = vmatpush.msra.mxu0 %v1542
        %v1544 = vand.u32 %v985, 4294901760
        %v1545 = vsub.f32 %v985, %v1544
        %v1546 = vand.u32 %v1545, 4294901760
        %v1547 = vsub.f32 %v1545, %v1546
        %v1548 = vand.u32 %v1547, 4294901760
        %1549 = vmatpush.msra.mxu0 %v1548
        %v1550 = vand.u32 %v983, 4294901760
        %v1551 = vsub.f32 %v983, %v1550
        %v1552 = vand.u32 %v1551, 4294901760
        %v1553 = vsub.f32 %v1551, %v1552
        %v1554 = vand.u32 %v1553, 4294901760
        %1555 = vmatpush.msra.mxu0 %v1554
        %v1556 = vand.u32 %v981, 4294901760
        %v1557 = vsub.f32 %v981, %v1556
        %v1558 = vand.u32 %v1557, 4294901760
        %v1559 = vsub.f32 %v1557, %v1558
        %v1560 = vand.u32 %v1559, 4294901760
        %1561 = vmatpush.msra.mxu0 %v1560
        %v1562 = vand.u32 %v979, 4294901760
        %v1563 = vsub.f32 %v979, %v1562
        %v1564 = vand.u32 %v1563, 4294901760
        %v1565 = vsub.f32 %v1563, %v1564
        %v1566 = vand.u32 %v1565, 4294901760
        %1567 = vmatpush.msra.mxu0 %v1566
        %v1568 = vand.u32 %v977, 4294901760
        %v1569 = vsub.f32 %v977, %v1568
        %v1570 = vand.u32 %v1569, 4294901760
        %v1571 = vsub.f32 %v1569, %v1570
        %v1572 = vand.u32 %v1571, 4294901760
        %1573 = vmatpush.msra.mxu0 %v1572
        %v1574 = vand.u32 %v975, 4294901760
        %v1575 = vsub.f32 %v975, %v1574
        %v1576 = vand.u32 %v1575, 4294901760
        %v1577 = vsub.f32 %v1575, %v1576
        %v1578 = vand.u32 %v1577, 4294901760
        %1579 = vmatpush.msra.mxu0 %v1578
        %v1580 = vand.u32 %v973, 4294901760
        %v1581 = vsub.f32 %v973, %v1580
        %v1582 = vand.u32 %v1581, 4294901760
        %v1583 = vsub.f32 %v1581, %v1582
        %v1584 = vand.u32 %v1583, 4294901760
        %1585 = vmatpush.msra.mxu0 %v1584
        %v1586 = vand.u32 %v934, 4294901760
        %1587 = vmatmul.f32.gmra.mxu0 %v1586
        %v1588 = vpop.f32.mrf.mxu0
        %v1589 = vadd.f32 %v1480, %v1588
        %v1590 = vand.u32 %v938, 4294901760
        %1591 = vmatmul.f32.gmra.mxu0 %v1590
        %v1592 = vpop.f32.mrf.mxu0
        %v1593 = vadd.f32 %v1488, %v1592
        %1594 = vdwg.mxu0
        %v1595 = vand.u32 %v1003, 4294901760
        %v1596 = vsub.f32 %v1003, %v1595
        %1597 = vmatpush.msra.mxu0 %v1596
        %v1598 = vand.u32 %v1001, 4294901760
        %v1599 = vsub.f32 %v1001, %v1598
        %1600 = vmatpush.msra.mxu0 %v1599
        %v1601 = vand.u32 %v999, 4294901760
        %v1602 = vsub.f32 %v999, %v1601
        %1603 = vmatpush.msra.mxu0 %v1602
        %v1604 = vand.u32 %v997, 4294901760
        %v1605 = vsub.f32 %v997, %v1604
        %1606 = vmatpush.msra.mxu0 %v1605
        %v1607 = vand.u32 %v995, 4294901760
        %v1608 = vsub.f32 %v995, %v1607
        %1609 = vmatpush.msra.mxu0 %v1608
        %v1610 = vand.u32 %v993, 4294901760
        %v1611 = vsub.f32 %v993, %v1610
        %1612 = vmatpush.msra.mxu0 %v1611
        %v1613 = vand.u32 %v991, 4294901760
        %v1614 = vsub.f32 %v991, %v1613
        %1615 = vmatpush.msra.mxu0 %v1614
        %v1616 = vand.u32 %v989, 4294901760
        %v1617 = vsub.f32 %v989, %v1616
        %1618 = vmatpush.msra.mxu0 %v1617
        %v1619 = vand.u32 %v987, 4294901760
        %v1620 = vsub.f32 %v987, %v1619
        %1621 = vmatpush.msra.mxu0 %v1620
        %v1622 = vand.u32 %v985, 4294901760
        %v1623 = vsub.f32 %v985, %v1622
        %1624 = vmatpush.msra.mxu0 %v1623
        %v1625 = vand.u32 %v983, 4294901760
        %v1626 = vsub.f32 %v983, %v1625
        %1627 = vmatpush.msra.mxu0 %v1626
        %v1628 = vand.u32 %v981, 4294901760
        %v1629 = vsub.f32 %v981, %v1628
        %1630 = vmatpush.msra.mxu0 %v1629
        %v1631 = vand.u32 %v979, 4294901760
        %v1632 = vsub.f32 %v979, %v1631
        %1633 = vmatpush.msra.mxu0 %v1632
        %v1634 = vand.u32 %v977, 4294901760
        %v1635 = vsub.f32 %v977, %v1634
        %1636 = vmatpush.msra.mxu0 %v1635
        %v1637 = vand.u32 %v975, 4294901760
        %v1638 = vsub.f32 %v975, %v1637
        %1639 = vmatpush.msra.mxu0 %v1638
        %v1640 = vand.u32 %v973, 4294901760
        %v1641 = vsub.f32 %v973, %v1640
        %1642 = vmatpush.msra.mxu0 %v1641
        %v1643 = vand.u32 %v934, 4294901760
        %v1644 = vsub.f32 %v934, %v1643
        %1645 = vmatmul.f32.gmra.mxu0 %v1644
        %v1646 = vpop.f32.mrf.mxu0
        %v1647 = vadd.f32 %v1589, %v1646
        %v1648 = vand.u32 %v938, 4294901760
        %v1649 = vsub.f32 %v938, %v1648
        %1650 = vmatmul.f32.gmra.mxu0 %v1649
        %v1651 = vpop.f32.mrf.mxu0
        %v1652 = vadd.f32 %v1593, %v1651
        %1653 = vdwg.mxu0
        %v1654 = vand.u32 %v1003, 4294901760
        %1655 = vmatpush.msra.mxu0 %v1654
        %v1656 = vand.u32 %v1001, 4294901760
        %1657 = vmatpush.msra.mxu0 %v1656
        %v1658 = vand.u32 %v999, 4294901760
        %1659 = vmatpush.msra.mxu0 %v1658
        %v1660 = vand.u32 %v997, 4294901760
        %1661 = vmatpush.msra.mxu0 %v1660
        %v1662 = vand.u32 %v995, 4294901760
        %1663 = vmatpush.msra.mxu0 %v1662
        %v1664 = vand.u32 %v993, 4294901760
        %1665 = vmatpush.msra.mxu0 %v1664
        %v1666 = vand.u32 %v991, 4294901760
        %1667 = vmatpush.msra.mxu0 %v1666
        %v1668 = vand.u32 %v989, 4294901760
        %1669 = vmatpush.msra.mxu0 %v1668
        %v1670 = vand.u32 %v987, 4294901760
        %1671 = vmatpush.msra.mxu0 %v1670
        %v1672 = vand.u32 %v985, 4294901760
        %1673 = vmatpush.msra.mxu0 %v1672
        %v1674 = vand.u32 %v983, 4294901760
        %1675 = vmatpush.msra.mxu0 %v1674
        %v1676 = vand.u32 %v981, 4294901760
        %1677 = vmatpush.msra.mxu0 %v1676
        %v1678 = vand.u32 %v979, 4294901760
        %1679 = vmatpush.msra.mxu0 %v1678
        %v1680 = vand.u32 %v977, 4294901760
        %1681 = vmatpush.msra.mxu0 %v1680
        %v1682 = vand.u32 %v975, 4294901760
        %1683 = vmatpush.msra.mxu0 %v1682
        %v1684 = vand.u32 %v973, 4294901760
        %1685 = vmatpush.msra.mxu0 %v1684
        %v1686 = vand.u32 %v934, 4294901760
        %v1687 = vsub.f32 %v934, %v1686
        %v1688 = vand.u32 %v1687, 4294901760
        %1689 = vmatmul.f32.gmra.mxu0 %v1688
        %v1690 = vpop.f32.mrf.mxu0
        %v1691 = vadd.f32 %v1647, %v1690
        %v1692 = vand.u32 %v938, 4294901760
        %v1693 = vsub.f32 %v938, %v1692
        %v1694 = vand.u32 %v1693, 4294901760
        %1695 = vmatmul.f32.gmra.mxu0 %v1694
        %v1696 = vpop.f32.mrf.mxu0
        %v1697 = vadd.f32 %v1652, %v1696
        %1698 = vdwg.mxu0
        %v1699 = vand.u32 %v1003, 4294901760
        %v1700 = vsub.f32 %v1003, %v1699
        %v1701 = vand.u32 %v1700, 4294901760
        %1702 = vmatpush.msra.mxu0 %v1701
        %v1703 = vand.u32 %v1001, 4294901760
        %v1704 = vsub.f32 %v1001, %v1703
        %v1705 = vand.u32 %v1704, 4294901760
        %1706 = vmatpush.msra.mxu0 %v1705
        %v1707 = vand.u32 %v999, 4294901760
        %v1708 = vsub.f32 %v999, %v1707
        %v1709 = vand.u32 %v1708, 4294901760
        %1710 = vmatpush.msra.mxu0 %v1709
        %v1711 = vand.u32 %v997, 4294901760
        %v1712 = vsub.f32 %v997, %v1711
        %v1713 = vand.u32 %v1712, 4294901760
        %1714 = vmatpush.msra.mxu0 %v1713
        %v1715 = vand.u32 %v995, 4294901760
        %v1716 = vsub.f32 %v995, %v1715
        %v1717 = vand.u32 %v1716, 4294901760
        %1718 = vmatpush.msra.mxu0 %v1717
        %v1719 = vand.u32 %v993, 4294901760
        %v1720 = vsub.f32 %v993, %v1719
        %v1721 = vand.u32 %v1720, 4294901760
        %1722 = vmatpush.msra.mxu0 %v1721
        %v1723 = vand.u32 %v991, 4294901760
        %v1724 = vsub.f32 %v991, %v1723
        %v1725 = vand.u32 %v1724, 4294901760
        %1726 = vmatpush.msra.mxu0 %v1725
        %v1727 = vand.u32 %v989, 4294901760
        %v1728 = vsub.f32 %v989, %v1727
        %v1729 = vand.u32 %v1728, 4294901760
        %1730 = vmatpush.msra.mxu0 %v1729
        %v1731 = vand.u32 %v987, 4294901760
        %v1732 = vsub.f32 %v987, %v1731
        %v1733 = vand.u32 %v1732, 4294901760
        %1734 = vmatpush.msra.mxu0 %v1733
        %v1735 = vand.u32 %v985, 4294901760
        %v1736 = vsub.f32 %v985, %v1735
        %v1737 = vand.u32 %v1736, 4294901760
        %1738 = vmatpush.msra.mxu0 %v1737
        %v1739 = vand.u32 %v983, 4294901760
        %v1740 = vsub.f32 %v983, %v1739
        %v1741 = vand.u32 %v1740, 4294901760
        %1742 = vmatpush.msra.mxu0 %v1741
        %v1743 = vand.u32 %v981, 4294901760
        %v1744 = vsub.f32 %v981, %v1743
        %v1745 = vand.u32 %v1744, 4294901760
        %1746 = vmatpush.msra.mxu0 %v1745
        %v1747 = vand.u32 %v979, 4294901760
        %v1748 = vsub.f32 %v979, %v1747
        %v1749 = vand.u32 %v1748, 4294901760
        %1750 = vmatpush.msra.mxu0 %v1749
        %v1751 = vand.u32 %v977, 4294901760
        %v1752 = vsub.f32 %v977, %v1751
        %v1753 = vand.u32 %v1752, 4294901760
        %1754 = vmatpush.msra.mxu0 %v1753
        %v1755 = vand.u32 %v975, 4294901760
        %v1756 = vsub.f32 %v975, %v1755
        %v1757 = vand.u32 %v1756, 4294901760
        %1758 = vmatpush.msra.mxu0 %v1757
        %v1759 = vand.u32 %v973, 4294901760
        %v1760 = vsub.f32 %v973, %v1759
        %v1761 = vand.u32 %v1760, 4294901760
        %1762 = vmatpush.msra.mxu0 %v1761
        %v1763 = vand.u32 %v934, 4294901760
        %1764 = vmatmul.f32.gmra.mxu0 %v1763
        %v1765 = vpop.f32.mrf.mxu0
        %v1766 = vadd.f32 %v1691, %v1765
        %v1767 = vand.u32 %v938, 4294901760
        %1768 = vmatmul.f32.gmra.mxu0 %v1767
        %v1769 = vpop.f32.mrf.mxu0
        %v1770 = vadd.f32 %v1697, %v1769
        %1771 = vdwg.mxu0
        %v1772 = vand.u32 %v1003, 4294901760
        %1773 = vmatpush.msra.mxu0 %v1772
        %v1774 = vand.u32 %v1001, 4294901760
        %1775 = vmatpush.msra.mxu0 %v1774
        %v1776 = vand.u32 %v999, 4294901760
        %1777 = vmatpush.msra.mxu0 %v1776
        %v1778 = vand.u32 %v997, 4294901760
        %1779 = vmatpush.msra.mxu0 %v1778
        %v1780 = vand.u32 %v995, 4294901760
        %1781 = vmatpush.msra.mxu0 %v1780
        %v1782 = vand.u32 %v993, 4294901760
        %1783 = vmatpush.msra.mxu0 %v1782
        %v1784 = vand.u32 %v991, 4294901760
        %1785 = vmatpush.msra.mxu0 %v1784
        %v1786 = vand.u32 %v989, 4294901760
        %1787 = vmatpush.msra.mxu0 %v1786
        %v1788 = vand.u32 %v987, 4294901760
        %1789 = vmatpush.msra.mxu0 %v1788
        %v1790 = vand.u32 %v985, 4294901760
        %1791 = vmatpush.msra.mxu0 %v1790
        %v1792 = vand.u32 %v983, 4294901760
        %1793 = vmatpush.msra.mxu0 %v1792
        %v1794 = vand.u32 %v981, 4294901760
        %1795 = vmatpush.msra.mxu0 %v1794
        %v1796 = vand.u32 %v979, 4294901760
        %1797 = vmatpush.msra.mxu0 %v1796
        %v1798 = vand.u32 %v977, 4294901760
        %1799 = vmatpush.msra.mxu0 %v1798
        %v1800 = vand.u32 %v975, 4294901760
        %1801 = vmatpush.msra.mxu0 %v1800
        %v1802 = vand.u32 %v973, 4294901760
        %1803 = vmatpush.msra.mxu0 %v1802
        %v1804 = vand.u32 %v934, 4294901760
        %1805 = vmatmul.f32.gmra.mxu0 %v1804
        %v1806 = vpop.f32.mrf.mxu0
        %v1807 = vadd.f32 %v1766, %v1806
        %v1808 = vand.u32 %v938, 4294901760
        %1809 = vmatmul.f32.gmra.mxu0 %v1808
        %v1810 = vpop.f32.mrf.mxu0
        %v1811 = vadd.f32 %v1770, %v1810
        %1812 = vdwg.mxu0
        %v1813 = vand.u32 %v1035, 4294901760
        %1814 = vmatpush.msra.mxu0 %v1813
        %v1815 = vand.u32 %v1033, 4294901760
        %1816 = vmatpush.msra.mxu0 %v1815
        %v1817 = vand.u32 %v1031, 4294901760
        %1818 = vmatpush.msra.mxu0 %v1817
        %v1819 = vand.u32 %v1029, 4294901760
        %1820 = vmatpush.msra.mxu0 %v1819
        %v1821 = vand.u32 %v1027, 4294901760
        %1822 = vmatpush.msra.mxu0 %v1821
        %v1823 = vand.u32 %v1025, 4294901760
        %1824 = vmatpush.msra.mxu0 %v1823
        %v1825 = vand.u32 %v1023, 4294901760
        %1826 = vmatpush.msra.mxu0 %v1825
        %v1827 = vand.u32 %v1021, 4294901760
        %1828 = vmatpush.msra.mxu0 %v1827
        %v1829 = vand.u32 %v1019, 4294901760
        %1830 = vmatpush.msra.mxu0 %v1829
        %v1831 = vand.u32 %v1017, 4294901760
        %1832 = vmatpush.msra.mxu0 %v1831
        %v1833 = vand.u32 %v1015, 4294901760
        %1834 = vmatpush.msra.mxu0 %v1833
        %v1835 = vand.u32 %v1013, 4294901760
        %1836 = vmatpush.msra.mxu0 %v1835
        %v1837 = vand.u32 %v1011, 4294901760
        %1838 = vmatpush.msra.mxu0 %v1837
        %v1839 = vand.u32 %v1009, 4294901760
        %1840 = vmatpush.msra.mxu0 %v1839
        %v1841 = vand.u32 %v1007, 4294901760
        %1842 = vmatpush.msra.mxu0 %v1841
        %v1843 = vand.u32 %v1005, 4294901760
        %1844 = vmatpush.msra.mxu0 %v1843
        %v1845 = vand.u32 %v935, 4294901760
        %v1846 = vsub.f32 %v935, %v1845
        %v1847 = vand.u32 %v1846, 4294901760
        %v1848 = vsub.f32 %v1846, %v1847
        %v1849 = vand.u32 %v1848, 4294901760
        %1850 = vmatmul.f32.gmra.mxu0 %v1849
        %v1851 = vpop.f32.mrf.mxu0
        %v1852 = vadd.f32 %v1807, %v1851
        %v1853 = vand.u32 %v939, 4294901760
        %v1854 = vsub.f32 %v939, %v1853
        %v1855 = vand.u32 %v1854, 4294901760
        %v1856 = vsub.f32 %v1854, %v1855
        %v1857 = vand.u32 %v1856, 4294901760
        %1858 = vmatmul.f32.gmra.mxu0 %v1857
        %v1859 = vpop.f32.mrf.mxu0
        %v1860 = vadd.f32 %v1811, %v1859
        %1861 = vdwg.mxu0
        %v1862 = vand.u32 %v1035, 4294901760
        %v1863 = vsub.f32 %v1035, %v1862
        %v1864 = vand.u32 %v1863, 4294901760
        %v1865 = vsub.f32 %v1863, %v1864
        %v1866 = vand.u32 %v1865, 4294901760
        %1867 = vmatpush.msra.mxu0 %v1866
        %v1868 = vand.u32 %v1033, 4294901760
        %v1869 = vsub.f32 %v1033, %v1868
        %v1870 = vand.u32 %v1869, 4294901760
        %v1871 = vsub.f32 %v1869, %v1870
        %v1872 = vand.u32 %v1871, 4294901760
        %1873 = vmatpush.msra.mxu0 %v1872
        %v1874 = vand.u32 %v1031, 4294901760
        %v1875 = vsub.f32 %v1031, %v1874
        %v1876 = vand.u32 %v1875, 4294901760
        %v1877 = vsub.f32 %v1875, %v1876
        %v1878 = vand.u32 %v1877, 4294901760
        %1879 = vmatpush.msra.mxu0 %v1878
        %v1880 = vand.u32 %v1029, 4294901760
        %v1881 = vsub.f32 %v1029, %v1880
        %v1882 = vand.u32 %v1881, 4294901760
        %v1883 = vsub.f32 %v1881, %v1882
        %v1884 = vand.u32 %v1883, 4294901760
        %1885 = vmatpush.msra.mxu0 %v1884
        %v1886 = vand.u32 %v1027, 4294901760
        %v1887 = vsub.f32 %v1027, %v1886
        %v1888 = vand.u32 %v1887, 4294901760
        %v1889 = vsub.f32 %v1887, %v1888
        %v1890 = vand.u32 %v1889, 4294901760
        %1891 = vmatpush.msra.mxu0 %v1890
        %v1892 = vand.u32 %v1025, 4294901760
        %v1893 = vsub.f32 %v1025, %v1892
        %v1894 = vand.u32 %v1893, 4294901760
        %v1895 = vsub.f32 %v1893, %v1894
        %v1896 = vand.u32 %v1895, 4294901760
        %1897 = vmatpush.msra.mxu0 %v1896
        %v1898 = vand.u32 %v1023, 4294901760
        %v1899 = vsub.f32 %v1023, %v1898
        %v1900 = vand.u32 %v1899, 4294901760
        %v1901 = vsub.f32 %v1899, %v1900
        %v1902 = vand.u32 %v1901, 4294901760
        %1903 = vmatpush.msra.mxu0 %v1902
        %v1904 = vand.u32 %v1021, 4294901760
        %v1905 = vsub.f32 %v1021, %v1904
        %v1906 = vand.u32 %v1905, 4294901760
        %v1907 = vsub.f32 %v1905, %v1906
        %v1908 = vand.u32 %v1907, 4294901760
        %1909 = vmatpush.msra.mxu0 %v1908
        %v1910 = vand.u32 %v1019, 4294901760
        %v1911 = vsub.f32 %v1019, %v1910
        %v1912 = vand.u32 %v1911, 4294901760
        %v1913 = vsub.f32 %v1911, %v1912
        %v1914 = vand.u32 %v1913, 4294901760
        %1915 = vmatpush.msra.mxu0 %v1914
        %v1916 = vand.u32 %v1017, 4294901760
        %v1917 = vsub.f32 %v1017, %v1916
        %v1918 = vand.u32 %v1917, 4294901760
        %v1919 = vsub.f32 %v1917, %v1918
        %v1920 = vand.u32 %v1919, 4294901760
        %1921 = vmatpush.msra.mxu0 %v1920
        %v1922 = vand.u32 %v1015, 4294901760
        %v1923 = vsub.f32 %v1015, %v1922
        %v1924 = vand.u32 %v1923, 4294901760
        %v1925 = vsub.f32 %v1923, %v1924
        %v1926 = vand.u32 %v1925, 4294901760
        %1927 = vmatpush.msra.mxu0 %v1926
        %v1928 = vand.u32 %v1013, 4294901760
        %v1929 = vsub.f32 %v1013, %v1928
        %v1930 = vand.u32 %v1929, 4294901760
        %v1931 = vsub.f32 %v1929, %v1930
        %v1932 = vand.u32 %v1931, 4294901760
        %1933 = vmatpush.msra.mxu0 %v1932
        %v1934 = vand.u32 %v1011, 4294901760
        %v1935 = vsub.f32 %v1011, %v1934
        %v1936 = vand.u32 %v1935, 4294901760
        %v1937 = vsub.f32 %v1935, %v1936
        %v1938 = vand.u32 %v1937, 4294901760
        %1939 = vmatpush.msra.mxu0 %v1938
        %v1940 = vand.u32 %v1009, 4294901760
        %v1941 = vsub.f32 %v1009, %v1940
        %v1942 = vand.u32 %v1941, 4294901760
        %v1943 = vsub.f32 %v1941, %v1942
        %v1944 = vand.u32 %v1943, 4294901760
        %1945 = vmatpush.msra.mxu0 %v1944
        %v1946 = vand.u32 %v1007, 4294901760
        %v1947 = vsub.f32 %v1007, %v1946
        %v1948 = vand.u32 %v1947, 4294901760
        %v1949 = vsub.f32 %v1947, %v1948
        %v1950 = vand.u32 %v1949, 4294901760
        %1951 = vmatpush.msra.mxu0 %v1950
        %v1952 = vand.u32 %v1005, 4294901760
        %v1953 = vsub.f32 %v1005, %v1952
        %v1954 = vand.u32 %v1953, 4294901760
        %v1955 = vsub.f32 %v1953, %v1954
        %v1956 = vand.u32 %v1955, 4294901760
        %1957 = vmatpush.msra.mxu0 %v1956
        %v1958 = vand.u32 %v935, 4294901760
        %1959 = vmatmul.f32.gmra.mxu0 %v1958
        %v1960 = vpop.f32.mrf.mxu0
        %v1961 = vadd.f32 %v1852, %v1960
        %v1962 = vand.u32 %v939, 4294901760
        %1963 = vmatmul.f32.gmra.mxu0 %v1962
        %v1964 = vpop.f32.mrf.mxu0
        %v1965 = vadd.f32 %v1860, %v1964
        %1966 = vdwg.mxu0
        %v1967 = vand.u32 %v1035, 4294901760
        %v1968 = vsub.f32 %v1035, %v1967
        %1969 = vmatpush.msra.mxu0 %v1968
        %v1970 = vand.u32 %v1033, 4294901760
        %v1971 = vsub.f32 %v1033, %v1970
        %1972 = vmatpush.msra.mxu0 %v1971
        %v1973 = vand.u32 %v1031, 4294901760
        %v1974 = vsub.f32 %v1031, %v1973
        %1975 = vmatpush.msra.mxu0 %v1974
        %v1976 = vand.u32 %v1029, 4294901760
        %v1977 = vsub.f32 %v1029, %v1976
        %1978 = vmatpush.msra.mxu0 %v1977
        %v1979 = vand.u32 %v1027, 4294901760
        %v1980 = vsub.f32 %v1027, %v1979
        %1981 = vmatpush.msra.mxu0 %v1980
        %v1982 = vand.u32 %v1025, 4294901760
        %v1983 = vsub.f32 %v1025, %v1982
        %1984 = vmatpush.msra.mxu0 %v1983
        %v1985 = vand.u32 %v1023, 4294901760
        %v1986 = vsub.f32 %v1023, %v1985
        %1987 = vmatpush.msra.mxu0 %v1986
        %v1988 = vand.u32 %v1021, 4294901760
        %v1989 = vsub.f32 %v1021, %v1988
        %1990 = vmatpush.msra.mxu0 %v1989
        %v1991 = vand.u32 %v1019, 4294901760
        %v1992 = vsub.f32 %v1019, %v1991
        %1993 = vmatpush.msra.mxu0 %v1992
        %v1994 = vand.u32 %v1017, 4294901760
        %v1995 = vsub.f32 %v1017, %v1994
        %1996 = vmatpush.msra.mxu0 %v1995
        %v1997 = vand.u32 %v1015, 4294901760
        %v1998 = vsub.f32 %v1015, %v1997
        %1999 = vmatpush.msra.mxu0 %v1998
        %v2000 = vand.u32 %v1013, 4294901760
        %v2001 = vsub.f32 %v1013, %v2000
        %2002 = vmatpush.msra.mxu0 %v2001
        %v2003 = vand.u32 %v1011, 4294901760
        %v2004 = vsub.f32 %v1011, %v2003
        %2005 = vmatpush.msra.mxu0 %v2004
        %v2006 = vand.u32 %v1009, 4294901760
        %v2007 = vsub.f32 %v1009, %v2006
        %2008 = vmatpush.msra.mxu0 %v2007
        %v2009 = vand.u32 %v1007, 4294901760
        %v2010 = vsub.f32 %v1007, %v2009
        %2011 = vmatpush.msra.mxu0 %v2010
        %v2012 = vand.u32 %v1005, 4294901760
        %v2013 = vsub.f32 %v1005, %v2012
        %2014 = vmatpush.msra.mxu0 %v2013
        %v2015 = vand.u32 %v935, 4294901760
        %v2016 = vsub.f32 %v935, %v2015
        %2017 = vmatmul.f32.gmra.mxu0 %v2016
        %v2018 = vpop.f32.mrf.mxu0
        %v2019 = vadd.f32 %v1961, %v2018
        %v2020 = vand.u32 %v939, 4294901760
        %v2021 = vsub.f32 %v939, %v2020
        %2022 = vmatmul.f32.gmra.mxu0 %v2021
        %v2023 = vpop.f32.mrf.mxu0
        %v2024 = vadd.f32 %v1965, %v2023
        %2025 = vdwg.mxu0
        %v2026 = vand.u32 %v1035, 4294901760
        %2027 = vmatpush.msra.mxu0 %v2026
        %v2028 = vand.u32 %v1033, 4294901760
        %2029 = vmatpush.msra.mxu0 %v2028
        %v2030 = vand.u32 %v1031, 4294901760
        %2031 = vmatpush.msra.mxu0 %v2030
        %v2032 = vand.u32 %v1029, 4294901760
        %2033 = vmatpush.msra.mxu0 %v2032
        %v2034 = vand.u32 %v1027, 4294901760
        %2035 = vmatpush.msra.mxu0 %v2034
        %v2036 = vand.u32 %v1025, 4294901760
        %2037 = vmatpush.msra.mxu0 %v2036
        %v2038 = vand.u32 %v1023, 4294901760
        %2039 = vmatpush.msra.mxu0 %v2038
        %v2040 = vand.u32 %v1021, 4294901760
        %2041 = vmatpush.msra.mxu0 %v2040
        %v2042 = vand.u32 %v1019, 4294901760
        %2043 = vmatpush.msra.mxu0 %v2042
        %v2044 = vand.u32 %v1017, 4294901760
        %2045 = vmatpush.msra.mxu0 %v2044
        %v2046 = vand.u32 %v1015, 4294901760
        %2047 = vmatpush.msra.mxu0 %v2046
        %v2048 = vand.u32 %v1013, 4294901760
        %2049 = vmatpush.msra.mxu0 %v2048
        %v2050 = vand.u32 %v1011, 4294901760
        %2051 = vmatpush.msra.mxu0 %v2050
        %v2052 = vand.u32 %v1009, 4294901760
        %2053 = vmatpush.msra.mxu0 %v2052
        %v2054 = vand.u32 %v1007, 4294901760
        %2055 = vmatpush.msra.mxu0 %v2054
        %v2056 = vand.u32 %v1005, 4294901760
        %2057 = vmatpush.msra.mxu0 %v2056
        %v2058 = vand.u32 %v935, 4294901760
        %v2059 = vsub.f32 %v935, %v2058
        %v2060 = vand.u32 %v2059, 4294901760
        %2061 = vmatmul.f32.gmra.mxu0 %v2060
        %v2062 = vpop.f32.mrf.mxu0
        %v2063 = vadd.f32 %v2019, %v2062
        %v2064 = vand.u32 %v939, 4294901760
        %v2065 = vsub.f32 %v939, %v2064
        %v2066 = vand.u32 %v2065, 4294901760
        %2067 = vmatmul.f32.gmra.mxu0 %v2066
        %v2068 = vpop.f32.mrf.mxu0
        %v2069 = vadd.f32 %v2024, %v2068
        %2070 = vdwg.mxu0
        %v2071 = vand.u32 %v1035, 4294901760
        %v2072 = vsub.f32 %v1035, %v2071
        %v2073 = vand.u32 %v2072, 4294901760
        %2074 = vmatpush.msra.mxu0 %v2073
        %v2075 = vand.u32 %v1033, 4294901760
        %v2076 = vsub.f32 %v1033, %v2075
        %v2077 = vand.u32 %v2076, 4294901760
        %2078 = vmatpush.msra.mxu0 %v2077
        %v2079 = vand.u32 %v1031, 4294901760
        %v2080 = vsub.f32 %v1031, %v2079
        %v2081 = vand.u32 %v2080, 4294901760
        %2082 = vmatpush.msra.mxu0 %v2081
        %v2083 = vand.u32 %v1029, 4294901760
        %v2084 = vsub.f32 %v1029, %v2083
        %v2085 = vand.u32 %v2084, 4294901760
        %2086 = vmatpush.msra.mxu0 %v2085
        %v2087 = vand.u32 %v1027, 4294901760
        %v2088 = vsub.f32 %v1027, %v2087
        %v2089 = vand.u32 %v2088, 4294901760
        %2090 = vmatpush.msra.mxu0 %v2089
        %v2091 = vand.u32 %v1025, 4294901760
        %v2092 = vsub.f32 %v1025, %v2091
        %v2093 = vand.u32 %v2092, 4294901760
        %2094 = vmatpush.msra.mxu0 %v2093
        %v2095 = vand.u32 %v1023, 4294901760
        %v2096 = vsub.f32 %v1023, %v2095
        %v2097 = vand.u32 %v2096, 4294901760
        %2098 = vmatpush.msra.mxu0 %v2097
        %v2099 = vand.u32 %v1021, 4294901760
        %v2100 = vsub.f32 %v1021, %v2099
        %v2101 = vand.u32 %v2100, 4294901760
        %2102 = vmatpush.msra.mxu0 %v2101
        %v2103 = vand.u32 %v1019, 4294901760
        %v2104 = vsub.f32 %v1019, %v2103
        %v2105 = vand.u32 %v2104, 4294901760
        %2106 = vmatpush.msra.mxu0 %v2105
        %v2107 = vand.u32 %v1017, 4294901760
        %v2108 = vsub.f32 %v1017, %v2107
        %v2109 = vand.u32 %v2108, 4294901760
        %2110 = vmatpush.msra.mxu0 %v2109
        %v2111 = vand.u32 %v1015, 4294901760
        %v2112 = vsub.f32 %v1015, %v2111
        %v2113 = vand.u32 %v2112, 4294901760
        %2114 = vmatpush.msra.mxu0 %v2113
        %v2115 = vand.u32 %v1013, 4294901760
        %v2116 = vsub.f32 %v1013, %v2115
        %v2117 = vand.u32 %v2116, 4294901760
        %2118 = vmatpush.msra.mxu0 %v2117
        %v2119 = vand.u32 %v1011, 4294901760
        %v2120 = vsub.f32 %v1011, %v2119
        %v2121 = vand.u32 %v2120, 4294901760
        %2122 = vmatpush.msra.mxu0 %v2121
        %v2123 = vand.u32 %v1009, 4294901760
        %v2124 = vsub.f32 %v1009, %v2123
        %v2125 = vand.u32 %v2124, 4294901760
        %2126 = vmatpush.msra.mxu0 %v2125
        %v2127 = vand.u32 %v1007, 4294901760
        %v2128 = vsub.f32 %v1007, %v2127
        %v2129 = vand.u32 %v2128, 4294901760
        %2130 = vmatpush.msra.mxu0 %v2129
        %v2131 = vand.u32 %v1005, 4294901760
        %v2132 = vsub.f32 %v1005, %v2131
        %v2133 = vand.u32 %v2132, 4294901760
        %2134 = vmatpush.msra.mxu0 %v2133
        %v2135 = vand.u32 %v935, 4294901760
        %2136 = vmatmul.f32.gmra.mxu0 %v2135
        %v2137 = vpop.f32.mrf.mxu0
        %v2138 = vadd.f32 %v2063, %v2137
        %v2139 = vand.u32 %v939, 4294901760
        %2140 = vmatmul.f32.gmra.mxu0 %v2139
        %v2141 = vpop.f32.mrf.mxu0
        %v2142 = vadd.f32 %v2069, %v2141
        %2143 = vdwg.mxu0
        %v2144 = vand.u32 %v1035, 4294901760
        %2145 = vmatpush.msra.mxu0 %v2144
        %v2146 = vand.u32 %v1033, 4294901760
        %2147 = vmatpush.msra.mxu0 %v2146
        %v2148 = vand.u32 %v1031, 4294901760
        %2149 = vmatpush.msra.mxu0 %v2148
        %v2150 = vand.u32 %v1029, 4294901760
        %2151 = vmatpush.msra.mxu0 %v2150
        %v2152 = vand.u32 %v1027, 4294901760
        %2153 = vmatpush.msra.mxu0 %v2152
        %v2154 = vand.u32 %v1025, 4294901760
        %2155 = vmatpush.msra.mxu0 %v2154
        %v2156 = vand.u32 %v1023, 4294901760
        %2157 = vmatpush.msra.mxu0 %v2156
        %v2158 = vand.u32 %v1021, 4294901760
        %2159 = vmatpush.msra.mxu0 %v2158
        %v2160 = vand.u32 %v1019, 4294901760
        %2161 = vmatpush.msra.mxu0 %v2160
        %v2162 = vand.u32 %v1017, 4294901760
        %2163 = vmatpush.msra.mxu0 %v2162
        %v2164 = vand.u32 %v1015, 4294901760
        %2165 = vmatpush.msra.mxu0 %v2164
        %v2166 = vand.u32 %v1013, 4294901760
        %2167 = vmatpush.msra.mxu0 %v2166
        %v2168 = vand.u32 %v1011, 4294901760
        %2169 = vmatpush.msra.mxu0 %v2168
        %v2170 = vand.u32 %v1009, 4294901760
        %2171 = vmatpush.msra.mxu0 %v2170
        %v2172 = vand.u32 %v1007, 4294901760
        %2173 = vmatpush.msra.mxu0 %v2172
        %v2174 = vand.u32 %v1005, 4294901760
        %2175 = vmatpush.msra.mxu0 %v2174
        %v2176 = vand.u32 %v935, 4294901760
        %2177 = vmatmul.f32.gmra.mxu0 %v2176
        %v2178 = vpop.f32.mrf.mxu0
        %v2179 = vadd.f32 %v2138, %v2178
        %v2180 = vand.u32 %v939, 4294901760
        %2181 = vmatmul.f32.gmra.mxu0 %v2180
        %v2182 = vpop.f32.mrf.mxu0
        %v2183 = vadd.f32 %v2142, %v2182
        %2184 = vdwg.mxu0
        %v2185 = vand.u32 %v1067, 4294901760
        %2186 = vmatpush.msra.mxu0 %v2185
        %v2187 = vand.u32 %v1065, 4294901760
        %2188 = vmatpush.msra.mxu0 %v2187
        %v2189 = vand.u32 %v1063, 4294901760
        %2190 = vmatpush.msra.mxu0 %v2189
        %v2191 = vand.u32 %v1061, 4294901760
        %2192 = vmatpush.msra.mxu0 %v2191
        %v2193 = vand.u32 %v1059, 4294901760
        %2194 = vmatpush.msra.mxu0 %v2193
        %v2195 = vand.u32 %v1057, 4294901760
        %2196 = vmatpush.msra.mxu0 %v2195
        %v2197 = vand.u32 %v1055, 4294901760
        %2198 = vmatpush.msra.mxu0 %v2197
        %v2199 = vand.u32 %v1053, 4294901760
        %2200 = vmatpush.msra.mxu0 %v2199
        %v2201 = vand.u32 %v1051, 4294901760
        %2202 = vmatpush.msra.mxu0 %v2201
        %v2203 = vand.u32 %v1049, 4294901760
        %2204 = vmatpush.msra.mxu0 %v2203
        %v2205 = vand.u32 %v1047, 4294901760
        %2206 = vmatpush.msra.mxu0 %v2205
        %v2207 = vand.u32 %v1045, 4294901760
        %2208 = vmatpush.msra.mxu0 %v2207
        %v2209 = vand.u32 %v1043, 4294901760
        %2210 = vmatpush.msra.mxu0 %v2209
        %v2211 = vand.u32 %v1041, 4294901760
        %2212 = vmatpush.msra.mxu0 %v2211
        %v2213 = vand.u32 %v1039, 4294901760
        %2214 = vmatpush.msra.mxu0 %v2213
        %v2215 = vand.u32 %v1037, 4294901760
        %2216 = vmatpush.msra.mxu0 %v2215
        %v2217 = vand.u32 %v936, 4294901760
        %v2218 = vsub.f32 %v936, %v2217
        %v2219 = vand.u32 %v2218, 4294901760
        %v2220 = vsub.f32 %v2218, %v2219
        %v2221 = vand.u32 %v2220, 4294901760
        %2222 = vmatmul.f32.gmra.mxu0 %v2221
        %v2223 = vpop.f32.mrf.mxu0
        %v2224 = vadd.f32 %v2179, %v2223
        %v2225 = vand.u32 %v940, 4294901760
        %v2226 = vsub.f32 %v940, %v2225
        %v2227 = vand.u32 %v2226, 4294901760
        %v2228 = vsub.f32 %v2226, %v2227
        %v2229 = vand.u32 %v2228, 4294901760
        %2230 = vmatmul.f32.gmra.mxu0 %v2229
        %v2231 = vpop.f32.mrf.mxu0
        %v2232 = vadd.f32 %v2183, %v2231
        %2233 = vdwg.mxu0
        %v2234 = vand.u32 %v1067, 4294901760
        %v2235 = vsub.f32 %v1067, %v2234
        %v2236 = vand.u32 %v2235, 4294901760
        %v2237 = vsub.f32 %v2235, %v2236
        %v2238 = vand.u32 %v2237, 4294901760
        %2239 = vmatpush.msra.mxu0 %v2238
        %v2240 = vand.u32 %v1065, 4294901760
        %v2241 = vsub.f32 %v1065, %v2240
        %v2242 = vand.u32 %v2241, 4294901760
        %v2243 = vsub.f32 %v2241, %v2242
        %v2244 = vand.u32 %v2243, 4294901760
        %2245 = vmatpush.msra.mxu0 %v2244
        %v2246 = vand.u32 %v1063, 4294901760
        %v2247 = vsub.f32 %v1063, %v2246
        %v2248 = vand.u32 %v2247, 4294901760
        %v2249 = vsub.f32 %v2247, %v2248
        %v2250 = vand.u32 %v2249, 4294901760
        %2251 = vmatpush.msra.mxu0 %v2250
        %v2252 = vand.u32 %v1061, 4294901760
        %v2253 = vsub.f32 %v1061, %v2252
        %v2254 = vand.u32 %v2253, 4294901760
        %v2255 = vsub.f32 %v2253, %v2254
        %v2256 = vand.u32 %v2255, 4294901760
        %2257 = vmatpush.msra.mxu0 %v2256
        %v2258 = vand.u32 %v1059, 4294901760
        %v2259 = vsub.f32 %v1059, %v2258
        %v2260 = vand.u32 %v2259, 4294901760
        %v2261 = vsub.f32 %v2259, %v2260
        %v2262 = vand.u32 %v2261, 4294901760
        %2263 = vmatpush.msra.mxu0 %v2262
        %v2264 = vand.u32 %v1057, 4294901760
        %v2265 = vsub.f32 %v1057, %v2264
        %v2266 = vand.u32 %v2265, 4294901760
        %v2267 = vsub.f32 %v2265, %v2266
        %v2268 = vand.u32 %v2267, 4294901760
        %2269 = vmatpush.msra.mxu0 %v2268
        %v2270 = vand.u32 %v1055, 4294901760
        %v2271 = vsub.f32 %v1055, %v2270
        %v2272 = vand.u32 %v2271, 4294901760
        %v2273 = vsub.f32 %v2271, %v2272
        %v2274 = vand.u32 %v2273, 4294901760
        %2275 = vmatpush.msra.mxu0 %v2274
        %v2276 = vand.u32 %v1053, 4294901760
        %v2277 = vsub.f32 %v1053, %v2276
        %v2278 = vand.u32 %v2277, 4294901760
        %v2279 = vsub.f32 %v2277, %v2278
        %v2280 = vand.u32 %v2279, 4294901760
        %2281 = vmatpush.msra.mxu0 %v2280
        %v2282 = vand.u32 %v1051, 4294901760
        %v2283 = vsub.f32 %v1051, %v2282
        %v2284 = vand.u32 %v2283, 4294901760
        %v2285 = vsub.f32 %v2283, %v2284
        %v2286 = vand.u32 %v2285, 4294901760
        %2287 = vmatpush.msra.mxu0 %v2286
        %v2288 = vand.u32 %v1049, 4294901760
        %v2289 = vsub.f32 %v1049, %v2288
        %v2290 = vand.u32 %v2289, 4294901760
        %v2291 = vsub.f32 %v2289, %v2290
        %v2292 = vand.u32 %v2291, 4294901760
        %2293 = vmatpush.msra.mxu0 %v2292
        %v2294 = vand.u32 %v1047, 4294901760
        %v2295 = vsub.f32 %v1047, %v2294
        %v2296 = vand.u32 %v2295, 4294901760
        %v2297 = vsub.f32 %v2295, %v2296
        %v2298 = vand.u32 %v2297, 4294901760
        %2299 = vmatpush.msra.mxu0 %v2298
        %v2300 = vand.u32 %v1045, 4294901760
        %v2301 = vsub.f32 %v1045, %v2300
        %v2302 = vand.u32 %v2301, 4294901760
        %v2303 = vsub.f32 %v2301, %v2302
        %v2304 = vand.u32 %v2303, 4294901760
        %2305 = vmatpush.msra.mxu0 %v2304
        %v2306 = vand.u32 %v1043, 4294901760
        %v2307 = vsub.f32 %v1043, %v2306
        %v2308 = vand.u32 %v2307, 4294901760
        %v2309 = vsub.f32 %v2307, %v2308
        %v2310 = vand.u32 %v2309, 4294901760
        %2311 = vmatpush.msra.mxu0 %v2310
        %v2312 = vand.u32 %v1041, 4294901760
        %v2313 = vsub.f32 %v1041, %v2312
        %v2314 = vand.u32 %v2313, 4294901760
        %v2315 = vsub.f32 %v2313, %v2314
        %v2316 = vand.u32 %v2315, 4294901760
        %2317 = vmatpush.msra.mxu0 %v2316
        %v2318 = vand.u32 %v1039, 4294901760
        %v2319 = vsub.f32 %v1039, %v2318
        %v2320 = vand.u32 %v2319, 4294901760
        %v2321 = vsub.f32 %v2319, %v2320
        %v2322 = vand.u32 %v2321, 4294901760
        %2323 = vmatpush.msra.mxu0 %v2322
        %v2324 = vand.u32 %v1037, 4294901760
        %v2325 = vsub.f32 %v1037, %v2324
        %v2326 = vand.u32 %v2325, 4294901760
        %v2327 = vsub.f32 %v2325, %v2326
        %v2328 = vand.u32 %v2327, 4294901760
        %2329 = vmatpush.msra.mxu0 %v2328
        %v2330 = vand.u32 %v936, 4294901760
        %2331 = vmatmul.f32.gmra.mxu0 %v2330
        %v2332 = vpop.f32.mrf.mxu0
        %v2333 = vadd.f32 %v2224, %v2332
        %v2334 = vand.u32 %v940, 4294901760
        %2335 = vmatmul.f32.gmra.mxu0 %v2334
        %v2336 = vpop.f32.mrf.mxu0
        %v2337 = vadd.f32 %v2232, %v2336
        %2338 = vdwg.mxu0
        %v2339 = vand.u32 %v1067, 4294901760
        %v2340 = vsub.f32 %v1067, %v2339
        %2341 = vmatpush.msra.mxu0 %v2340
        %v2342 = vand.u32 %v1065, 4294901760
        %v2343 = vsub.f32 %v1065, %v2342
        %2344 = vmatpush.msra.mxu0 %v2343
        %v2345 = vand.u32 %v1063, 4294901760
        %v2346 = vsub.f32 %v1063, %v2345
        %2347 = vmatpush.msra.mxu0 %v2346
        %v2348 = vand.u32 %v1061, 4294901760
        %v2349 = vsub.f32 %v1061, %v2348
        %2350 = vmatpush.msra.mxu0 %v2349
        %v2351 = vand.u32 %v1059, 4294901760
        %v2352 = vsub.f32 %v1059, %v2351
        %2353 = vmatpush.msra.mxu0 %v2352
        %v2354 = vand.u32 %v1057, 4294901760
        %v2355 = vsub.f32 %v1057, %v2354
        %2356 = vmatpush.msra.mxu0 %v2355
        %v2357 = vand.u32 %v1055, 4294901760
        %v2358 = vsub.f32 %v1055, %v2357
        %2359 = vmatpush.msra.mxu0 %v2358
        %v2360 = vand.u32 %v1053, 4294901760
        %v2361 = vsub.f32 %v1053, %v2360
        %2362 = vmatpush.msra.mxu0 %v2361
        %v2363 = vand.u32 %v1051, 4294901760
        %v2364 = vsub.f32 %v1051, %v2363
        %2365 = vmatpush.msra.mxu0 %v2364
        %v2366 = vand.u32 %v1049, 4294901760
        %v2367 = vsub.f32 %v1049, %v2366
        %2368 = vmatpush.msra.mxu0 %v2367
        %v2369 = vand.u32 %v1047, 4294901760
        %v2370 = vsub.f32 %v1047, %v2369
        %2371 = vmatpush.msra.mxu0 %v2370
        %v2372 = vand.u32 %v1045, 4294901760
        %v2373 = vsub.f32 %v1045, %v2372
        %2374 = vmatpush.msra.mxu0 %v2373
        %v2375 = vand.u32 %v1043, 4294901760
        %v2376 = vsub.f32 %v1043, %v2375
        %2377 = vmatpush.msra.mxu0 %v2376
        %v2378 = vand.u32 %v1041, 4294901760
        %v2379 = vsub.f32 %v1041, %v2378
        %2380 = vmatpush.msra.mxu0 %v2379
        %v2381 = vand.u32 %v1039, 4294901760
        %v2382 = vsub.f32 %v1039, %v2381
        %2383 = vmatpush.msra.mxu0 %v2382
        %v2384 = vand.u32 %v1037, 4294901760
        %v2385 = vsub.f32 %v1037, %v2384
        %2386 = vmatpush.msra.mxu0 %v2385
        %v2387 = vand.u32 %v936, 4294901760
        %v2388 = vsub.f32 %v936, %v2387
        %2389 = vmatmul.f32.gmra.mxu0 %v2388
        %v2390 = vpop.f32.mrf.mxu0
        %v2391 = vadd.f32 %v2333, %v2390
        %v2392 = vand.u32 %v940, 4294901760
        %v2393 = vsub.f32 %v940, %v2392
        %2394 = vmatmul.f32.gmra.mxu0 %v2393
        %v2395 = vpop.f32.mrf.mxu0
        %v2396 = vadd.f32 %v2337, %v2395
        %2397 = vdwg.mxu0
        %v2398 = vand.u32 %v1067, 4294901760
        %2399 = vmatpush.msra.mxu0 %v2398
        %v2400 = vand.u32 %v1065, 4294901760
        %2401 = vmatpush.msra.mxu0 %v2400
        %v2402 = vand.u32 %v1063, 4294901760
        %2403 = vmatpush.msra.mxu0 %v2402
        %v2404 = vand.u32 %v1061, 4294901760
        %2405 = vmatpush.msra.mxu0 %v2404
        %v2406 = vand.u32 %v1059, 4294901760
        %2407 = vmatpush.msra.mxu0 %v2406
        %v2408 = vand.u32 %v1057, 4294901760
        %2409 = vmatpush.msra.mxu0 %v2408
        %v2410 = vand.u32 %v1055, 4294901760
        %2411 = vmatpush.msra.mxu0 %v2410
        %v2412 = vand.u32 %v1053, 4294901760
        %2413 = vmatpush.msra.mxu0 %v2412
        %v2414 = vand.u32 %v1051, 4294901760
        %2415 = vmatpush.msra.mxu0 %v2414
        %v2416 = vand.u32 %v1049, 4294901760
        %2417 = vmatpush.msra.mxu0 %v2416
        %v2418 = vand.u32 %v1047, 4294901760
        %2419 = vmatpush.msra.mxu0 %v2418
        %v2420 = vand.u32 %v1045, 4294901760
        %2421 = vmatpush.msra.mxu0 %v2420
        %v2422 = vand.u32 %v1043, 4294901760
        %2423 = vmatpush.msra.mxu0 %v2422
        %v2424 = vand.u32 %v1041, 4294901760
        %2425 = vmatpush.msra.mxu0 %v2424
        %v2426 = vand.u32 %v1039, 4294901760
        %2427 = vmatpush.msra.mxu0 %v2426
        %v2428 = vand.u32 %v1037, 4294901760
        %2429 = vmatpush.msra.mxu0 %v2428
        %v2430 = vand.u32 %v936, 4294901760
        %v2431 = vsub.f32 %v936, %v2430
        %v2432 = vand.u32 %v2431, 4294901760
        %2433 = vmatmul.f32.gmra.mxu0 %v2432
        %v2434 = vpop.f32.mrf.mxu0
        %v2435 = vadd.f32 %v2391, %v2434
        %v2436 = vand.u32 %v940, 4294901760
        %v2437 = vsub.f32 %v940, %v2436
        %v2438 = vand.u32 %v2437, 4294901760
        %2439 = vmatmul.f32.gmra.mxu0 %v2438
        %v2440 = vpop.f32.mrf.mxu0
        %v2441 = vadd.f32 %v2396, %v2440
        %2442 = vdwg.mxu0
        %v2443 = vand.u32 %v1067, 4294901760
        %v2444 = vsub.f32 %v1067, %v2443
        %v2445 = vand.u32 %v2444, 4294901760
        %2446 = vmatpush.msra.mxu0 %v2445
        %v2447 = vand.u32 %v1065, 4294901760
        %v2448 = vsub.f32 %v1065, %v2447
        %v2449 = vand.u32 %v2448, 4294901760
        %2450 = vmatpush.msra.mxu0 %v2449
        %v2451 = vand.u32 %v1063, 4294901760
        %v2452 = vsub.f32 %v1063, %v2451
        %v2453 = vand.u32 %v2452, 4294901760
        %2454 = vmatpush.msra.mxu0 %v2453
        %v2455 = vand.u32 %v1061, 4294901760
        %v2456 = vsub.f32 %v1061, %v2455
        %v2457 = vand.u32 %v2456, 4294901760
        %2458 = vmatpush.msra.mxu0 %v2457
        %v2459 = vand.u32 %v1059, 4294901760
        %v2460 = vsub.f32 %v1059, %v2459
        %v2461 = vand.u32 %v2460, 4294901760
        %2462 = vmatpush.msra.mxu0 %v2461
        %v2463 = vand.u32 %v1057, 4294901760
        %v2464 = vsub.f32 %v1057, %v2463
        %v2465 = vand.u32 %v2464, 4294901760
        %2466 = vmatpush.msra.mxu0 %v2465
        %v2467 = vand.u32 %v1055, 4294901760
        %v2468 = vsub.f32 %v1055, %v2467
        %v2469 = vand.u32 %v2468, 4294901760
        %2470 = vmatpush.msra.mxu0 %v2469
        %v2471 = vand.u32 %v1053, 4294901760
        %v2472 = vsub.f32 %v1053, %v2471
        %v2473 = vand.u32 %v2472, 4294901760
        %2474 = vmatpush.msra.mxu0 %v2473
        %v2475 = vand.u32 %v1051, 4294901760
        %v2476 = vsub.f32 %v1051, %v2475
        %v2477 = vand.u32 %v2476, 4294901760
        %2478 = vmatpush.msra.mxu0 %v2477
        %v2479 = vand.u32 %v1049, 4294901760
        %v2480 = vsub.f32 %v1049, %v2479
        %v2481 = vand.u32 %v2480, 4294901760
        %2482 = vmatpush.msra.mxu0 %v2481
        %v2483 = vand.u32 %v1047, 4294901760
        %v2484 = vsub.f32 %v1047, %v2483
        %v2485 = vand.u32 %v2484, 4294901760
        %2486 = vmatpush.msra.mxu0 %v2485
        %v2487 = vand.u32 %v1045, 4294901760
        %v2488 = vsub.f32 %v1045, %v2487
        %v2489 = vand.u32 %v2488, 4294901760
        %2490 = vmatpush.msra.mxu0 %v2489
        %v2491 = vand.u32 %v1043, 4294901760
        %v2492 = vsub.f32 %v1043, %v2491
        %v2493 = vand.u32 %v2492, 4294901760
        %2494 = vmatpush.msra.mxu0 %v2493
        %v2495 = vand.u32 %v1041, 4294901760
        %v2496 = vsub.f32 %v1041, %v2495
        %v2497 = vand.u32 %v2496, 4294901760
        %2498 = vmatpush.msra.mxu0 %v2497
        %v2499 = vand.u32 %v1039, 4294901760
        %v2500 = vsub.f32 %v1039, %v2499
        %v2501 = vand.u32 %v2500, 4294901760
        %2502 = vmatpush.msra.mxu0 %v2501
        %v2503 = vand.u32 %v1037, 4294901760
        %v2504 = vsub.f32 %v1037, %v2503
        %v2505 = vand.u32 %v2504, 4294901760
        %2506 = vmatpush.msra.mxu0 %v2505
        %v2507 = vand.u32 %v936, 4294901760
        %2508 = vmatmul.f32.gmra.mxu0 %v2507
        %v2509 = vpop.f32.mrf.mxu0
        %v2510 = vadd.f32 %v2435, %v2509
        %v2511 = vand.u32 %v940, 4294901760
        %2512 = vmatmul.f32.gmra.mxu0 %v2511
        %v2513 = vpop.f32.mrf.mxu0
        %v2514 = vadd.f32 %v2441, %v2513
        %2515 = vdwg.mxu0
        %v2516 = vand.u32 %v1067, 4294901760
        %2517 = vmatpush.msra.mxu0 %v2516
        %v2518 = vand.u32 %v1065, 4294901760
        %2519 = vmatpush.msra.mxu0 %v2518
        %v2520 = vand.u32 %v1063, 4294901760
        %2521 = vmatpush.msra.mxu0 %v2520
        %v2522 = vand.u32 %v1061, 4294901760
        %2523 = vmatpush.msra.mxu0 %v2522
        %v2524 = vand.u32 %v1059, 4294901760
        %2525 = vmatpush.msra.mxu0 %v2524
        %v2526 = vand.u32 %v1057, 4294901760
        %2527 = vmatpush.msra.mxu0 %v2526
        %v2528 = vand.u32 %v1055, 4294901760
        %2529 = vmatpush.msra.mxu0 %v2528
        %v2530 = vand.u32 %v1053, 4294901760
        %2531 = vmatpush.msra.mxu0 %v2530
        %v2532 = vand.u32 %v1051, 4294901760
        %2533 = vmatpush.msra.mxu0 %v2532
        %v2534 = vand.u32 %v1049, 4294901760
        %2535 = vmatpush.msra.mxu0 %v2534
        %v2536 = vand.u32 %v1047, 4294901760
        %2537 = vmatpush.msra.mxu0 %v2536
        %v2538 = vand.u32 %v1045, 4294901760
        %2539 = vmatpush.msra.mxu0 %v2538
        %v2540 = vand.u32 %v1043, 4294901760
        %2541 = vmatpush.msra.mxu0 %v2540
        %v2542 = vand.u32 %v1041, 4294901760
        %2543 = vmatpush.msra.mxu0 %v2542
        %v2544 = vand.u32 %v1039, 4294901760
        %2545 = vmatpush.msra.mxu0 %v2544
        %v2546 = vand.u32 %v1037, 4294901760
        %2547 = vmatpush.msra.mxu0 %v2546
        %v2548 = vand.u32 %v936, 4294901760
        %2549 = vmatmul.f32.gmra.mxu0 %v2548
        %v2550 = vpop.f32.mrf.mxu0
        %v2551 = vadd.f32 %v2510, %v2550
        %v2552 = vand.u32 %v940, 4294901760
        %2553 = vmatmul.f32.gmra.mxu0 %v2552
        %v2554 = vpop.f32.mrf.mxu0
        %v2555 = vadd.f32 %v2514, %v2554
        %2556 = vdwg.mxu0
        %v2557 = vand.u32 %v972, 4294901760
        %2558 = vmatpush.msra.mxu0 %v2557
        %v2559 = vand.u32 %v970, 4294901760
        %2560 = vmatpush.msra.mxu0 %v2559
        %v2561 = vand.u32 %v968, 4294901760
        %2562 = vmatpush.msra.mxu0 %v2561
        %v2563 = vand.u32 %v966, 4294901760
        %2564 = vmatpush.msra.mxu0 %v2563
        %v2565 = vand.u32 %v964, 4294901760
        %2566 = vmatpush.msra.mxu0 %v2565
        %v2567 = vand.u32 %v962, 4294901760
        %2568 = vmatpush.msra.mxu0 %v2567
        %v2569 = vand.u32 %v960, 4294901760
        %2570 = vmatpush.msra.mxu0 %v2569
        %v2571 = vand.u32 %v958, 4294901760
        %2572 = vmatpush.msra.mxu0 %v2571
        %v2573 = vand.u32 %v956, 4294901760
        %2574 = vmatpush.msra.mxu0 %v2573
        %v2575 = vand.u32 %v954, 4294901760
        %2576 = vmatpush.msra.mxu0 %v2575
        %v2577 = vand.u32 %v952, 4294901760
        %2578 = vmatpush.msra.mxu0 %v2577
        %v2579 = vand.u32 %v950, 4294901760
        %2580 = vmatpush.msra.mxu0 %v2579
        %v2581 = vand.u32 %v948, 4294901760
        %2582 = vmatpush.msra.mxu0 %v2581
        %v2583 = vand.u32 %v946, 4294901760
        %2584 = vmatpush.msra.mxu0 %v2583
        %v2585 = vand.u32 %v944, 4294901760
        %2586 = vmatpush.msra.mxu0 %v2585
        %v2587 = vand.u32 %v942, 4294901760
        %2588 = vmatpush.msra.mxu0 %v2587
        %v2589 = vand.u32 %v933, 4294901760
        %v2590 = vsub.f32 %v933, %v2589
        %v2591 = vand.u32 %v2590, 4294901760
        %v2592 = vsub.f32 %v2590, %v2591
        %v2593 = vand.u32 %v2592, 4294901760
        %2594 = vmatmul.f32.gmra.mxu0 %v2593
        %v2595 = vpop.f32.mrf.mxu0
        %v2596 = vadd.f32 0.0, %v2595
        %v2597 = vand.u32 %v937, 4294901760
        %v2598 = vsub.f32 %v937, %v2597
        %v2599 = vand.u32 %v2598, 4294901760
        %v2600 = vsub.f32 %v2598, %v2599
        %v2601 = vand.u32 %v2600, 4294901760
        %2602 = vmatmul.f32.gmra.mxu0 %v2601
        %v2603 = vpop.f32.mrf.mxu0
        %v2604 = vadd.f32 0.0, %v2603
        %2605 = vdwg.mxu0
        %v2606 = vand.u32 %v972, 4294901760
        %v2607 = vsub.f32 %v972, %v2606
        %v2608 = vand.u32 %v2607, 4294901760
        %v2609 = vsub.f32 %v2607, %v2608
        %v2610 = vand.u32 %v2609, 4294901760
        %2611 = vmatpush.msra.mxu0 %v2610
        %v2612 = vand.u32 %v970, 4294901760
        %v2613 = vsub.f32 %v970, %v2612
        %v2614 = vand.u32 %v2613, 4294901760
        %v2615 = vsub.f32 %v2613, %v2614
        %v2616 = vand.u32 %v2615, 4294901760
        %2617 = vmatpush.msra.mxu0 %v2616
        %v2618 = vand.u32 %v968, 4294901760
        %v2619 = vsub.f32 %v968, %v2618
        %v2620 = vand.u32 %v2619, 4294901760
        %v2621 = vsub.f32 %v2619, %v2620
        %v2622 = vand.u32 %v2621, 4294901760
        %2623 = vmatpush.msra.mxu0 %v2622
        %v2624 = vand.u32 %v966, 4294901760
        %v2625 = vsub.f32 %v966, %v2624
        %v2626 = vand.u32 %v2625, 4294901760
        %v2627 = vsub.f32 %v2625, %v2626
        %v2628 = vand.u32 %v2627, 4294901760
        %2629 = vmatpush.msra.mxu0 %v2628
        %v2630 = vand.u32 %v964, 4294901760
        %v2631 = vsub.f32 %v964, %v2630
        %v2632 = vand.u32 %v2631, 4294901760
        %v2633 = vsub.f32 %v2631, %v2632
        %v2634 = vand.u32 %v2633, 4294901760
        %2635 = vmatpush.msra.mxu0 %v2634
        %v2636 = vand.u32 %v962, 4294901760
        %v2637 = vsub.f32 %v962, %v2636
        %v2638 = vand.u32 %v2637, 4294901760
        %v2639 = vsub.f32 %v2637, %v2638
        %v2640 = vand.u32 %v2639, 4294901760
        %2641 = vmatpush.msra.mxu0 %v2640
        %v2642 = vand.u32 %v960, 4294901760
        %v2643 = vsub.f32 %v960, %v2642
        %v2644 = vand.u32 %v2643, 4294901760
        %v2645 = vsub.f32 %v2643, %v2644
        %v2646 = vand.u32 %v2645, 4294901760
        %2647 = vmatpush.msra.mxu0 %v2646
        %v2648 = vand.u32 %v958, 4294901760
        %v2649 = vsub.f32 %v958, %v2648
        %v2650 = vand.u32 %v2649, 4294901760
        %v2651 = vsub.f32 %v2649, %v2650
        %v2652 = vand.u32 %v2651, 4294901760
        %2653 = vmatpush.msra.mxu0 %v2652
        %v2654 = vand.u32 %v956, 4294901760
        %v2655 = vsub.f32 %v956, %v2654
        %v2656 = vand.u32 %v2655, 4294901760
        %v2657 = vsub.f32 %v2655, %v2656
        %v2658 = vand.u32 %v2657, 4294901760
        %2659 = vmatpush.msra.mxu0 %v2658
        %v2660 = vand.u32 %v954, 4294901760
        %v2661 = vsub.f32 %v954, %v2660
        %v2662 = vand.u32 %v2661, 4294901760
        %v2663 = vsub.f32 %v2661, %v2662
        %v2664 = vand.u32 %v2663, 4294901760
        %2665 = vmatpush.msra.mxu0 %v2664
        %v2666 = vand.u32 %v952, 4294901760
        %v2667 = vsub.f32 %v952, %v2666
        %v2668 = vand.u32 %v2667, 4294901760
        %v2669 = vsub.f32 %v2667, %v2668
        %v2670 = vand.u32 %v2669, 4294901760
        %2671 = vmatpush.msra.mxu0 %v2670
        %v2672 = vand.u32 %v950, 4294901760
        %v2673 = vsub.f32 %v950, %v2672
        %v2674 = vand.u32 %v2673, 4294901760
        %v2675 = vsub.f32 %v2673, %v2674
        %v2676 = vand.u32 %v2675, 4294901760
        %2677 = vmatpush.msra.mxu0 %v2676
        %v2678 = vand.u32 %v948, 4294901760
        %v2679 = vsub.f32 %v948, %v2678
        %v2680 = vand.u32 %v2679, 4294901760
        %v2681 = vsub.f32 %v2679, %v2680
        %v2682 = vand.u32 %v2681, 4294901760
        %2683 = vmatpush.msra.mxu0 %v2682
        %v2684 = vand.u32 %v946, 4294901760
        %v2685 = vsub.f32 %v946, %v2684
        %v2686 = vand.u32 %v2685, 4294901760
        %v2687 = vsub.f32 %v2685, %v2686
        %v2688 = vand.u32 %v2687, 4294901760
        %2689 = vmatpush.msra.mxu0 %v2688
        %v2690 = vand.u32 %v944, 4294901760
        %v2691 = vsub.f32 %v944, %v2690
        %v2692 = vand.u32 %v2691, 4294901760
        %v2693 = vsub.f32 %v2691, %v2692
        %v2694 = vand.u32 %v2693, 4294901760
        %2695 = vmatpush.msra.mxu0 %v2694
        %v2696 = vand.u32 %v942, 4294901760
        %v2697 = vsub.f32 %v942, %v2696
        %v2698 = vand.u32 %v2697, 4294901760
        %v2699 = vsub.f32 %v2697, %v2698
        %v2700 = vand.u32 %v2699, 4294901760
        %2701 = vmatpush.msra.mxu0 %v2700
        %v2702 = vand.u32 %v933, 4294901760
        %2703 = vmatmul.f32.gmra.mxu0 %v2702
        %v2704 = vpop.f32.mrf.mxu0
        %v2705 = vadd.f32 %v2596, %v2704
        %v2706 = vand.u32 %v937, 4294901760
        %2707 = vmatmul.f32.gmra.mxu0 %v2706
        %v2708 = vpop.f32.mrf.mxu0
        %v2709 = vadd.f32 %v2604, %v2708
        %2710 = vdwg.mxu0
        %v2711 = vand.u32 %v972, 4294901760
        %v2712 = vsub.f32 %v972, %v2711
        %2713 = vmatpush.msra.mxu0 %v2712
        %v2714 = vand.u32 %v970, 4294901760
        %v2715 = vsub.f32 %v970, %v2714
        %2716 = vmatpush.msra.mxu0 %v2715
        %v2717 = vand.u32 %v968, 4294901760
        %v2718 = vsub.f32 %v968, %v2717
        %2719 = vmatpush.msra.mxu0 %v2718
        %v2720 = vand.u32 %v966, 4294901760
        %v2721 = vsub.f32 %v966, %v2720
        %2722 = vmatpush.msra.mxu0 %v2721
        %v2723 = vand.u32 %v964, 4294901760
        %v2724 = vsub.f32 %v964, %v2723
        %2725 = vmatpush.msra.mxu0 %v2724
        %v2726 = vand.u32 %v962, 4294901760
        %v2727 = vsub.f32 %v962, %v2726
        %2728 = vmatpush.msra.mxu0 %v2727
        %v2729 = vand.u32 %v960, 4294901760
        %v2730 = vsub.f32 %v960, %v2729
        %2731 = vmatpush.msra.mxu0 %v2730
        %v2732 = vand.u32 %v958, 4294901760
        %v2733 = vsub.f32 %v958, %v2732
        %2734 = vmatpush.msra.mxu0 %v2733
        %v2735 = vand.u32 %v956, 4294901760
        %v2736 = vsub.f32 %v956, %v2735
        %2737 = vmatpush.msra.mxu0 %v2736
        %v2738 = vand.u32 %v954, 4294901760
        %v2739 = vsub.f32 %v954, %v2738
        %2740 = vmatpush.msra.mxu0 %v2739
        %v2741 = vand.u32 %v952, 4294901760
        %v2742 = vsub.f32 %v952, %v2741
        %2743 = vmatpush.msra.mxu0 %v2742
        %v2744 = vand.u32 %v950, 4294901760
        %v2745 = vsub.f32 %v950, %v2744
        %2746 = vmatpush.msra.mxu0 %v2745
        %v2747 = vand.u32 %v948, 4294901760
        %v2748 = vsub.f32 %v948, %v2747
        %2749 = vmatpush.msra.mxu0 %v2748
        %v2750 = vand.u32 %v946, 4294901760
        %v2751 = vsub.f32 %v946, %v2750
        %2752 = vmatpush.msra.mxu0 %v2751
        %v2753 = vand.u32 %v944, 4294901760
        %v2754 = vsub.f32 %v944, %v2753
        %2755 = vmatpush.msra.mxu0 %v2754
        %v2756 = vand.u32 %v942, 4294901760
        %v2757 = vsub.f32 %v942, %v2756
        %2758 = vmatpush.msra.mxu0 %v2757
        %v2759 = vand.u32 %v933, 4294901760
        %v2760 = vsub.f32 %v933, %v2759
        %2761 = vmatmul.f32.gmra.mxu0 %v2760
        %v2762 = vpop.f32.mrf.mxu0
        %v2763 = vadd.f32 %v2705, %v2762
        %v2764 = vand.u32 %v937, 4294901760
        %v2765 = vsub.f32 %v937, %v2764
        %2766 = vmatmul.f32.gmra.mxu0 %v2765
        %v2767 = vpop.f32.mrf.mxu0
        %v2768 = vadd.f32 %v2709, %v2767
        %2769 = vdwg.mxu0
        %v2770 = vand.u32 %v972, 4294901760
        %2771 = vmatpush.msra.mxu0 %v2770
        %v2772 = vand.u32 %v970, 4294901760
        %2773 = vmatpush.msra.mxu0 %v2772
        %v2774 = vand.u32 %v968, 4294901760
        %2775 = vmatpush.msra.mxu0 %v2774
        %v2776 = vand.u32 %v966, 4294901760
        %2777 = vmatpush.msra.mxu0 %v2776
        %v2778 = vand.u32 %v964, 4294901760
        %2779 = vmatpush.msra.mxu0 %v2778
        %v2780 = vand.u32 %v962, 4294901760
        %2781 = vmatpush.msra.mxu0 %v2780
        %v2782 = vand.u32 %v960, 4294901760
        %2783 = vmatpush.msra.mxu0 %v2782
        %v2784 = vand.u32 %v958, 4294901760
        %2785 = vmatpush.msra.mxu0 %v2784
        %v2786 = vand.u32 %v956, 4294901760
        %2787 = vmatpush.msra.mxu0 %v2786
        %v2788 = vand.u32 %v954, 4294901760
        %2789 = vmatpush.msra.mxu0 %v2788
        %v2790 = vand.u32 %v952, 4294901760
        %2791 = vmatpush.msra.mxu0 %v2790
        %v2792 = vand.u32 %v950, 4294901760
        %2793 = vmatpush.msra.mxu0 %v2792
        %v2794 = vand.u32 %v948, 4294901760
        %2795 = vmatpush.msra.mxu0 %v2794
        %v2796 = vand.u32 %v946, 4294901760
        %2797 = vmatpush.msra.mxu0 %v2796
        %v2798 = vand.u32 %v944, 4294901760
        %2799 = vmatpush.msra.mxu0 %v2798
        %v2800 = vand.u32 %v942, 4294901760
        %2801 = vmatpush.msra.mxu0 %v2800
        %v2802 = vand.u32 %v933, 4294901760
        %v2803 = vsub.f32 %v933, %v2802
        %v2804 = vand.u32 %v2803, 4294901760
        %2805 = vmatmul.f32.gmra.mxu0 %v2804
        %v2806 = vpop.f32.mrf.mxu0
        %v2807 = vadd.f32 %v2763, %v2806
        %v2808 = vand.u32 %v937, 4294901760
        %v2809 = vsub.f32 %v937, %v2808
        %v2810 = vand.u32 %v2809, 4294901760
        %2811 = vmatmul.f32.gmra.mxu0 %v2810
        %v2812 = vpop.f32.mrf.mxu0
        %v2813 = vadd.f32 %v2768, %v2812
        %2814 = vdwg.mxu0
        %v2815 = vand.u32 %v972, 4294901760
        %v2816 = vsub.f32 %v972, %v2815
        %v2817 = vand.u32 %v2816, 4294901760
        %2818 = vmatpush.msra.mxu0 %v2817
        %v2819 = vand.u32 %v970, 4294901760
        %v2820 = vsub.f32 %v970, %v2819
        %v2821 = vand.u32 %v2820, 4294901760
        %2822 = vmatpush.msra.mxu0 %v2821
        %v2823 = vand.u32 %v968, 4294901760
        %v2824 = vsub.f32 %v968, %v2823
        %v2825 = vand.u32 %v2824, 4294901760
        %2826 = vmatpush.msra.mxu0 %v2825
        %v2827 = vand.u32 %v966, 4294901760
        %v2828 = vsub.f32 %v966, %v2827
        %v2829 = vand.u32 %v2828, 4294901760
        %2830 = vmatpush.msra.mxu0 %v2829
        %v2831 = vand.u32 %v964, 4294901760
        %v2832 = vsub.f32 %v964, %v2831
        %v2833 = vand.u32 %v2832, 4294901760
        %2834 = vmatpush.msra.mxu0 %v2833
        %v2835 = vand.u32 %v962, 4294901760
        %v2836 = vsub.f32 %v962, %v2835
        %v2837 = vand.u32 %v2836, 4294901760
        %2838 = vmatpush.msra.mxu0 %v2837
        %v2839 = vand.u32 %v960, 4294901760
        %v2840 = vsub.f32 %v960, %v2839
        %v2841 = vand.u32 %v2840, 4294901760
        %2842 = vmatpush.msra.mxu0 %v2841
        %v2843 = vand.u32 %v958, 4294901760
        %v2844 = vsub.f32 %v958, %v2843
        %v2845 = vand.u32 %v2844, 4294901760
        %2846 = vmatpush.msra.mxu0 %v2845
        %v2847 = vand.u32 %v956, 4294901760
        %v2848 = vsub.f32 %v956, %v2847
        %v2849 = vand.u32 %v2848, 4294901760
        %2850 = vmatpush.msra.mxu0 %v2849
        %v2851 = vand.u32 %v954, 4294901760
        %v2852 = vsub.f32 %v954, %v2851
        %v2853 = vand.u32 %v2852, 4294901760
        %2854 = vmatpush.msra.mxu0 %v2853
        %v2855 = vand.u32 %v952, 4294901760
        %v2856 = vsub.f32 %v952, %v2855
        %v2857 = vand.u32 %v2856, 4294901760
        %2858 = vmatpush.msra.mxu0 %v2857
        %v2859 = vand.u32 %v950, 4294901760
        %v2860 = vsub.f32 %v950, %v2859
        %v2861 = vand.u32 %v2860, 4294901760
        %2862 = vmatpush.msra.mxu0 %v2861
        %v2863 = vand.u32 %v948, 4294901760
        %v2864 = vsub.f32 %v948, %v2863
        %v2865 = vand.u32 %v2864, 4294901760
        %2866 = vmatpush.msra.mxu0 %v2865
        %v2867 = vand.u32 %v946, 4294901760
        %v2868 = vsub.f32 %v946, %v2867
        %v2869 = vand.u32 %v2868, 4294901760
        %2870 = vmatpush.msra.mxu0 %v2869
        %v2871 = vand.u32 %v944, 4294901760
        %v2872 = vsub.f32 %v944, %v2871
        %v2873 = vand.u32 %v2872, 4294901760
        %2874 = vmatpush.msra.mxu0 %v2873
        %v2875 = vand.u32 %v942, 4294901760
        %v2876 = vsub.f32 %v942, %v2875
        %v2877 = vand.u32 %v2876, 4294901760
        %2878 = vmatpush.msra.mxu0 %v2877
        %v2879 = vand.u32 %v933, 4294901760
        %2880 = vmatmul.f32.gmra.mxu0 %v2879
        %v2881 = vpop.f32.mrf.mxu0
        %v2882 = vadd.f32 %v2807, %v2881
        %v2883 = vand.u32 %v937, 4294901760
        %2884 = vmatmul.f32.gmra.mxu0 %v2883
        %v2885 = vpop.f32.mrf.mxu0
        %v2886 = vadd.f32 %v2813, %v2885
        %2887 = vdwg.mxu0
        %v2888 = vand.u32 %v972, 4294901760
        %2889 = vmatpush.msra.mxu0 %v2888
        %v2890 = vand.u32 %v970, 4294901760
        %2891 = vmatpush.msra.mxu0 %v2890
        %v2892 = vand.u32 %v968, 4294901760
        %2893 = vmatpush.msra.mxu0 %v2892
        %v2894 = vand.u32 %v966, 4294901760
        %2895 = vmatpush.msra.mxu0 %v2894
        %v2896 = vand.u32 %v964, 4294901760
        %2897 = vmatpush.msra.mxu0 %v2896
        %v2898 = vand.u32 %v962, 4294901760
        %2899 = vmatpush.msra.mxu0 %v2898
        %v2900 = vand.u32 %v960, 4294901760
        %2901 = vmatpush.msra.mxu0 %v2900
        %v2902 = vand.u32 %v958, 4294901760
        %2903 = vmatpush.msra.mxu0 %v2902
        %v2904 = vand.u32 %v956, 4294901760
        %2905 = vmatpush.msra.mxu0 %v2904
        %v2906 = vand.u32 %v954, 4294901760
        %2907 = vmatpush.msra.mxu0 %v2906
        %v2908 = vand.u32 %v952, 4294901760
        %2909 = vmatpush.msra.mxu0 %v2908
        %v2910 = vand.u32 %v950, 4294901760
        %2911 = vmatpush.msra.mxu0 %v2910
        %v2912 = vand.u32 %v948, 4294901760
        %2913 = vmatpush.msra.mxu0 %v2912
        %v2914 = vand.u32 %v946, 4294901760
        %2915 = vmatpush.msra.mxu0 %v2914
        %v2916 = vand.u32 %v944, 4294901760
        %2917 = vmatpush.msra.mxu0 %v2916
        %v2918 = vand.u32 %v942, 4294901760
        %2919 = vmatpush.msra.mxu0 %v2918
        %v2920 = vand.u32 %v933, 4294901760
        %2921 = vmatmul.f32.gmra.mxu0 %v2920
        %v2922 = vpop.f32.mrf.mxu0
        %v2923 = vadd.f32 %v2882, %v2922
        %v2924 = vand.u32 %v937, 4294901760
        %2925 = vmatmul.f32.gmra.mxu0 %v2924
        %v2926 = vpop.f32.mrf.mxu0
        %v2927 = vadd.f32 %v2886, %v2926
        %2928 = vdwg.mxu0
        %v2929 = vand.u32 %v1004, 4294901760
        %2930 = vmatpush.msra.mxu0 %v2929
        %v2931 = vand.u32 %v1002, 4294901760
        %2932 = vmatpush.msra.mxu0 %v2931
        %v2933 = vand.u32 %v1000, 4294901760
        %2934 = vmatpush.msra.mxu0 %v2933
        %v2935 = vand.u32 %v998, 4294901760
        %2936 = vmatpush.msra.mxu0 %v2935
        %v2937 = vand.u32 %v996, 4294901760
        %2938 = vmatpush.msra.mxu0 %v2937
        %v2939 = vand.u32 %v994, 4294901760
        %2940 = vmatpush.msra.mxu0 %v2939
        %v2941 = vand.u32 %v992, 4294901760
        %2942 = vmatpush.msra.mxu0 %v2941
        %v2943 = vand.u32 %v990, 4294901760
        %2944 = vmatpush.msra.mxu0 %v2943
        %v2945 = vand.u32 %v988, 4294901760
        %2946 = vmatpush.msra.mxu0 %v2945
        %v2947 = vand.u32 %v986, 4294901760
        %2948 = vmatpush.msra.mxu0 %v2947
        %v2949 = vand.u32 %v984, 4294901760
        %2950 = vmatpush.msra.mxu0 %v2949
        %v2951 = vand.u32 %v982, 4294901760
        %2952 = vmatpush.msra.mxu0 %v2951
        %v2953 = vand.u32 %v980, 4294901760
        %2954 = vmatpush.msra.mxu0 %v2953
        %v2955 = vand.u32 %v978, 4294901760
        %2956 = vmatpush.msra.mxu0 %v2955
        %v2957 = vand.u32 %v976, 4294901760
        %2958 = vmatpush.msra.mxu0 %v2957
        %v2959 = vand.u32 %v974, 4294901760
        %2960 = vmatpush.msra.mxu0 %v2959
        %v2961 = vand.u32 %v934, 4294901760
        %v2962 = vsub.f32 %v934, %v2961
        %v2963 = vand.u32 %v2962, 4294901760
        %v2964 = vsub.f32 %v2962, %v2963
        %v2965 = vand.u32 %v2964, 4294901760
        %2966 = vmatmul.f32.gmra.mxu0 %v2965
        %v2967 = vpop.f32.mrf.mxu0
        %v2968 = vadd.f32 %v2923, %v2967
        %v2969 = vand.u32 %v938, 4294901760
        %v2970 = vsub.f32 %v938, %v2969
        %v2971 = vand.u32 %v2970, 4294901760
        %v2972 = vsub.f32 %v2970, %v2971
        %v2973 = vand.u32 %v2972, 4294901760
        %2974 = vmatmul.f32.gmra.mxu0 %v2973
        %v2975 = vpop.f32.mrf.mxu0
        %v2976 = vadd.f32 %v2927, %v2975
        %2977 = vdwg.mxu0
        %v2978 = vand.u32 %v1004, 4294901760
        %v2979 = vsub.f32 %v1004, %v2978
        %v2980 = vand.u32 %v2979, 4294901760
        %v2981 = vsub.f32 %v2979, %v2980
        %v2982 = vand.u32 %v2981, 4294901760
        %2983 = vmatpush.msra.mxu0 %v2982
        %v2984 = vand.u32 %v1002, 4294901760
        %v2985 = vsub.f32 %v1002, %v2984
        %v2986 = vand.u32 %v2985, 4294901760
        %v2987 = vsub.f32 %v2985, %v2986
        %v2988 = vand.u32 %v2987, 4294901760
        %2989 = vmatpush.msra.mxu0 %v2988
        %v2990 = vand.u32 %v1000, 4294901760
        %v2991 = vsub.f32 %v1000, %v2990
        %v2992 = vand.u32 %v2991, 4294901760
        %v2993 = vsub.f32 %v2991, %v2992
        %v2994 = vand.u32 %v2993, 4294901760
        %2995 = vmatpush.msra.mxu0 %v2994
        %v2996 = vand.u32 %v998, 4294901760
        %v2997 = vsub.f32 %v998, %v2996
        %v2998 = vand.u32 %v2997, 4294901760
        %v2999 = vsub.f32 %v2997, %v2998
        %v3000 = vand.u32 %v2999, 4294901760
        %3001 = vmatpush.msra.mxu0 %v3000
        %v3002 = vand.u32 %v996, 4294901760
        %v3003 = vsub.f32 %v996, %v3002
        %v3004 = vand.u32 %v3003, 4294901760
        %v3005 = vsub.f32 %v3003, %v3004
        %v3006 = vand.u32 %v3005, 4294901760
        %3007 = vmatpush.msra.mxu0 %v3006
        %v3008 = vand.u32 %v994, 4294901760
        %v3009 = vsub.f32 %v994, %v3008
        %v3010 = vand.u32 %v3009, 4294901760
        %v3011 = vsub.f32 %v3009, %v3010
        %v3012 = vand.u32 %v3011, 4294901760
        %3013 = vmatpush.msra.mxu0 %v3012
        %v3014 = vand.u32 %v992, 4294901760
        %v3015 = vsub.f32 %v992, %v3014
        %v3016 = vand.u32 %v3015, 4294901760
        %v3017 = vsub.f32 %v3015, %v3016
        %v3018 = vand.u32 %v3017, 4294901760
        %3019 = vmatpush.msra.mxu0 %v3018
        %v3020 = vand.u32 %v990, 4294901760
        %v3021 = vsub.f32 %v990, %v3020
        %v3022 = vand.u32 %v3021, 4294901760
        %v3023 = vsub.f32 %v3021, %v3022
        %v3024 = vand.u32 %v3023, 4294901760
        %3025 = vmatpush.msra.mxu0 %v3024
        %v3026 = vand.u32 %v988, 4294901760
        %v3027 = vsub.f32 %v988, %v3026
        %v3028 = vand.u32 %v3027, 4294901760
        %v3029 = vsub.f32 %v3027, %v3028
        %v3030 = vand.u32 %v3029, 4294901760
        %3031 = vmatpush.msra.mxu0 %v3030
        %v3032 = vand.u32 %v986, 4294901760
        %v3033 = vsub.f32 %v986, %v3032
        %v3034 = vand.u32 %v3033, 4294901760
        %v3035 = vsub.f32 %v3033, %v3034
        %v3036 = vand.u32 %v3035, 4294901760
        %3037 = vmatpush.msra.mxu0 %v3036
        %v3038 = vand.u32 %v984, 4294901760
        %v3039 = vsub.f32 %v984, %v3038
        %v3040 = vand.u32 %v3039, 4294901760
        %v3041 = vsub.f32 %v3039, %v3040
        %v3042 = vand.u32 %v3041, 4294901760
        %3043 = vmatpush.msra.mxu0 %v3042
        %v3044 = vand.u32 %v982, 4294901760
        %v3045 = vsub.f32 %v982, %v3044
        %v3046 = vand.u32 %v3045, 4294901760
        %v3047 = vsub.f32 %v3045, %v3046
        %v3048 = vand.u32 %v3047, 4294901760
        %3049 = vmatpush.msra.mxu0 %v3048
        %v3050 = vand.u32 %v980, 4294901760
        %v3051 = vsub.f32 %v980, %v3050
        %v3052 = vand.u32 %v3051, 4294901760
        %v3053 = vsub.f32 %v3051, %v3052
        %v3054 = vand.u32 %v3053, 4294901760
        %3055 = vmatpush.msra.mxu0 %v3054
        %v3056 = vand.u32 %v978, 4294901760
        %v3057 = vsub.f32 %v978, %v3056
        %v3058 = vand.u32 %v3057, 4294901760
        %v3059 = vsub.f32 %v3057, %v3058
        %v3060 = vand.u32 %v3059, 4294901760
        %3061 = vmatpush.msra.mxu0 %v3060
        %v3062 = vand.u32 %v976, 4294901760
        %v3063 = vsub.f32 %v976, %v3062
        %v3064 = vand.u32 %v3063, 4294901760
        %v3065 = vsub.f32 %v3063, %v3064
        %v3066 = vand.u32 %v3065, 4294901760
        %3067 = vmatpush.msra.mxu0 %v3066
        %v3068 = vand.u32 %v974, 4294901760
        %v3069 = vsub.f32 %v974, %v3068
        %v3070 = vand.u32 %v3069, 4294901760
        %v3071 = vsub.f32 %v3069, %v3070
        %v3072 = vand.u32 %v3071, 4294901760
        %3073 = vmatpush.msra.mxu0 %v3072
        %v3074 = vand.u32 %v934, 4294901760
        %3075 = vmatmul.f32.gmra.mxu0 %v3074
        %v3076 = vpop.f32.mrf.mxu0
        %v3077 = vadd.f32 %v2968, %v3076
        %v3078 = vand.u32 %v938, 4294901760
        %3079 = vmatmul.f32.gmra.mxu0 %v3078
        %v3080 = vpop.f32.mrf.mxu0
        %v3081 = vadd.f32 %v2976, %v3080
        %3082 = vdwg.mxu0
        %v3083 = vand.u32 %v1004, 4294901760
        %v3084 = vsub.f32 %v1004, %v3083
        %3085 = vmatpush.msra.mxu0 %v3084
        %v3086 = vand.u32 %v1002, 4294901760
        %v3087 = vsub.f32 %v1002, %v3086
        %3088 = vmatpush.msra.mxu0 %v3087
        %v3089 = vand.u32 %v1000, 4294901760
        %v3090 = vsub.f32 %v1000, %v3089
        %3091 = vmatpush.msra.mxu0 %v3090
        %v3092 = vand.u32 %v998, 4294901760
        %v3093 = vsub.f32 %v998, %v3092
        %3094 = vmatpush.msra.mxu0 %v3093
        %v3095 = vand.u32 %v996, 4294901760
        %v3096 = vsub.f32 %v996, %v3095
        %3097 = vmatpush.msra.mxu0 %v3096
        %v3098 = vand.u32 %v994, 4294901760
        %v3099 = vsub.f32 %v994, %v3098
        %3100 = vmatpush.msra.mxu0 %v3099
        %v3101 = vand.u32 %v992, 4294901760
        %v3102 = vsub.f32 %v992, %v3101
        %3103 = vmatpush.msra.mxu0 %v3102
        %v3104 = vand.u32 %v990, 4294901760
        %v3105 = vsub.f32 %v990, %v3104
        %3106 = vmatpush.msra.mxu0 %v3105
        %v3107 = vand.u32 %v988, 4294901760
        %v3108 = vsub.f32 %v988, %v3107
        %3109 = vmatpush.msra.mxu0 %v3108
        %v3110 = vand.u32 %v986, 4294901760
        %v3111 = vsub.f32 %v986, %v3110
        %3112 = vmatpush.msra.mxu0 %v3111
        %v3113 = vand.u32 %v984, 4294901760
        %v3114 = vsub.f32 %v984, %v3113
        %3115 = vmatpush.msra.mxu0 %v3114
        %v3116 = vand.u32 %v982, 4294901760
        %v3117 = vsub.f32 %v982, %v3116
        %3118 = vmatpush.msra.mxu0 %v3117
        %v3119 = vand.u32 %v980, 4294901760
        %v3120 = vsub.f32 %v980, %v3119
        %3121 = vmatpush.msra.mxu0 %v3120
        %v3122 = vand.u32 %v978, 4294901760
        %v3123 = vsub.f32 %v978, %v3122
        %3124 = vmatpush.msra.mxu0 %v3123
        %v3125 = vand.u32 %v976, 4294901760
        %v3126 = vsub.f32 %v976, %v3125
        %3127 = vmatpush.msra.mxu0 %v3126
        %v3128 = vand.u32 %v974, 4294901760
        %v3129 = vsub.f32 %v974, %v3128
        %3130 = vmatpush.msra.mxu0 %v3129
        %v3131 = vand.u32 %v934, 4294901760
        %v3132 = vsub.f32 %v934, %v3131
        %3133 = vmatmul.f32.gmra.mxu0 %v3132
        %v3134 = vpop.f32.mrf.mxu0
        %v3135 = vadd.f32 %v3077, %v3134
        %v3136 = vand.u32 %v938, 4294901760
        %v3137 = vsub.f32 %v938, %v3136
        %3138 = vmatmul.f32.gmra.mxu0 %v3137
        %v3139 = vpop.f32.mrf.mxu0
        %v3140 = vadd.f32 %v3081, %v3139
        %3141 = vdwg.mxu0
        %v3142 = vand.u32 %v1004, 4294901760
        %3143 = vmatpush.msra.mxu0 %v3142
        %v3144 = vand.u32 %v1002, 4294901760
        %3145 = vmatpush.msra.mxu0 %v3144
        %v3146 = vand.u32 %v1000, 4294901760
        %3147 = vmatpush.msra.mxu0 %v3146
        %v3148 = vand.u32 %v998, 4294901760
        %3149 = vmatpush.msra.mxu0 %v3148
        %v3150 = vand.u32 %v996, 4294901760
        %3151 = vmatpush.msra.mxu0 %v3150
        %v3152 = vand.u32 %v994, 4294901760
        %3153 = vmatpush.msra.mxu0 %v3152
        %v3154 = vand.u32 %v992, 4294901760
        %3155 = vmatpush.msra.mxu0 %v3154
        %v3156 = vand.u32 %v990, 4294901760
        %3157 = vmatpush.msra.mxu0 %v3156
        %v3158 = vand.u32 %v988, 4294901760
        %3159 = vmatpush.msra.mxu0 %v3158
        %v3160 = vand.u32 %v986, 4294901760
        %3161 = vmatpush.msra.mxu0 %v3160
        %v3162 = vand.u32 %v984, 4294901760
        %3163 = vmatpush.msra.mxu0 %v3162
        %v3164 = vand.u32 %v982, 4294901760
        %3165 = vmatpush.msra.mxu0 %v3164
        %v3166 = vand.u32 %v980, 4294901760
        %3167 = vmatpush.msra.mxu0 %v3166
        %v3168 = vand.u32 %v978, 4294901760
        %3169 = vmatpush.msra.mxu0 %v3168
        %v3170 = vand.u32 %v976, 4294901760
        %3171 = vmatpush.msra.mxu0 %v3170
        %v3172 = vand.u32 %v974, 4294901760
        %3173 = vmatpush.msra.mxu0 %v3172
        %v3174 = vand.u32 %v934, 4294901760
        %v3175 = vsub.f32 %v934, %v3174
        %v3176 = vand.u32 %v3175, 4294901760
        %3177 = vmatmul.f32.gmra.mxu0 %v3176
        %v3178 = vpop.f32.mrf.mxu0
        %v3179 = vadd.f32 %v3135, %v3178
        %v3180 = vand.u32 %v938, 4294901760
        %v3181 = vsub.f32 %v938, %v3180
        %v3182 = vand.u32 %v3181, 4294901760
        %3183 = vmatmul.f32.gmra.mxu0 %v3182
        %v3184 = vpop.f32.mrf.mxu0
        %v3185 = vadd.f32 %v3140, %v3184
        %3186 = vdwg.mxu0
        %v3187 = vand.u32 %v1004, 4294901760
        %v3188 = vsub.f32 %v1004, %v3187
        %v3189 = vand.u32 %v3188, 4294901760
        %3190 = vmatpush.msra.mxu0 %v3189
        %v3191 = vand.u32 %v1002, 4294901760
        %v3192 = vsub.f32 %v1002, %v3191
        %v3193 = vand.u32 %v3192, 4294901760
        %3194 = vmatpush.msra.mxu0 %v3193
        %v3195 = vand.u32 %v1000, 4294901760
        %v3196 = vsub.f32 %v1000, %v3195
        %v3197 = vand.u32 %v3196, 4294901760
        %3198 = vmatpush.msra.mxu0 %v3197
        %v3199 = vand.u32 %v998, 4294901760
        %v3200 = vsub.f32 %v998, %v3199
        %v3201 = vand.u32 %v3200, 4294901760
        %3202 = vmatpush.msra.mxu0 %v3201
        %v3203 = vand.u32 %v996, 4294901760
        %v3204 = vsub.f32 %v996, %v3203
        %v3205 = vand.u32 %v3204, 4294901760
        %3206 = vmatpush.msra.mxu0 %v3205
        %v3207 = vand.u32 %v994, 4294901760
        %v3208 = vsub.f32 %v994, %v3207
        %v3209 = vand.u32 %v3208, 4294901760
        %3210 = vmatpush.msra.mxu0 %v3209
        %v3211 = vand.u32 %v992, 4294901760
        %v3212 = vsub.f32 %v992, %v3211
        %v3213 = vand.u32 %v3212, 4294901760
        %3214 = vmatpush.msra.mxu0 %v3213
        %v3215 = vand.u32 %v990, 4294901760
        %v3216 = vsub.f32 %v990, %v3215
        %v3217 = vand.u32 %v3216, 4294901760
        %3218 = vmatpush.msra.mxu0 %v3217
        %v3219 = vand.u32 %v988, 4294901760
        %v3220 = vsub.f32 %v988, %v3219
        %v3221 = vand.u32 %v3220, 4294901760
        %3222 = vmatpush.msra.mxu0 %v3221
        %v3223 = vand.u32 %v986, 4294901760
        %v3224 = vsub.f32 %v986, %v3223
        %v3225 = vand.u32 %v3224, 4294901760
        %3226 = vmatpush.msra.mxu0 %v3225
        %v3227 = vand.u32 %v984, 4294901760
        %v3228 = vsub.f32 %v984, %v3227
        %v3229 = vand.u32 %v3228, 4294901760
        %3230 = vmatpush.msra.mxu0 %v3229
        %v3231 = vand.u32 %v982, 4294901760
        %v3232 = vsub.f32 %v982, %v3231
        %v3233 = vand.u32 %v3232, 4294901760
        %3234 = vmatpush.msra.mxu0 %v3233
        %v3235 = vand.u32 %v980, 4294901760
        %v3236 = vsub.f32 %v980, %v3235
        %v3237 = vand.u32 %v3236, 4294901760
        %3238 = vmatpush.msra.mxu0 %v3237
        %v3239 = vand.u32 %v978, 4294901760
        %v3240 = vsub.f32 %v978, %v3239
        %v3241 = vand.u32 %v3240, 4294901760
        %3242 = vmatpush.msra.mxu0 %v3241
        %v3243 = vand.u32 %v976, 4294901760
        %v3244 = vsub.f32 %v976, %v3243
        %v3245 = vand.u32 %v3244, 4294901760
        %3246 = vmatpush.msra.mxu0 %v3245
        %v3247 = vand.u32 %v974, 4294901760
        %v3248 = vsub.f32 %v974, %v3247
        %v3249 = vand.u32 %v3248, 4294901760
        %3250 = vmatpush.msra.mxu0 %v3249
        %v3251 = vand.u32 %v934, 4294901760
        %3252 = vmatmul.f32.gmra.mxu0 %v3251
        %v3253 = vpop.f32.mrf.mxu0
        %v3254 = vadd.f32 %v3179, %v3253
        %v3255 = vand.u32 %v938, 4294901760
        %3256 = vmatmul.f32.gmra.mxu0 %v3255
        %v3257 = vpop.f32.mrf.mxu0
        %v3258 = vadd.f32 %v3185, %v3257
        %3259 = vdwg.mxu0
        %v3260 = vand.u32 %v1004, 4294901760
        %3261 = vmatpush.msra.mxu0 %v3260
        %v3262 = vand.u32 %v1002, 4294901760
        %3263 = vmatpush.msra.mxu0 %v3262
        %v3264 = vand.u32 %v1000, 4294901760
        %3265 = vmatpush.msra.mxu0 %v3264
        %v3266 = vand.u32 %v998, 4294901760
        %3267 = vmatpush.msra.mxu0 %v3266
        %v3268 = vand.u32 %v996, 4294901760
        %3269 = vmatpush.msra.mxu0 %v3268
        %v3270 = vand.u32 %v994, 4294901760
        %3271 = vmatpush.msra.mxu0 %v3270
        %v3272 = vand.u32 %v992, 4294901760
        %3273 = vmatpush.msra.mxu0 %v3272
        %v3274 = vand.u32 %v990, 4294901760
        %3275 = vmatpush.msra.mxu0 %v3274
        %v3276 = vand.u32 %v988, 4294901760
        %3277 = vmatpush.msra.mxu0 %v3276
        %v3278 = vand.u32 %v986, 4294901760
        %3279 = vmatpush.msra.mxu0 %v3278
        %v3280 = vand.u32 %v984, 4294901760
        %3281 = vmatpush.msra.mxu0 %v3280
        %v3282 = vand.u32 %v982, 4294901760
        %3283 = vmatpush.msra.mxu0 %v3282
        %v3284 = vand.u32 %v980, 4294901760
        %3285 = vmatpush.msra.mxu0 %v3284
        %v3286 = vand.u32 %v978, 4294901760
        %3287 = vmatpush.msra.mxu0 %v3286
        %v3288 = vand.u32 %v976, 4294901760
        %3289 = vmatpush.msra.mxu0 %v3288
        %v3290 = vand.u32 %v974, 4294901760
        %3291 = vmatpush.msra.mxu0 %v3290
        %v3292 = vand.u32 %v934, 4294901760
        %3293 = vmatmul.f32.gmra.mxu0 %v3292
        %v3294 = vpop.f32.mrf.mxu0
        %v3295 = vadd.f32 %v3254, %v3294
        %v3296 = vand.u32 %v938, 4294901760
        %3297 = vmatmul.f32.gmra.mxu0 %v3296
        %v3298 = vpop.f32.mrf.mxu0
        %v3299 = vadd.f32 %v3258, %v3298
        %3300 = vdwg.mxu0
        %v3301 = vand.u32 %v1036, 4294901760
        %3302 = vmatpush.msra.mxu0 %v3301
        %v3303 = vand.u32 %v1034, 4294901760
        %3304 = vmatpush.msra.mxu0 %v3303
        %v3305 = vand.u32 %v1032, 4294901760
        %3306 = vmatpush.msra.mxu0 %v3305
        %v3307 = vand.u32 %v1030, 4294901760
        %3308 = vmatpush.msra.mxu0 %v3307
        %v3309 = vand.u32 %v1028, 4294901760
        %3310 = vmatpush.msra.mxu0 %v3309
        %v3311 = vand.u32 %v1026, 4294901760
        %3312 = vmatpush.msra.mxu0 %v3311
        %v3313 = vand.u32 %v1024, 4294901760
        %3314 = vmatpush.msra.mxu0 %v3313
        %v3315 = vand.u32 %v1022, 4294901760
        %3316 = vmatpush.msra.mxu0 %v3315
        %v3317 = vand.u32 %v1020, 4294901760
        %3318 = vmatpush.msra.mxu0 %v3317
        %v3319 = vand.u32 %v1018, 4294901760
        %3320 = vmatpush.msra.mxu0 %v3319
        %v3321 = vand.u32 %v1016, 4294901760
        %3322 = vmatpush.msra.mxu0 %v3321
        %v3323 = vand.u32 %v1014, 4294901760
        %3324 = vmatpush.msra.mxu0 %v3323
        %v3325 = vand.u32 %v1012, 4294901760
        %3326 = vmatpush.msra.mxu0 %v3325
        %v3327 = vand.u32 %v1010, 4294901760
        %3328 = vmatpush.msra.mxu0 %v3327
        %v3329 = vand.u32 %v1008, 4294901760
        %3330 = vmatpush.msra.mxu0 %v3329
        %v3331 = vand.u32 %v1006, 4294901760
        %3332 = vmatpush.msra.mxu0 %v3331
        %v3333 = vand.u32 %v935, 4294901760
        %v3334 = vsub.f32 %v935, %v3333
        %v3335 = vand.u32 %v3334, 4294901760
        %v3336 = vsub.f32 %v3334, %v3335
        %v3337 = vand.u32 %v3336, 4294901760
        %3338 = vmatmul.f32.gmra.mxu0 %v3337
        %v3339 = vpop.f32.mrf.mxu0
        %v3340 = vadd.f32 %v3295, %v3339
        %v3341 = vand.u32 %v939, 4294901760
        %v3342 = vsub.f32 %v939, %v3341
        %v3343 = vand.u32 %v3342, 4294901760
        %v3344 = vsub.f32 %v3342, %v3343
        %v3345 = vand.u32 %v3344, 4294901760
        %3346 = vmatmul.f32.gmra.mxu0 %v3345
        %v3347 = vpop.f32.mrf.mxu0
        %v3348 = vadd.f32 %v3299, %v3347
        %3349 = vdwg.mxu0
        %v3350 = vand.u32 %v1036, 4294901760
        %v3351 = vsub.f32 %v1036, %v3350
        %v3352 = vand.u32 %v3351, 4294901760
        %v3353 = vsub.f32 %v3351, %v3352
        %v3354 = vand.u32 %v3353, 4294901760
        %3355 = vmatpush.msra.mxu0 %v3354
        %v3356 = vand.u32 %v1034, 4294901760
        %v3357 = vsub.f32 %v1034, %v3356
        %v3358 = vand.u32 %v3357, 4294901760
        %v3359 = vsub.f32 %v3357, %v3358
        %v3360 = vand.u32 %v3359, 4294901760
        %3361 = vmatpush.msra.mxu0 %v3360
        %v3362 = vand.u32 %v1032, 4294901760
        %v3363 = vsub.f32 %v1032, %v3362
        %v3364 = vand.u32 %v3363, 4294901760
        %v3365 = vsub.f32 %v3363, %v3364
        %v3366 = vand.u32 %v3365, 4294901760
        %3367 = vmatpush.msra.mxu0 %v3366
        %v3368 = vand.u32 %v1030, 4294901760
        %v3369 = vsub.f32 %v1030, %v3368
        %v3370 = vand.u32 %v3369, 4294901760
        %v3371 = vsub.f32 %v3369, %v3370
        %v3372 = vand.u32 %v3371, 4294901760
        %3373 = vmatpush.msra.mxu0 %v3372
        %v3374 = vand.u32 %v1028, 4294901760
        %v3375 = vsub.f32 %v1028, %v3374
        %v3376 = vand.u32 %v3375, 4294901760
        %v3377 = vsub.f32 %v3375, %v3376
        %v3378 = vand.u32 %v3377, 4294901760
        %3379 = vmatpush.msra.mxu0 %v3378
        %v3380 = vand.u32 %v1026, 4294901760
        %v3381 = vsub.f32 %v1026, %v3380
        %v3382 = vand.u32 %v3381, 4294901760
        %v3383 = vsub.f32 %v3381, %v3382
        %v3384 = vand.u32 %v3383, 4294901760
        %3385 = vmatpush.msra.mxu0 %v3384
        %v3386 = vand.u32 %v1024, 4294901760
        %v3387 = vsub.f32 %v1024, %v3386
        %v3388 = vand.u32 %v3387, 4294901760
        %v3389 = vsub.f32 %v3387, %v3388
        %v3390 = vand.u32 %v3389, 4294901760
        %3391 = vmatpush.msra.mxu0 %v3390
        %v3392 = vand.u32 %v1022, 4294901760
        %v3393 = vsub.f32 %v1022, %v3392
        %v3394 = vand.u32 %v3393, 4294901760
        %v3395 = vsub.f32 %v3393, %v3394
        %v3396 = vand.u32 %v3395, 4294901760
        %3397 = vmatpush.msra.mxu0 %v3396
        %v3398 = vand.u32 %v1020, 4294901760
        %v3399 = vsub.f32 %v1020, %v3398
        %v3400 = vand.u32 %v3399, 4294901760
        %v3401 = vsub.f32 %v3399, %v3400
        %v3402 = vand.u32 %v3401, 4294901760
        %3403 = vmatpush.msra.mxu0 %v3402
        %v3404 = vand.u32 %v1018, 4294901760
        %v3405 = vsub.f32 %v1018, %v3404
        %v3406 = vand.u32 %v3405, 4294901760
        %v3407 = vsub.f32 %v3405, %v3406
        %v3408 = vand.u32 %v3407, 4294901760
        %3409 = vmatpush.msra.mxu0 %v3408
        %v3410 = vand.u32 %v1016, 4294901760
        %v3411 = vsub.f32 %v1016, %v3410
        %v3412 = vand.u32 %v3411, 4294901760
        %v3413 = vsub.f32 %v3411, %v3412
        %v3414 = vand.u32 %v3413, 4294901760
        %3415 = vmatpush.msra.mxu0 %v3414
        %v3416 = vand.u32 %v1014, 4294901760
        %v3417 = vsub.f32 %v1014, %v3416
        %v3418 = vand.u32 %v3417, 4294901760
        %v3419 = vsub.f32 %v3417, %v3418
        %v3420 = vand.u32 %v3419, 4294901760
        %3421 = vmatpush.msra.mxu0 %v3420
        %v3422 = vand.u32 %v1012, 4294901760
        %v3423 = vsub.f32 %v1012, %v3422
        %v3424 = vand.u32 %v3423, 4294901760
        %v3425 = vsub.f32 %v3423, %v3424
        %v3426 = vand.u32 %v3425, 4294901760
        %3427 = vmatpush.msra.mxu0 %v3426
        %v3428 = vand.u32 %v1010, 4294901760
        %v3429 = vsub.f32 %v1010, %v3428
        %v3430 = vand.u32 %v3429, 4294901760
        %v3431 = vsub.f32 %v3429, %v3430
        %v3432 = vand.u32 %v3431, 4294901760
        %3433 = vmatpush.msra.mxu0 %v3432
        %v3434 = vand.u32 %v1008, 4294901760
        %v3435 = vsub.f32 %v1008, %v3434
        %v3436 = vand.u32 %v3435, 4294901760
        %v3437 = vsub.f32 %v3435, %v3436
        %v3438 = vand.u32 %v3437, 4294901760
        %3439 = vmatpush.msra.mxu0 %v3438
        %v3440 = vand.u32 %v1006, 4294901760
        %v3441 = vsub.f32 %v1006, %v3440
        %v3442 = vand.u32 %v3441, 4294901760
        %v3443 = vsub.f32 %v3441, %v3442
        %v3444 = vand.u32 %v3443, 4294901760
        %3445 = vmatpush.msra.mxu0 %v3444
        %v3446 = vand.u32 %v935, 4294901760
        %3447 = vmatmul.f32.gmra.mxu0 %v3446
        %v3448 = vpop.f32.mrf.mxu0
        %v3449 = vadd.f32 %v3340, %v3448
        %v3450 = vand.u32 %v939, 4294901760
        %3451 = vmatmul.f32.gmra.mxu0 %v3450
        %v3452 = vpop.f32.mrf.mxu0
        %v3453 = vadd.f32 %v3348, %v3452
        %3454 = vdwg.mxu0
        %v3455 = vand.u32 %v1036, 4294901760
        %v3456 = vsub.f32 %v1036, %v3455
        %3457 = vmatpush.msra.mxu0 %v3456
        %v3458 = vand.u32 %v1034, 4294901760
        %v3459 = vsub.f32 %v1034, %v3458
        %3460 = vmatpush.msra.mxu0 %v3459
        %v3461 = vand.u32 %v1032, 4294901760
        %v3462 = vsub.f32 %v1032, %v3461
        %3463 = vmatpush.msra.mxu0 %v3462
        %v3464 = vand.u32 %v1030, 4294901760
        %v3465 = vsub.f32 %v1030, %v3464
        %3466 = vmatpush.msra.mxu0 %v3465
        %v3467 = vand.u32 %v1028, 4294901760
        %v3468 = vsub.f32 %v1028, %v3467
        %3469 = vmatpush.msra.mxu0 %v3468
        %v3470 = vand.u32 %v1026, 4294901760
        %v3471 = vsub.f32 %v1026, %v3470
        %3472 = vmatpush.msra.mxu0 %v3471
        %v3473 = vand.u32 %v1024, 4294901760
        %v3474 = vsub.f32 %v1024, %v3473
        %3475 = vmatpush.msra.mxu0 %v3474
        %v3476 = vand.u32 %v1022, 4294901760
        %v3477 = vsub.f32 %v1022, %v3476
        %3478 = vmatpush.msra.mxu0 %v3477
        %v3479 = vand.u32 %v1020, 4294901760
        %v3480 = vsub.f32 %v1020, %v3479
        %3481 = vmatpush.msra.mxu0 %v3480
        %v3482 = vand.u32 %v1018, 4294901760
        %v3483 = vsub.f32 %v1018, %v3482
        %3484 = vmatpush.msra.mxu0 %v3483
        %v3485 = vand.u32 %v1016, 4294901760
        %v3486 = vsub.f32 %v1016, %v3485
        %3487 = vmatpush.msra.mxu0 %v3486
        %v3488 = vand.u32 %v1014, 4294901760
        %v3489 = vsub.f32 %v1014, %v3488
        %3490 = vmatpush.msra.mxu0 %v3489
        %v3491 = vand.u32 %v1012, 4294901760
        %v3492 = vsub.f32 %v1012, %v3491
        %3493 = vmatpush.msra.mxu0 %v3492
        %v3494 = vand.u32 %v1010, 4294901760
        %v3495 = vsub.f32 %v1010, %v3494
        %3496 = vmatpush.msra.mxu0 %v3495
        %v3497 = vand.u32 %v1008, 4294901760
        %v3498 = vsub.f32 %v1008, %v3497
        %3499 = vmatpush.msra.mxu0 %v3498
        %v3500 = vand.u32 %v1006, 4294901760
        %v3501 = vsub.f32 %v1006, %v3500
        %3502 = vmatpush.msra.mxu0 %v3501
        %v3503 = vand.u32 %v935, 4294901760
        %v3504 = vsub.f32 %v935, %v3503
        %3505 = vmatmul.f32.gmra.mxu0 %v3504
        %v3506 = vpop.f32.mrf.mxu0
        %v3507 = vadd.f32 %v3449, %v3506
        %v3508 = vand.u32 %v939, 4294901760
        %v3509 = vsub.f32 %v939, %v3508
        %3510 = vmatmul.f32.gmra.mxu0 %v3509
        %v3511 = vpop.f32.mrf.mxu0
        %v3512 = vadd.f32 %v3453, %v3511
        %3513 = vdwg.mxu0
        %v3514 = vand.u32 %v1036, 4294901760
        %3515 = vmatpush.msra.mxu0 %v3514
        %v3516 = vand.u32 %v1034, 4294901760
        %3517 = vmatpush.msra.mxu0 %v3516
        %v3518 = vand.u32 %v1032, 4294901760
        %3519 = vmatpush.msra.mxu0 %v3518
        %v3520 = vand.u32 %v1030, 4294901760
        %3521 = vmatpush.msra.mxu0 %v3520
        %v3522 = vand.u32 %v1028, 4294901760
        %3523 = vmatpush.msra.mxu0 %v3522
        %v3524 = vand.u32 %v1026, 4294901760
        %3525 = vmatpush.msra.mxu0 %v3524
        %v3526 = vand.u32 %v1024, 4294901760
        %3527 = vmatpush.msra.mxu0 %v3526
        %v3528 = vand.u32 %v1022, 4294901760
        %3529 = vmatpush.msra.mxu0 %v3528
        %v3530 = vand.u32 %v1020, 4294901760
        %3531 = vmatpush.msra.mxu0 %v3530
        %v3532 = vand.u32 %v1018, 4294901760
        %3533 = vmatpush.msra.mxu0 %v3532
        %v3534 = vand.u32 %v1016, 4294901760
        %3535 = vmatpush.msra.mxu0 %v3534
        %v3536 = vand.u32 %v1014, 4294901760
        %3537 = vmatpush.msra.mxu0 %v3536
        %v3538 = vand.u32 %v1012, 4294901760
        %3539 = vmatpush.msra.mxu0 %v3538
        %v3540 = vand.u32 %v1010, 4294901760
        %3541 = vmatpush.msra.mxu0 %v3540
        %v3542 = vand.u32 %v1008, 4294901760
        %3543 = vmatpush.msra.mxu0 %v3542
        %v3544 = vand.u32 %v1006, 4294901760
        %3545 = vmatpush.msra.mxu0 %v3544
        %v3546 = vand.u32 %v935, 4294901760
        %v3547 = vsub.f32 %v935, %v3546
        %v3548 = vand.u32 %v3547, 4294901760
        %3549 = vmatmul.f32.gmra.mxu0 %v3548
        %v3550 = vpop.f32.mrf.mxu0
        %v3551 = vadd.f32 %v3507, %v3550
        %v3552 = vand.u32 %v939, 4294901760
        %v3553 = vsub.f32 %v939, %v3552
        %v3554 = vand.u32 %v3553, 4294901760
        %3555 = vmatmul.f32.gmra.mxu0 %v3554
        %v3556 = vpop.f32.mrf.mxu0
        %v3557 = vadd.f32 %v3512, %v3556
        %3558 = vdwg.mxu0
        %v3559 = vand.u32 %v1036, 4294901760
        %v3560 = vsub.f32 %v1036, %v3559
        %v3561 = vand.u32 %v3560, 4294901760
        %3562 = vmatpush.msra.mxu0 %v3561
        %v3563 = vand.u32 %v1034, 4294901760
        %v3564 = vsub.f32 %v1034, %v3563
        %v3565 = vand.u32 %v3564, 4294901760
        %3566 = vmatpush.msra.mxu0 %v3565
        %v3567 = vand.u32 %v1032, 4294901760
        %v3568 = vsub.f32 %v1032, %v3567
        %v3569 = vand.u32 %v3568, 4294901760
        %3570 = vmatpush.msra.mxu0 %v3569
        %v3571 = vand.u32 %v1030, 4294901760
        %v3572 = vsub.f32 %v1030, %v3571
        %v3573 = vand.u32 %v3572, 4294901760
        %3574 = vmatpush.msra.mxu0 %v3573
        %v3575 = vand.u32 %v1028, 4294901760
        %v3576 = vsub.f32 %v1028, %v3575
        %v3577 = vand.u32 %v3576, 4294901760
        %3578 = vmatpush.msra.mxu0 %v3577
        %v3579 = vand.u32 %v1026, 4294901760
        %v3580 = vsub.f32 %v1026, %v3579
        %v3581 = vand.u32 %v3580, 4294901760
        %3582 = vmatpush.msra.mxu0 %v3581
        %v3583 = vand.u32 %v1024, 4294901760
        %v3584 = vsub.f32 %v1024, %v3583
        %v3585 = vand.u32 %v3584, 4294901760
        %3586 = vmatpush.msra.mxu0 %v3585
        %v3587 = vand.u32 %v1022, 4294901760
        %v3588 = vsub.f32 %v1022, %v3587
        %v3589 = vand.u32 %v3588, 4294901760
        %3590 = vmatpush.msra.mxu0 %v3589
        %v3591 = vand.u32 %v1020, 4294901760
        %v3592 = vsub.f32 %v1020, %v3591
        %v3593 = vand.u32 %v3592, 4294901760
        %3594 = vmatpush.msra.mxu0 %v3593
        %v3595 = vand.u32 %v1018, 4294901760
        %v3596 = vsub.f32 %v1018, %v3595
        %v3597 = vand.u32 %v3596, 4294901760
        %3598 = vmatpush.msra.mxu0 %v3597
        %v3599 = vand.u32 %v1016, 4294901760
        %v3600 = vsub.f32 %v1016, %v3599
        %v3601 = vand.u32 %v3600, 4294901760
        %3602 = vmatpush.msra.mxu0 %v3601
        %v3603 = vand.u32 %v1014, 4294901760
        %v3604 = vsub.f32 %v1014, %v3603
        %v3605 = vand.u32 %v3604, 4294901760
        %3606 = vmatpush.msra.mxu0 %v3605
        %v3607 = vand.u32 %v1012, 4294901760
        %v3608 = vsub.f32 %v1012, %v3607
        %v3609 = vand.u32 %v3608, 4294901760
        %3610 = vmatpush.msra.mxu0 %v3609
        %v3611 = vand.u32 %v1010, 4294901760
        %v3612 = vsub.f32 %v1010, %v3611
        %v3613 = vand.u32 %v3612, 4294901760
        %3614 = vmatpush.msra.mxu0 %v3613
        %v3615 = vand.u32 %v1008, 4294901760
        %v3616 = vsub.f32 %v1008, %v3615
        %v3617 = vand.u32 %v3616, 4294901760
        %3618 = vmatpush.msra.mxu0 %v3617
        %v3619 = vand.u32 %v1006, 4294901760
        %v3620 = vsub.f32 %v1006, %v3619
        %v3621 = vand.u32 %v3620, 4294901760
        %3622 = vmatpush.msra.mxu0 %v3621
        %v3623 = vand.u32 %v935, 4294901760
        %3624 = vmatmul.f32.gmra.mxu0 %v3623
        %v3625 = vpop.f32.mrf.mxu0
        %v3626 = vadd.f32 %v3551, %v3625
        %v3627 = vand.u32 %v939, 4294901760
        %3628 = vmatmul.f32.gmra.mxu0 %v3627
        %v3629 = vpop.f32.mrf.mxu0
        %v3630 = vadd.f32 %v3557, %v3629
        %3631 = vdwg.mxu0
        %v3632 = vand.u32 %v1036, 4294901760
        %3633 = vmatpush.msra.mxu0 %v3632
        %v3634 = vand.u32 %v1034, 4294901760
        %3635 = vmatpush.msra.mxu0 %v3634
        %v3636 = vand.u32 %v1032, 4294901760
        %3637 = vmatpush.msra.mxu0 %v3636
        %v3638 = vand.u32 %v1030, 4294901760
        %3639 = vmatpush.msra.mxu0 %v3638
        %v3640 = vand.u32 %v1028, 4294901760
        %3641 = vmatpush.msra.mxu0 %v3640
        %v3642 = vand.u32 %v1026, 4294901760
        %3643 = vmatpush.msra.mxu0 %v3642
        %v3644 = vand.u32 %v1024, 4294901760
        %3645 = vmatpush.msra.mxu0 %v3644
        %v3646 = vand.u32 %v1022, 4294901760
        %3647 = vmatpush.msra.mxu0 %v3646
        %v3648 = vand.u32 %v1020, 4294901760
        %3649 = vmatpush.msra.mxu0 %v3648
        %v3650 = vand.u32 %v1018, 4294901760
        %3651 = vmatpush.msra.mxu0 %v3650
        %v3652 = vand.u32 %v1016, 4294901760
        %3653 = vmatpush.msra.mxu0 %v3652
        %v3654 = vand.u32 %v1014, 4294901760
        %3655 = vmatpush.msra.mxu0 %v3654
        %v3656 = vand.u32 %v1012, 4294901760
        %3657 = vmatpush.msra.mxu0 %v3656
        %v3658 = vand.u32 %v1010, 4294901760
        %3659 = vmatpush.msra.mxu0 %v3658
        %v3660 = vand.u32 %v1008, 4294901760
        %3661 = vmatpush.msra.mxu0 %v3660
        %v3662 = vand.u32 %v1006, 4294901760
        %3663 = vmatpush.msra.mxu0 %v3662
        %v3664 = vand.u32 %v935, 4294901760
        %3665 = vmatmul.f32.gmra.mxu0 %v3664
        %v3666 = vpop.f32.mrf.mxu0
        %v3667 = vadd.f32 %v3626, %v3666
        %v3668 = vand.u32 %v939, 4294901760
        %3669 = vmatmul.f32.gmra.mxu0 %v3668
        %v3670 = vpop.f32.mrf.mxu0
        %v3671 = vadd.f32 %v3630, %v3670
        %3672 = vdwg.mxu0
        %v3673 = vand.u32 %v1068, 4294901760
        %3674 = vmatpush.msra.mxu0 %v3673
        %v3675 = vand.u32 %v1066, 4294901760
        %3676 = vmatpush.msra.mxu0 %v3675
        %v3677 = vand.u32 %v1064, 4294901760
        %3678 = vmatpush.msra.mxu0 %v3677
        %v3679 = vand.u32 %v1062, 4294901760
        %3680 = vmatpush.msra.mxu0 %v3679
        %v3681 = vand.u32 %v1060, 4294901760
        %3682 = vmatpush.msra.mxu0 %v3681
        %v3683 = vand.u32 %v1058, 4294901760
        %3684 = vmatpush.msra.mxu0 %v3683
        %v3685 = vand.u32 %v1056, 4294901760
        %3686 = vmatpush.msra.mxu0 %v3685
        %v3687 = vand.u32 %v1054, 4294901760
        %3688 = vmatpush.msra.mxu0 %v3687
        %v3689 = vand.u32 %v1052, 4294901760
        %3690 = vmatpush.msra.mxu0 %v3689
        %v3691 = vand.u32 %v1050, 4294901760
        %3692 = vmatpush.msra.mxu0 %v3691
        %v3693 = vand.u32 %v1048, 4294901760
        %3694 = vmatpush.msra.mxu0 %v3693
        %v3695 = vand.u32 %v1046, 4294901760
        %3696 = vmatpush.msra.mxu0 %v3695
        %v3697 = vand.u32 %v1044, 4294901760
        %3698 = vmatpush.msra.mxu0 %v3697
        %v3699 = vand.u32 %v1042, 4294901760
        %3700 = vmatpush.msra.mxu0 %v3699
        %v3701 = vand.u32 %v1040, 4294901760
        %3702 = vmatpush.msra.mxu0 %v3701
        %v3703 = vand.u32 %v1038, 4294901760
        %3704 = vmatpush.msra.mxu0 %v3703
        %v3705 = vand.u32 %v936, 4294901760
        %v3706 = vsub.f32 %v936, %v3705
        %v3707 = vand.u32 %v3706, 4294901760
        %v3708 = vsub.f32 %v3706, %v3707
        %v3709 = vand.u32 %v3708, 4294901760
        %3710 = vmatmul.f32.gmra.mxu0 %v3709
        %v3711 = vpop.f32.mrf.mxu0
        %v3712 = vadd.f32 %v3667, %v3711
        %v3713 = vand.u32 %v940, 4294901760
        %v3714 = vsub.f32 %v940, %v3713
        %v3715 = vand.u32 %v3714, 4294901760
        %v3716 = vsub.f32 %v3714, %v3715
        %v3717 = vand.u32 %v3716, 4294901760
        %3718 = vmatmul.f32.gmra.mxu0 %v3717
        %v3719 = vpop.f32.mrf.mxu0
        %v3720 = vadd.f32 %v3671, %v3719
        %3721 = vdwg.mxu0
        %v3722 = vand.u32 %v1068, 4294901760
        %v3723 = vsub.f32 %v1068, %v3722
        %v3724 = vand.u32 %v3723, 4294901760
        %v3725 = vsub.f32 %v3723, %v3724
        %v3726 = vand.u32 %v3725, 4294901760
        %3727 = vmatpush.msra.mxu0 %v3726
        %v3728 = vand.u32 %v1066, 4294901760
        %v3729 = vsub.f32 %v1066, %v3728
        %v3730 = vand.u32 %v3729, 4294901760
        %v3731 = vsub.f32 %v3729, %v3730
        %v3732 = vand.u32 %v3731, 4294901760
        %3733 = vmatpush.msra.mxu0 %v3732
        %v3734 = vand.u32 %v1064, 4294901760
        %v3735 = vsub.f32 %v1064, %v3734
        %v3736 = vand.u32 %v3735, 4294901760
        %v3737 = vsub.f32 %v3735, %v3736
        %v3738 = vand.u32 %v3737, 4294901760
        %3739 = vmatpush.msra.mxu0 %v3738
        %v3740 = vand.u32 %v1062, 4294901760
        %v3741 = vsub.f32 %v1062, %v3740
        %v3742 = vand.u32 %v3741, 4294901760
        %v3743 = vsub.f32 %v3741, %v3742
        %v3744 = vand.u32 %v3743, 4294901760
        %3745 = vmatpush.msra.mxu0 %v3744
        %v3746 = vand.u32 %v1060, 4294901760
        %v3747 = vsub.f32 %v1060, %v3746
        %v3748 = vand.u32 %v3747, 4294901760
        %v3749 = vsub.f32 %v3747, %v3748
        %v3750 = vand.u32 %v3749, 4294901760
        %3751 = vmatpush.msra.mxu0 %v3750
        %v3752 = vand.u32 %v1058, 4294901760
        %v3753 = vsub.f32 %v1058, %v3752
        %v3754 = vand.u32 %v3753, 4294901760
        %v3755 = vsub.f32 %v3753, %v3754
        %v3756 = vand.u32 %v3755, 4294901760
        %3757 = vmatpush.msra.mxu0 %v3756
        %v3758 = vand.u32 %v1056, 4294901760
        %v3759 = vsub.f32 %v1056, %v3758
        %v3760 = vand.u32 %v3759, 4294901760
        %v3761 = vsub.f32 %v3759, %v3760
        %v3762 = vand.u32 %v3761, 4294901760
        %3763 = vmatpush.msra.mxu0 %v3762
        %v3764 = vand.u32 %v1054, 4294901760
        %v3765 = vsub.f32 %v1054, %v3764
        %v3766 = vand.u32 %v3765, 4294901760
        %v3767 = vsub.f32 %v3765, %v3766
        %v3768 = vand.u32 %v3767, 4294901760
        %3769 = vmatpush.msra.mxu0 %v3768
        %v3770 = vand.u32 %v1052, 4294901760
        %v3771 = vsub.f32 %v1052, %v3770
        %v3772 = vand.u32 %v3771, 4294901760
        %v3773 = vsub.f32 %v3771, %v3772
        %v3774 = vand.u32 %v3773, 4294901760
        %3775 = vmatpush.msra.mxu0 %v3774
        %v3776 = vand.u32 %v1050, 4294901760
        %v3777 = vsub.f32 %v1050, %v3776
        %v3778 = vand.u32 %v3777, 4294901760
        %v3779 = vsub.f32 %v3777, %v3778
        %v3780 = vand.u32 %v3779, 4294901760
        %3781 = vmatpush.msra.mxu0 %v3780
        %v3782 = vand.u32 %v1048, 4294901760
        %v3783 = vsub.f32 %v1048, %v3782
        %v3784 = vand.u32 %v3783, 4294901760
        %v3785 = vsub.f32 %v3783, %v3784
        %v3786 = vand.u32 %v3785, 4294901760
        %3787 = vmatpush.msra.mxu0 %v3786
        %v3788 = vand.u32 %v1046, 4294901760
        %v3789 = vsub.f32 %v1046, %v3788
        %v3790 = vand.u32 %v3789, 4294901760
        %v3791 = vsub.f32 %v3789, %v3790
        %v3792 = vand.u32 %v3791, 4294901760
        %3793 = vmatpush.msra.mxu0 %v3792
        %v3794 = vand.u32 %v1044, 4294901760
        %v3795 = vsub.f32 %v1044, %v3794
        %v3796 = vand.u32 %v3795, 4294901760
        %v3797 = vsub.f32 %v3795, %v3796
        %v3798 = vand.u32 %v3797, 4294901760
        %3799 = vmatpush.msra.mxu0 %v3798
        %v3800 = vand.u32 %v1042, 4294901760
        %v3801 = vsub.f32 %v1042, %v3800
        %v3802 = vand.u32 %v3801, 4294901760
        %v3803 = vsub.f32 %v3801, %v3802
        %v3804 = vand.u32 %v3803, 4294901760
        %3805 = vmatpush.msra.mxu0 %v3804
        %v3806 = vand.u32 %v1040, 4294901760
        %v3807 = vsub.f32 %v1040, %v3806
        %v3808 = vand.u32 %v3807, 4294901760
        %v3809 = vsub.f32 %v3807, %v3808
        %v3810 = vand.u32 %v3809, 4294901760
        %3811 = vmatpush.msra.mxu0 %v3810
        %v3812 = vand.u32 %v1038, 4294901760
        %v3813 = vsub.f32 %v1038, %v3812
        %v3814 = vand.u32 %v3813, 4294901760
        %v3815 = vsub.f32 %v3813, %v3814
        %v3816 = vand.u32 %v3815, 4294901760
        %3817 = vmatpush.msra.mxu0 %v3816
        %v3818 = vand.u32 %v936, 4294901760
        %3819 = vmatmul.f32.gmra.mxu0 %v3818
        %v3820 = vpop.f32.mrf.mxu0
        %v3821 = vadd.f32 %v3712, %v3820
        %v3822 = vand.u32 %v940, 4294901760
        %3823 = vmatmul.f32.gmra.mxu0 %v3822
        %v3824 = vpop.f32.mrf.mxu0
        %v3825 = vadd.f32 %v3720, %v3824
        %3826 = vdwg.mxu0
        %v3827 = vand.u32 %v1068, 4294901760
        %v3828 = vsub.f32 %v1068, %v3827
        %3829 = vmatpush.msra.mxu0 %v3828
        %v3830 = vand.u32 %v1066, 4294901760
        %v3831 = vsub.f32 %v1066, %v3830
        %3832 = vmatpush.msra.mxu0 %v3831
        %v3833 = vand.u32 %v1064, 4294901760
        %v3834 = vsub.f32 %v1064, %v3833
        %3835 = vmatpush.msra.mxu0 %v3834
        %v3836 = vand.u32 %v1062, 4294901760
        %v3837 = vsub.f32 %v1062, %v3836
        %3838 = vmatpush.msra.mxu0 %v3837
        %v3839 = vand.u32 %v1060, 4294901760
        %v3840 = vsub.f32 %v1060, %v3839
        %3841 = vmatpush.msra.mxu0 %v3840
        %v3842 = vand.u32 %v1058, 4294901760
        %v3843 = vsub.f32 %v1058, %v3842
        %3844 = vmatpush.msra.mxu0 %v3843
        %v3845 = vand.u32 %v1056, 4294901760
        %v3846 = vsub.f32 %v1056, %v3845
        %3847 = vmatpush.msra.mxu0 %v3846
        %v3848 = vand.u32 %v1054, 4294901760
        %v3849 = vsub.f32 %v1054, %v3848
        %3850 = vmatpush.msra.mxu0 %v3849
        %v3851 = vand.u32 %v1052, 4294901760
        %v3852 = vsub.f32 %v1052, %v3851
        %3853 = vmatpush.msra.mxu0 %v3852
        %v3854 = vand.u32 %v1050, 4294901760
        %v3855 = vsub.f32 %v1050, %v3854
        %3856 = vmatpush.msra.mxu0 %v3855
        %v3857 = vand.u32 %v1048, 4294901760
        %v3858 = vsub.f32 %v1048, %v3857
        %3859 = vmatpush.msra.mxu0 %v3858
        %v3860 = vand.u32 %v1046, 4294901760
        %v3861 = vsub.f32 %v1046, %v3860
        %3862 = vmatpush.msra.mxu0 %v3861
        %v3863 = vand.u32 %v1044, 4294901760
        %v3864 = vsub.f32 %v1044, %v3863
        %3865 = vmatpush.msra.mxu0 %v3864
        %v3866 = vand.u32 %v1042, 4294901760
        %v3867 = vsub.f32 %v1042, %v3866
        %3868 = vmatpush.msra.mxu0 %v3867
        %v3869 = vand.u32 %v1040, 4294901760
        %v3870 = vsub.f32 %v1040, %v3869
        %3871 = vmatpush.msra.mxu0 %v3870
        %v3872 = vand.u32 %v1038, 4294901760
        %v3873 = vsub.f32 %v1038, %v3872
        %3874 = vmatpush.msra.mxu0 %v3873
        %v3875 = vand.u32 %v936, 4294901760
        %v3876 = vsub.f32 %v936, %v3875
        %3877 = vmatmul.f32.gmra.mxu0 %v3876
        %v3878 = vpop.f32.mrf.mxu0
        %v3879 = vadd.f32 %v3821, %v3878
        %v3880 = vand.u32 %v940, 4294901760
        %v3881 = vsub.f32 %v940, %v3880
        %3882 = vmatmul.f32.gmra.mxu0 %v3881
        %v3883 = vpop.f32.mrf.mxu0
        %v3884 = vadd.f32 %v3825, %v3883
        %3885 = vdwg.mxu0
        %v3886 = vand.u32 %v1068, 4294901760
        %3887 = vmatpush.msra.mxu0 %v3886
        %v3888 = vand.u32 %v1066, 4294901760
        %3889 = vmatpush.msra.mxu0 %v3888
        %v3890 = vand.u32 %v1064, 4294901760
        %3891 = vmatpush.msra.mxu0 %v3890
        %v3892 = vand.u32 %v1062, 4294901760
        %3893 = vmatpush.msra.mxu0 %v3892
        %v3894 = vand.u32 %v1060, 4294901760
        %3895 = vmatpush.msra.mxu0 %v3894
        %v3896 = vand.u32 %v1058, 4294901760
        %3897 = vmatpush.msra.mxu0 %v3896
        %v3898 = vand.u32 %v1056, 4294901760
        %3899 = vmatpush.msra.mxu0 %v3898
        %v3900 = vand.u32 %v1054, 4294901760
        %3901 = vmatpush.msra.mxu0 %v3900
        %v3902 = vand.u32 %v1052, 4294901760
        %3903 = vmatpush.msra.mxu0 %v3902
        %v3904 = vand.u32 %v1050, 4294901760
        %3905 = vmatpush.msra.mxu0 %v3904
        %v3906 = vand.u32 %v1048, 4294901760
        %3907 = vmatpush.msra.mxu0 %v3906
        %v3908 = vand.u32 %v1046, 4294901760
        %3909 = vmatpush.msra.mxu0 %v3908
        %v3910 = vand.u32 %v1044, 4294901760
        %3911 = vmatpush.msra.mxu0 %v3910
        %v3912 = vand.u32 %v1042, 4294901760
        %3913 = vmatpush.msra.mxu0 %v3912
        %v3914 = vand.u32 %v1040, 4294901760
        %3915 = vmatpush.msra.mxu0 %v3914
        %v3916 = vand.u32 %v1038, 4294901760
        %3917 = vmatpush.msra.mxu0 %v3916
        %v3918 = vand.u32 %v936, 4294901760
        %v3919 = vsub.f32 %v936, %v3918
        %v3920 = vand.u32 %v3919, 4294901760
        %3921 = vmatmul.f32.gmra.mxu0 %v3920
        %v3922 = vpop.f32.mrf.mxu0
        %v3923 = vadd.f32 %v3879, %v3922
        %v3924 = vand.u32 %v940, 4294901760
        %v3925 = vsub.f32 %v940, %v3924
        %v3926 = vand.u32 %v3925, 4294901760
        %3927 = vmatmul.f32.gmra.mxu0 %v3926
        %v3928 = vpop.f32.mrf.mxu0
        %v3929 = vadd.f32 %v3884, %v3928
        %3930 = vdwg.mxu0
        %v3931 = vand.u32 %v1068, 4294901760
        %v3932 = vsub.f32 %v1068, %v3931
        %v3933 = vand.u32 %v3932, 4294901760
        %3934 = vmatpush.msra.mxu0 %v3933
        %v3935 = vand.u32 %v1066, 4294901760
        %v3936 = vsub.f32 %v1066, %v3935
        %v3937 = vand.u32 %v3936, 4294901760
        %3938 = vmatpush.msra.mxu0 %v3937
        %v3939 = vand.u32 %v1064, 4294901760
        %v3940 = vsub.f32 %v1064, %v3939
        %v3941 = vand.u32 %v3940, 4294901760
        %3942 = vmatpush.msra.mxu0 %v3941
        %v3943 = vand.u32 %v1062, 4294901760
        %v3944 = vsub.f32 %v1062, %v3943
        %v3945 = vand.u32 %v3944, 4294901760
        %3946 = vmatpush.msra.mxu0 %v3945
        %v3947 = vand.u32 %v1060, 4294901760
        %v3948 = vsub.f32 %v1060, %v3947
        %v3949 = vand.u32 %v3948, 4294901760
        %3950 = vmatpush.msra.mxu0 %v3949
        %v3951 = vand.u32 %v1058, 4294901760
        %v3952 = vsub.f32 %v1058, %v3951
        %v3953 = vand.u32 %v3952, 4294901760
        %3954 = vmatpush.msra.mxu0 %v3953
        %v3955 = vand.u32 %v1056, 4294901760
        %v3956 = vsub.f32 %v1056, %v3955
        %v3957 = vand.u32 %v3956, 4294901760
        %3958 = vmatpush.msra.mxu0 %v3957
        %v3959 = vand.u32 %v1054, 4294901760
        %v3960 = vsub.f32 %v1054, %v3959
        %v3961 = vand.u32 %v3960, 4294901760
        %3962 = vmatpush.msra.mxu0 %v3961
        %v3963 = vand.u32 %v1052, 4294901760
        %v3964 = vsub.f32 %v1052, %v3963
        %v3965 = vand.u32 %v3964, 4294901760
        %3966 = vmatpush.msra.mxu0 %v3965
        %v3967 = vand.u32 %v1050, 4294901760
        %v3968 = vsub.f32 %v1050, %v3967
        %v3969 = vand.u32 %v3968, 4294901760
        %3970 = vmatpush.msra.mxu0 %v3969
        %v3971 = vand.u32 %v1048, 4294901760
        %v3972 = vsub.f32 %v1048, %v3971
        %v3973 = vand.u32 %v3972, 4294901760
        %3974 = vmatpush.msra.mxu0 %v3973
        %v3975 = vand.u32 %v1046, 4294901760
        %v3976 = vsub.f32 %v1046, %v3975
        %v3977 = vand.u32 %v3976, 4294901760
        %3978 = vmatpush.msra.mxu0 %v3977
        %v3979 = vand.u32 %v1044, 4294901760
        %v3980 = vsub.f32 %v1044, %v3979
        %v3981 = vand.u32 %v3980, 4294901760
        %3982 = vmatpush.msra.mxu0 %v3981
        %v3983 = vand.u32 %v1042, 4294901760
        %v3984 = vsub.f32 %v1042, %v3983
        %v3985 = vand.u32 %v3984, 4294901760
        %3986 = vmatpush.msra.mxu0 %v3985
        %v3987 = vand.u32 %v1040, 4294901760
        %v3988 = vsub.f32 %v1040, %v3987
        %v3989 = vand.u32 %v3988, 4294901760
        %3990 = vmatpush.msra.mxu0 %v3989
        %v3991 = vand.u32 %v1038, 4294901760
        %v3992 = vsub.f32 %v1038, %v3991
        %v3993 = vand.u32 %v3992, 4294901760
        %3994 = vmatpush.msra.mxu0 %v3993
        %v3995 = vand.u32 %v936, 4294901760
        %3996 = vmatmul.f32.gmra.mxu0 %v3995
        %v3997 = vpop.f32.mrf.mxu0
        %v3998 = vadd.f32 %v3923, %v3997
        %v3999 = vand.u32 %v940, 4294901760
        %4000 = vmatmul.f32.gmra.mxu0 %v3999
        %v4001 = vpop.f32.mrf.mxu0
        %v4002 = vadd.f32 %v3929, %v4001
        %4003 = vdwg.mxu0
        %v4004 = vand.u32 %v1068, 4294901760
        %4005 = vmatpush.msra.mxu0 %v4004
        %v4006 = vand.u32 %v1066, 4294901760
        %4007 = vmatpush.msra.mxu0 %v4006
        %v4008 = vand.u32 %v1064, 4294901760
        %4009 = vmatpush.msra.mxu0 %v4008
        %v4010 = vand.u32 %v1062, 4294901760
        %4011 = vmatpush.msra.mxu0 %v4010
        %v4012 = vand.u32 %v1060, 4294901760
        %4013 = vmatpush.msra.mxu0 %v4012
        %v4014 = vand.u32 %v1058, 4294901760
        %4015 = vmatpush.msra.mxu0 %v4014
        %v4016 = vand.u32 %v1056, 4294901760
        %4017 = vmatpush.msra.mxu0 %v4016
        %v4018 = vand.u32 %v1054, 4294901760
        %4019 = vmatpush.msra.mxu0 %v4018
        %v4020 = vand.u32 %v1052, 4294901760
        %4021 = vmatpush.msra.mxu0 %v4020
        %v4022 = vand.u32 %v1050, 4294901760
        %4023 = vmatpush.msra.mxu0 %v4022
        %v4024 = vand.u32 %v1048, 4294901760
        %4025 = vmatpush.msra.mxu0 %v4024
        %v4026 = vand.u32 %v1046, 4294901760
        %4027 = vmatpush.msra.mxu0 %v4026
        %v4028 = vand.u32 %v1044, 4294901760
        %4029 = vmatpush.msra.mxu0 %v4028
        %v4030 = vand.u32 %v1042, 4294901760
        %4031 = vmatpush.msra.mxu0 %v4030
        %v4032 = vand.u32 %v1040, 4294901760
        %4033 = vmatpush.msra.mxu0 %v4032
        %v4034 = vand.u32 %v1038, 4294901760
        %4035 = vmatpush.msra.mxu0 %v4034
        %v4036 = vand.u32 %v936, 4294901760
        %4037 = vmatmul.f32.gmra.mxu0 %v4036
        %v4038 = vpop.f32.mrf.mxu0
        %v4039 = vadd.f32 %v3998, %v4038
        %v4040 = vand.u32 %v940, 4294901760
        %4041 = vmatmul.f32.gmra.mxu0 %v4040
        %v4042 = vpop.f32.mrf.mxu0
        %v4043 = vadd.f32 %v4002, %v4042
        %4044 = vdwg.mxu0
        %4045 = vst [vmem:[%s262] sm:$0xff] %v2551
        %4046 = vst [vmem:[%s262 + $0x8] sm:$0xff] %v4039
        %4047 = vst [vmem:[%s262 + $0x10] sm:$0xff] %v2555
        %4048 = vst [vmem:[%s262 + $0x18] sm:$0xff] %v4043
        %s4049 = sand.u32 %s160, 1
        %s4050 = scalar_lea.sflag [#allocation4], %s4049
        %s4051 = sand.u32 %s160, 1
        %s4052 = smul.addr %s4051, 32
        %s4053 = scalar_lea.vmem [#allocation5], %s4052
        // Predicated region
        $region49: #{tpu_custom_call.1} parent=43 // pred_check
          %p4054 = pneg %p170
        $region50: #{tpu_custom_call.1} parent=43 // pred_check_branch
          %4056 = sbr.rel (%p4054) target = $region52
        $region51: #{tpu_custom_call.1} parent=43 // pred_region
          %s4057 = smul.u32 2, %s21
          %4059 = vsyncadd %s4050, 0
          %s4060 = smul.addr %s4057, 8
          %s4061 = scalar_lea.hbm %s6, %s4060
          %s4062 = sshll.u32 %s4053, 4
          %s4063 = int_to_ptr.vmem [resolvable:$true] %s4062
          %s4064 = sshll.u32 %s4061, 4
          %s4065 = int_to_ptr.hbm [resolvable:$true] %s4064
          %4070 = dma.vmem_to_hbm [thread:$0]  %s4063, 512, %s4065, %s4050, 256, 512, 16
        $region52: #{tpu_custom_call.1} parent=43 // pred_fallthru
          _
      $region44: #{tpu_custom_call.1} parent=5 // pred_fallthru
        _
      %p4071 = scmp.le.s32.totalorder 2, %s16
      // Predicated region
      $region53: #{tpu_custom_call.1} parent=5 // pred_check
        %p4072 = pneg %p4071
      $region54: #{tpu_custom_call.1} parent=5 // pred_check_branch
        %4074 = sbr.rel (%p4072) target = $region56
      $region55: #{tpu_custom_call.1} parent=5 // pred_region
        %s4075 = ssub.s32 %s16, 2
        // Predicated region
        $region57: #{tpu_custom_call.1} parent=55 // pred_check
          %p4076 = pneg %p176
        $region58: #{tpu_custom_call.1} parent=55 // pred_check_branch
          %4078 = sbr.rel (%p4076) target = $region60
        $region59: #{tpu_custom_call.1} parent=55 // pred_region
          %s4079 = sand.u32 %s161, 1
          %s4080 = scalar_lea.sflag [#allocation4], %s4079
          %s4081 = sand.u32 %s161, 1
          %s4082 = smul.addr %s4081, 32
          %s4083 = scalar_lea.vmem [#allocation5], %s4082
          %4085 = dma.done %s4080, 512
        $region60: #{tpu_custom_call.1} parent=55 // pred_fallthru
          _
      $region56: #{tpu_custom_call.1} parent=5 // pred_fallthru
        _
    $region6: #{tpu_custom_call.1} parent=1 // loop_footer
      %s20 = sadd.s32 1, %s16
    $region7: #{tpu_custom_call.1} parent=1 // loop_footer_branch
      %15 = sbr.rel target = $region3
    $region8: #{tpu_custom_call.1} parent=1 // loop_exit
      _
    %4086 = vsyncpa [#allocation3], 1
    %s4087 = scalar_lea.sflag [#allocation3], 1
    %4088 = vsyncpa %s4087, 1
    %4089 = vsyncpa [#allocation4], 1
    %s4090 = scalar_lea.sflag [#allocation4], 1
    %4091 = vsyncpa %s4090, 1

</llo_original>
